<compile_context>
chip_gen: v7x
topology: tpu7x:2x2x1
jax: 0.10.0
libtpu: 0.0.40
codegen_flags: <defaults>
</compile_context>

<pallas_src>
import functools

import numpy as np
import jax
import jax.numpy as jnp
from jax import lax
from jax.experimental import pallas as pl
from jax.experimental.pallas import tpu as pltpu

EPS = 1e-6
_INV_SQRT2 = 0.7071067811865476


# ----------------------------------------------------------------------------
# Exact-GELU (erf) via the A&S 7.1.26 polynomial — safe to lower in Mosaic
# (abs/mul/add/div/exp/select only) and matches nn.GELU() within ~1e-6.
# ----------------------------------------------------------------------------
def _erf_approx(x):
    ax = jnp.abs(x)
    t = 1.0 / (1.0 + 0.3275911 * ax)
    poly = ((((1.061405429 * t - 1.453152027) * t + 1.421413741) * t
             - 0.284496736) * t + 0.254829592) * t
    y = 1.0 - poly * jnp.exp(-ax * ax)
    return jnp.where(x >= 0.0, y, -y)


def _gelu(x):
    return 0.5 * x * (1.0 + _erf_approx(x * _INV_SQRT2))


# ----------------------------------------------------------------------------
# Separable depthwise 3x3 (zero pad 1) on a (C, H*W) channels-first slab.
# 4 rolls total: zL/zR once (pre-masked with the column edge masks), three
# 3-tap horizontal sums, then row rolls by +/-W masked at the top/bottom edge.
# Any wraparound garbage is zeroed by the masks, so no padded copy exists.
# w9 tap order: t = kh*3 + kw (PyTorch OIHW flattened row-major).
# ----------------------------------------------------------------------------
def _dw3x3(z, w9, col_l, col_r, row_u, row_d, W):
    HW = z.shape[-1]
    z_l = pltpu.roll(z, shift=1, axis=1) * col_l          # z[p-1]  (dw = -1)
    z_r = pltpu.roll(z, shift=HW - 1, axis=1) * col_r     # z[p+1]  (dw = +1)

    def hsum(t0):                                          # taps (t0, t0+1, t0+2)
        return (w9[:, t0:t0 + 1] * z_l
                + w9[:, t0 + 1:t0 + 2] * z
                + w9[:, t0 + 2:t0 + 3] * z_r)

    acc = hsum(3)                                                   # dh = 0
    acc = acc + row_u * pltpu.roll(hsum(0), shift=W, axis=1)        # dh = -1
    acc = acc + row_d * pltpu.roll(hsum(6), shift=HW - W, axis=1)   # dh = +1
    return acc


# ----------------------------------------------------------------------------
# Fused kernel: branch masks + [LN1 -> *mask -> LN2 -> dw3x3 -> GELU -> 1x1]
# for a block of Bblk images, all channels-first (C on sublanes, H*W on lanes).
# ----------------------------------------------------------------------------
def _fused_kernel(x_ref, ss_ref, ch_ref, brpw_ref, ldwpw_ref, em_ref, o_ref,
                  *, W):
    f32 = jnp.float32
    Cin = ch_ref.shape[0]

    # Packed per-channel params (one DMA instead of eight tiny ones).
    ch = ch_ref[...].astype(f32)                           # (Cin, 24)
    n1w, n1b = ch[:, 0:1], ch[:, 1:2]
    n2w, n2b = ch[:, 2:3], ch[:, 3:4]                      # shuffle folded (Pinv)
    ldw_dwb, ldw_dww = ch[:, 4:5], ch[:, 5:14]             # shuffle folded (Pinv)
    br_dwb, br_dww = ch[:, 14:15], ch[:, 15:24]

    brpw = brpw_ref[...].astype(f32)                       # (Cin, Cin+1)
    br_pww, br_pwb = brpw[:, :Cin], brpw[:, Cin:Cin + 1]
    ldwpw = ldwpw_ref[...].astype(f32)                     # (Cout, Cin+1)
    ldw_pww, ldw_pwb = ldwpw[:, :Cin], ldwpw[:, Cin:Cin + 1]

    em = em_ref[...].astype(f32)                           # (4, HW) edge masks
    col_l, col_r, row_u, row_d = em[0:1], em[1:2], em[2:3], em[3:4]

    # --- batch-independent branch masks, computed once per grid step --------
    # (with the default whole-batch block there is exactly one step)
    ss = ss_ref[...].astype(f32)                           # (Cin, HW)
    g = _gelu(_dw3x3(ss, br_dww, col_l, col_r, row_u, row_d, W) + br_dwb)
    mask = jnp.dot(br_pww, g, preferred_element_type=f32) + br_pwb   # (Cin, HW)

    # --- per image ----------------------------------------------------------
    for bb in range(x_ref.shape[0]):                       # static, small
        x = x_ref[bb].astype(f32)                          # (Cin, HW)

        # norm1 (channels_first LN over the channel / sublane axis)
        u = jnp.mean(x, axis=0, keepdims=True)
        xc = x - u
        v = jnp.mean(xc * xc, axis=0, keepdims=True)
        y = n1w * (xc * lax.rsqrt(v + EPS)) + n1b

        # modulate with the branch masks (original channel order)
        y = y * mask

        # norm2 — the channel shuffle is folded into pre-permuted params
        u2 = jnp.mean(y, axis=0, keepdims=True)
        yc = y - u2
        v2 = jnp.mean(yc * yc, axis=0, keepdims=True)
        z = n2w * (yc * lax.rsqrt(v2 + EPS)) + n2b

        # ldw: depthwise 3x3 + GELU + 1x1 (dim_in -> dim_out)
        d = _gelu(_dw3x3(z, ldw_dww, col_l, col_r, row_u, row_d, W) + ldw_dwb)
        out = jnp.dot(ldw_pww, d, preferred_element_type=f32) + ldw_pwb
        o_ref[bb] = out.astype(o_ref.dtype)


def fused_block_pallas(x, ss_up, chans, br_pw, ldw_pw, edge_masks, W, Cout, bblk):
    B, Cin, HW = x.shape
    kern = functools.partial(_fused_kernel, W=W)
    return pl.pallas_call(
        kern,
        out_shape=jax.ShapeDtypeStruct((B, Cout, HW), x.dtype),
        grid=(B // bblk,),
        in_specs=[
            pl.BlockSpec((bblk, Cin, HW), lambda i: (i, 0, 0)),
            pl.BlockSpec((Cin, HW), lambda i: (0, 0)),
            pl.BlockSpec((Cin, 24), lambda i: (0, 0)),
            pl.BlockSpec((Cin, Cin + 1), lambda i: (0, 0)),
            pl.BlockSpec((Cout, Cin + 1), lambda i: (0, 0)),
            pl.BlockSpec((4, HW), lambda i: (0, 0)),
        ],
        out_specs=pl.BlockSpec((bblk, Cout, HW), lambda i: (i, 0, 0)),
        compiler_params=pltpu.CompilerParams(
            dimension_semantics=("parallel",)),
    )(x, ss_up, chans, br_pw, ldw_pw, edge_masks)


def _choose_bblk(B, Cin, Cout, HW, budget_bytes=8 * 1024 * 1024):
    # Whole batch per step when it fits (best on single-TC v5e/v6e); shrink to
    # a divisor of B otherwise.  TODO(synk): on v7x prefer bblk=B/2 so the
    # batch axis still shards across both TensorCores.
    per_img = 2 * (Cin + Cout) * HW * 4          # in+out blocks, double-buffered
    bblk = B
    while bblk > 1 and (B % bblk != 0 or bblk * per_img > budget_bytes):
        bblk -= 1
    return max(bblk, 1)


# ----------------------------------------------------------------------------
# Batch-independent glue (tiny, plain JAX)
# ----------------------------------------------------------------------------
def _make_edge_masks(H, W):
    # (4, H*W) {0,1} masks: [col dw=-1 valid, col dw=+1 valid,
    #                        row dh=-1 valid, row dh=+1 valid]
    hh = jnp.arange(H, dtype=jnp.int32)[:, None]
    ww = jnp.arange(W, dtype=jnp.int32)[None, :]

    def flat(m):
        return jnp.broadcast_to(m, (H, W)).reshape(H * W).astype(jnp.float32)

    return jnp.stack([flat(ww >= 1), flat(ww <= W - 2),
                      flat(hh >= 1), flat(hh <= H - 2)])


def bilinear_align_corners(img, H, W):
    # img: (C, h0, w0) -> (C, H, W), matching F.interpolate(..., 'bilinear',
    # align_corners=True).  Tiny (8x8 source) -> plain JAX.
    C, h0, w0 = img.shape

    def idx(n_out, n_in):
        if n_out == 1:
            pos = jnp.zeros((1,), jnp.float32)
        else:
            pos = jnp.linspace(0.0, float(n_in - 1), n_out)
        i0 = jnp.clip(jnp.floor(pos), 0, n_in - 1).astype(jnp.int32)
        i1 = jnp.minimum(i0 + 1, n_in - 1)
        w = pos - i0.astype(pos.dtype)
        return i0, i1, w

    y0, y1, wy = idx(H, h0)
    x0, x1, wx = idx(W, w0)
    gy = img[:, y0, :] * (1.0 - wy)[None, :, None] + img[:, y1, :] * wy[None, :, None]
    out = gy[:, :, x0] * (1.0 - wx)[None, None, :] + gy[:, :, x1] * wx[None, None, :]
    return out


# ----------------------------------------------------------------------------
# Parameters (deterministic, PyTorch layouts)
# ----------------------------------------------------------------------------
def make_params(key, dim_in, dim_out):
    c = dim_in // 4
    ks = iter(jax.random.split(key, 32))

    def nrm(shape, scale):
        return scale * jax.random.normal(next(ks), shape, jnp.float32)

    p = {}
    for i in range(1, 5):
        p[f"ss{i}"] = 1.0 + 0.2 * jax.random.normal(next(ks), (1, c, 8, 8), jnp.float32)
        p[f"c{i}_dw_w"] = nrm((c, 1, 3, 3), 0.3)
        p[f"c{i}_dw_b"] = nrm((c,), 0.1)
        p[f"c{i}_pw_w"] = nrm((c, c, 1, 1), 0.3)
        p[f"c{i}_pw_b"] = nrm((c,), 0.1)
    p["n1_w"] = 1.0 + nrm((dim_in,), 0.1)
    p["n1_b"] = nrm((dim_in,), 0.05)
    p["n2_w"] = 1.0 + nrm((dim_in,), 0.1)
    p["n2_b"] = nrm((dim_in,), 0.05)
    p["ldw_dw_w"] = nrm((dim_in, 1, 3, 3), 0.3)
    p["ldw_dw_b"] = nrm((dim_in,), 0.1)
    p["ldw_pw_w"] = nrm((dim_out, dim_in, 1, 1), 0.2)
    p["ldw_pw_b"] = nrm((dim_out,), 0.1)
    return p


# ----------------------------------------------------------------------------
# Forward pass (Pallas)
# ----------------------------------------------------------------------------
def group_shuffle_block_forward(x_nchw, p, b_block=None):
    B, Cin, H, W = x_nchw.shape
    c = Cin // 4
    HW = H * W
    Cout = p["ldw_pw_w"].shape[0]

    edge_masks = _make_edge_masks(H, W)

    # Branch params stacked over the 4 groups (order 1..4, matching the x1..x4
    # channel chunks); the four 1x1 convs become one block-diagonal matmul.
    ss_up = jnp.concatenate(
        [bilinear_align_corners(p[f"ss{i}"][0], H, W).reshape(c, HW)
         for i in (1, 2, 3, 4)], axis=0)                           # (Cin, HW)
    br_dww = jnp.concatenate([p[f"c{i}_dw_w"].reshape(c, 9) for i in (1, 2, 3, 4)], 0)
    br_dwb = jnp.concatenate([p[f"c{i}_dw_b"].reshape(c, 1) for i in (1, 2, 3, 4)], 0)
    br_pwb = jnp.concatenate([p[f"c{i}_pw_b"].reshape(c, 1) for i in (1, 2, 3, 4)], 0)
    br_pww = jnp.zeros((Cin, Cin), jnp.float32)
    for i in range(4):
        br_pww = br_pww.at[i * c:(i + 1) * c, i * c:(i + 1) * c].set(
            p[f"c{i + 1}_pw_w"][:, :, 0, 0])

    # Fold the channel shuffle cat([x2,x4,x1,x3]) into a parameter gather:
    # LN over C is permutation-invariant and the 1x1 conv absorbs the order.
    P = np.concatenate([np.arange(c, 2 * c), np.arange(3 * c, 4 * c),
                        np.arange(0, c), np.arange(2 * c, 3 * c)])
    Pinv = jnp.asarray(np.argsort(P), jnp.int32)

    n1w = p["n1_w"].reshape(Cin, 1)
    n1b = p["n1_b"].reshape(Cin, 1)
    n2w = jnp.take(p["n2_w"], Pinv).reshape(Cin, 1)
    n2b = jnp.take(p["n2_b"], Pinv).reshape(Cin, 1)
    ldw_dww = jnp.take(p["ldw_dw_w"].reshape(Cin, 9), Pinv, axis=0)
    ldw_dwb = jnp.take(p["ldw_dw_b"], Pinv).reshape(Cin, 1)
    ldw_pww = jnp.take(p["ldw_pw_w"][:, :, 0, 0], Pinv, axis=1)    # (Cout, Cin)
    ldw_pwb = p["ldw_pw_b"].reshape(Cout, 1)

    # Pack the tiny per-channel operands into one (Cin, 24) array, and attach
    # each pointwise bias as an extra column of its weight.
    chans = jnp.concatenate([n1w, n1b, n2w, n2b, ldw_dwb, ldw_dww,
                             br_dwb, br_dww], axis=1)              # (Cin, 24)
    br_pw = jnp.concatenate([br_pww, br_pwb], axis=1)              # (Cin, Cin+1)
    ldw_pw = jnp.concatenate([ldw_pww, ldw_pwb], axis=1)           # (Cout, Cin+1)

    x = x_nchw.reshape(B, Cin, HW)          # free reshape; stays channels-first

    bblk = _choose_bblk(B, Cin, Cout, HW) if b_block is None else b_block
    out = fused_block_pallas(x, ss_up, chans, br_pw, ldw_pw, edge_masks,
                             W, Cout, bblk)                        # (B, Cout, HW)
    return out.reshape(B, Cout, H, W)                              # NCHW


# ----------------------------------------------------------------------------
# Pure-JAX reference (mirrors the PyTorch module: NCHW, real channel shuffle,
# exact erf GELU) — checks the fusion / permutation-fold / separable-conv math.
# ----------------------------------------------------------------------------
def reference_forward(x, p):
    prec = lax.Precision.HIGHEST

    def ln_cf(x, w, b):
        u = jnp.mean(x, axis=1, keepdims=True)
        s = jnp.mean((x - u) ** 2, axis=1, keepdims=True)
        xn = (x - u) / jnp.sqrt(s + EPS)
        return w[None, :, None, None] * xn + b[None, :, None, None]

    def dw_conv(x, w, b):
        C = x.shape[1]
        y = lax.conv_general_dilated(
            x, w, (1, 1), [(1, 1), (1, 1)],
            dimension_numbers=("NCHW", "OIHW", "NCHW"),
            feature_group_count=C, precision=prec)
        return y + b[None, :, None, None]

    def pw_conv(x, w, b):
        y = lax.conv_general_dilated(
            x, w, (1, 1), [(0, 0), (0, 0)],
            dimension_numbers=("NCHW", "OIHW", "NCHW"), precision=prec)
        return y + b[None, :, None, None]

    def gelu_exact(v):
        return jax.nn.gelu(v, approximate=False)

    def branch(i, H, W):
        s = bilinear_align_corners(p[f"ss{i}"][0], H, W)[None]
        y = dw_conv(s, p[f"c{i}_dw_w"], p[f"c{i}_dw_b"])
        y = gelu_exact(y)
        return pw_conv(y, p[f"c{i}_pw_w"], p[f"c{i}_pw_b"])

    B, Cin, H, W = x.shape
    c = Cin // 4
    x = ln_cf(x, p["n1_w"], p["n1_b"])
    x1, x2, x3, x4 = x[:, :c], x[:, c:2 * c], x[:, 2 * c:3 * c], x[:, 3 * c:]
    x1 = x1 * branch(1, H, W)
    x2 = x2 * branch(2, H, W)
    x3 = x3 * branch(3, H, W)
    x4 = x4 * branch(4, H, W)
    x = jnp.concatenate([x2, x4, x1, x3], axis=1)
    x = ln_cf(x, p["n2_w"], p["n2_b"])
    x = dw_conv(x, p["ldw_dw_w"], p["ldw_dw_b"])
    x = gelu_exact(x)
    x = pw_conv(x, p["ldw_pw_w"], p["ldw_pw_b"])
    return x


if __name__ == "__main__":
    B, dim_in, dim_out, H, W = 2, 32, 64, 16, 16
    key = jax.random.PRNGKey(0)
    kx, kp = jax.random.split(key)
    x = jax.random.normal(kx, (B, dim_in, H, W), jnp.float32)
    params = make_params(kp, dim_in, dim_out)

    fwd = jax.jit(group_shuffle_block_forward)
    out = jax.block_until_ready(fwd(x, params))

    ref = reference_forward(x, params)
    np.testing.assert_allclose(np.asarray(out), np.asarray(ref),
                               rtol=1e-4, atol=1e-4)
    assert out.shape == (B, dim_out, H, W)
    print("KERNEL_OK")
</pallas_src>

<mosaic_0001>
module attributes {stable_mosaic.version = 11 : i64} {
  func.func @_fused_kernel(%arg0: i32, %arg1: memref<2x32x256xf32, #tpu.memory_space<vmem>>, %arg2: memref<32x256xf32, #tpu.memory_space<vmem>>, %arg3: memref<32x24xf32, #tpu.memory_space<vmem>>, %arg4: memref<32x33xf32, #tpu.memory_space<vmem>>, %arg5: memref<64x33xf32, #tpu.memory_space<vmem>>, %arg6: memref<4x256xf32, #tpu.memory_space<vmem>>, %arg7: memref<2x64x256xf32, #tpu.memory_space<vmem>>) attributes {dimension_semantics = [#tpu.dimension_semantics<parallel>], iteration_bounds = array<i64: 1>, scalar_prefetch = 0 : i64, scratch_operands = 0 : i64, tpu.core_type = #tpu.core_type<tc>, window_params = [{transform_indices = @transform_0, window_bounds = array<i64: 2, 32, 256>}, {pipeline_mode = #tpu.pipeline_mode<synchronous>, transform_indices = @transform_1, window_bounds = array<i64: 32, 256>}, {pipeline_mode = #tpu.pipeline_mode<synchronous>, transform_indices = @transform_2, window_bounds = array<i64: 32, 24>}, {pipeline_mode = #tpu.pipeline_mode<synchronous>, transform_indices = @transform_3, window_bounds = array<i64: 32, 33>}, {pipeline_mode = #tpu.pipeline_mode<synchronous>, transform_indices = @transform_4, window_bounds = array<i64: 64, 33>}, {pipeline_mode = #tpu.pipeline_mode<synchronous>, transform_indices = @transform_5, window_bounds = array<i64: 4, 256>}, {transform_indices = @transform_6, window_bounds = array<i64: 2, 64, 256>}]} {
    %c0 = arith.constant 0 : index
    %c0_0 = arith.constant 0 : index
    %0 = vector.load %arg3[%c0, %c0_0] : memref<32x24xf32, #tpu.memory_space<vmem>>, vector<32x24xf32>
    %1 = vector.extract_strided_slice %0 {offsets = [0, 0], sizes = [32, 1], strides = [1, 1]} : vector<32x24xf32> to vector<32x1xf32>
    %2 = vector.extract_strided_slice %0 {offsets = [0, 1], sizes = [32, 1], strides = [1, 1]} : vector<32x24xf32> to vector<32x1xf32>
    %3 = vector.extract_strided_slice %0 {offsets = [0, 2], sizes = [32, 1], strides = [1, 1]} : vector<32x24xf32> to vector<32x1xf32>
    %4 = vector.extract_strided_slice %0 {offsets = [0, 3], sizes = [32, 1], strides = [1, 1]} : vector<32x24xf32> to vector<32x1xf32>
    %5 = vector.extract_strided_slice %0 {offsets = [0, 4], sizes = [32, 1], strides = [1, 1]} : vector<32x24xf32> to vector<32x1xf32>
    %6 = vector.extract_strided_slice %0 {offsets = [0, 5], sizes = [32, 9], strides = [1, 1]} : vector<32x24xf32> to vector<32x9xf32>
    %7 = vector.extract_strided_slice %0 {offsets = [0, 14], sizes = [32, 1], strides = [1, 1]} : vector<32x24xf32> to vector<32x1xf32>
    %8 = vector.extract_strided_slice %0 {offsets = [0, 15], sizes = [32, 9], strides = [1, 1]} : vector<32x24xf32> to vector<32x9xf32>
    %c0_1 = arith.constant 0 : index
    %c0_2 = arith.constant 0 : index
    %9 = vector.load %arg4[%c0_1, %c0_2] : memref<32x33xf32, #tpu.memory_space<vmem>>, vector<32x33xf32>
    %10 = vector.extract_strided_slice %9 {offsets = [0, 0], sizes = [32, 32], strides = [1, 1]} : vector<32x33xf32> to vector<32x32xf32>
    %11 = vector.extract_strided_slice %9 {offsets = [0, 32], sizes = [32, 1], strides = [1, 1]} : vector<32x33xf32> to vector<32x1xf32>
    %c0_3 = arith.constant 0 : index
    %c0_4 = arith.constant 0 : index
    %12 = vector.load %arg5[%c0_3, %c0_4] : memref<64x33xf32, #tpu.memory_space<vmem>>, vector<64x33xf32>
    %13 = vector.extract_strided_slice %12 {offsets = [0, 0], sizes = [64, 32], strides = [1, 1]} : vector<64x33xf32> to vector<64x32xf32>
    %14 = vector.extract_strided_slice %12 {offsets = [0, 32], sizes = [64, 1], strides = [1, 1]} : vector<64x33xf32> to vector<64x1xf32>
    %c0_5 = arith.constant 0 : index
    %c0_6 = arith.constant 0 : index
    %15 = vector.load %arg6[%c0_5, %c0_6] : memref<4x256xf32, #tpu.memory_space<vmem>>, vector<4x256xf32>
    %16 = vector.extract_strided_slice %15 {offsets = [0, 0], sizes = [1, 256], strides = [1, 1]} : vector<4x256xf32> to vector<1x256xf32>
    %17 = vector.extract_strided_slice %15 {offsets = [1, 0], sizes = [1, 256], strides = [1, 1]} : vector<4x256xf32> to vector<1x256xf32>
    %18 = vector.extract_strided_slice %15 {offsets = [2, 0], sizes = [1, 256], strides = [1, 1]} : vector<4x256xf32> to vector<1x256xf32>
    %19 = vector.extract_strided_slice %15 {offsets = [3, 0], sizes = [1, 256], strides = [1, 1]} : vector<4x256xf32> to vector<1x256xf32>
    %c0_7 = arith.constant 0 : index
    %c0_8 = arith.constant 0 : index
    %20 = vector.load %arg2[%c0_7, %c0_8] : memref<32x256xf32, #tpu.memory_space<vmem>>, vector<32x256xf32>
    %c1_i32 = arith.constant 1 : i32
    %21 = tpu.dynamic_rotate %20 by %c1_i32 dim 1 : vector<32x256xf32>, i32 -> vector<32x256xf32>
    %22 = vector.broadcast %16 : vector<1x256xf32> to vector<32x256xf32>
    %23 = arith.mulf %21, %22 : vector<32x256xf32>
    %c255_i32 = arith.constant 255 : i32
    %24 = tpu.dynamic_rotate %20 by %c255_i32 dim 1 : vector<32x256xf32>, i32 -> vector<32x256xf32>
    %25 = vector.broadcast %17 : vector<1x256xf32> to vector<32x256xf32>
    %26 = arith.mulf %24, %25 : vector<32x256xf32>
    %27 = vector.extract_strided_slice %8 {offsets = [0, 3], sizes = [32, 1], strides = [1, 1]} : vector<32x9xf32> to vector<32x1xf32>
    %28 = vector.broadcast %27 : vector<32x1xf32> to vector<32x256xf32>
    %29 = arith.mulf %28, %23 : vector<32x256xf32>
    %30 = vector.extract_strided_slice %8 {offsets = [0, 4], sizes = [32, 1], strides = [1, 1]} : vector<32x9xf32> to vector<32x1xf32>
    %31 = vector.broadcast %30 : vector<32x1xf32> to vector<32x256xf32>
    %32 = arith.mulf %31, %20 : vector<32x256xf32>
    %33 = arith.addf %29, %32 : vector<32x256xf32>
    %34 = vector.extract_strided_slice %8 {offsets = [0, 5], sizes = [32, 1], strides = [1, 1]} : vector<32x9xf32> to vector<32x1xf32>
    %35 = vector.broadcast %34 : vector<32x1xf32> to vector<32x256xf32>
    %36 = arith.mulf %35, %26 : vector<32x256xf32>
    %37 = arith.addf %33, %36 : vector<32x256xf32>
    %38 = vector.extract_strided_slice %8 {offsets = [0, 0], sizes = [32, 1], strides = [1, 1]} : vector<32x9xf32> to vector<32x1xf32>
    %39 = vector.broadcast %38 : vector<32x1xf32> to vector<32x256xf32>
    %40 = arith.mulf %39, %23 : vector<32x256xf32>
    %41 = vector.extract_strided_slice %8 {offsets = [0, 1], sizes = [32, 1], strides = [1, 1]} : vector<32x9xf32> to vector<32x1xf32>
    %42 = vector.broadcast %41 : vector<32x1xf32> to vector<32x256xf32>
    %43 = arith.mulf %42, %20 : vector<32x256xf32>
    %44 = arith.addf %40, %43 : vector<32x256xf32>
    %45 = vector.extract_strided_slice %8 {offsets = [0, 2], sizes = [32, 1], strides = [1, 1]} : vector<32x9xf32> to vector<32x1xf32>
    %46 = vector.broadcast %45 : vector<32x1xf32> to vector<32x256xf32>
    %47 = arith.mulf %46, %26 : vector<32x256xf32>
    %48 = arith.addf %44, %47 : vector<32x256xf32>
    %c16_i32 = arith.constant 16 : i32
    %49 = tpu.dynamic_rotate %48 by %c16_i32 dim 1 : vector<32x256xf32>, i32 -> vector<32x256xf32>
    %50 = vector.broadcast %18 : vector<1x256xf32> to vector<32x256xf32>
    %51 = arith.mulf %50, %49 : vector<32x256xf32>
    %52 = arith.addf %37, %51 : vector<32x256xf32>
    %53 = vector.extract_strided_slice %8 {offsets = [0, 6], sizes = [32, 1], strides = [1, 1]} : vector<32x9xf32> to vector<32x1xf32>
    %54 = vector.broadcast %53 : vector<32x1xf32> to vector<32x256xf32>
    %55 = arith.mulf %54, %23 : vector<32x256xf32>
    %56 = vector.extract_strided_slice %8 {offsets = [0, 7], sizes = [32, 1], strides = [1, 1]} : vector<32x9xf32> to vector<32x1xf32>
    %57 = vector.broadcast %56 : vector<32x1xf32> to vector<32x256xf32>
    %58 = arith.mulf %57, %20 : vector<32x256xf32>
    %59 = arith.addf %55, %58 : vector<32x256xf32>
    %60 = vector.extract_strided_slice %8 {offsets = [0, 8], sizes = [32, 1], strides = [1, 1]} : vector<32x9xf32> to vector<32x1xf32>
    %61 = vector.broadcast %60 : vector<32x1xf32> to vector<32x256xf32>
    %62 = arith.mulf %61, %26 : vector<32x256xf32>
    %63 = arith.addf %59, %62 : vector<32x256xf32>
    %c240_i32 = arith.constant 240 : i32
    %64 = tpu.dynamic_rotate %63 by %c240_i32 dim 1 : vector<32x256xf32>, i32 -> vector<32x256xf32>
    %65 = vector.broadcast %19 : vector<1x256xf32> to vector<32x256xf32>
    %66 = arith.mulf %65, %64 : vector<32x256xf32>
    %67 = arith.addf %52, %66 : vector<32x256xf32>
    %68 = vector.broadcast %7 : vector<32x1xf32> to vector<32x256xf32>
    %69 = arith.addf %67, %68 : vector<32x256xf32>
    %cst = arith.constant 5.000000e-01 : f32
    %70 = vector.broadcast %cst : f32 to vector<32x256xf32>
    %71 = arith.mulf %70, %69 : vector<32x256xf32>
    %cst_9 = arith.constant 0.707106769 : f32
    %72 = vector.broadcast %cst_9 : f32 to vector<32x256xf32>
    %73 = arith.mulf %69, %72 : vector<32x256xf32>
    %74 = math.absf %73 : vector<32x256xf32>
    %cst_10 = arith.constant 0.327591091 : f32
    %75 = vector.broadcast %cst_10 : f32 to vector<32x256xf32>
    %76 = arith.mulf %75, %74 : vector<32x256xf32>
    %cst_11 = arith.constant 1.000000e+00 : f32
    %77 = vector.broadcast %cst_11 : f32 to vector<32x256xf32>
    %78 = arith.addf %77, %76 : vector<32x256xf32>
    %cst_12 = arith.constant 1.000000e+00 : f32
    %79 = vector.broadcast %cst_12 : f32 to vector<32x256xf32>
    %80 = arith.divf %79, %78 : vector<32x256xf32>
    %cst_13 = arith.constant 1.06140542 : f32
    %81 = vector.broadcast %cst_13 : f32 to vector<32x256xf32>
    %82 = arith.mulf %81, %80 : vector<32x256xf32>
    %cst_14 = arith.constant 1.45315206 : f32
    %83 = vector.broadcast %cst_14 : f32 to vector<32x256xf32>
    %84 = arith.subf %82, %83 : vector<32x256xf32>
    %85 = arith.mulf %84, %80 : vector<32x256xf32>
    %cst_15 = arith.constant 1.42141378 : f32
    %86 = vector.broadcast %cst_15 : f32 to vector<32x256xf32>
    %87 = arith.addf %85, %86 : vector<32x256xf32>
    %88 = arith.mulf %87, %80 : vector<32x256xf32>
    %cst_16 = arith.constant 0.284496725 : f32
    %89 = vector.broadcast %cst_16 : f32 to vector<32x256xf32>
    %90 = arith.subf %88, %89 : vector<32x256xf32>
    %91 = arith.mulf %90, %80 : vector<32x256xf32>
    %cst_17 = arith.constant 0.254829586 : f32
    %92 = vector.broadcast %cst_17 : f32 to vector<32x256xf32>
    %93 = arith.addf %91, %92 : vector<32x256xf32>
    %94 = arith.mulf %93, %80 : vector<32x256xf32>
    %cst_18 = arith.constant 0.000000e+00 : f32
    %95 = vector.broadcast %cst_18 : f32 to vector<32x256xf32>
    %96 = arith.subf %95, %74 : vector<32x256xf32>
    %97 = arith.mulf %96, %74 : vector<32x256xf32>
    %98 = math.exp %97 : vector<32x256xf32>
    %99 = arith.mulf %94, %98 : vector<32x256xf32>
    %cst_19 = arith.constant 1.000000e+00 : f32
    %100 = vector.broadcast %cst_19 : f32 to vector<32x256xf32>
    %101 = arith.subf %100, %99 : vector<32x256xf32>
    %cst_20 = arith.constant 0.000000e+00 : f32
    %102 = vector.broadcast %cst_20 : f32 to vector<32x256xf32>
    %103 = arith.cmpf oge, %73, %102 : vector<32x256xf32>
    %cst_21 = arith.constant 0.000000e+00 : f32
    %104 = vector.broadcast %cst_21 : f32 to vector<32x256xf32>
    %105 = arith.subf %104, %101 : vector<32x256xf32>
    %106 = arith.select %103, %101, %105 : vector<32x256xi1>, vector<32x256xf32>
    %cst_22 = arith.constant 1.000000e+00 : f32
    %107 = vector.broadcast %cst_22 : f32 to vector<32x256xf32>
    %108 = arith.addf %107, %106 : vector<32x256xf32>
    %109 = arith.mulf %71, %108 : vector<32x256xf32>
    %cst_23 = arith.constant dense<0.000000e+00> : vector<32x256xf32>
    %110 = tpu.matmul %10, %109, %cst_23 {dimension_numbers = #tpu.dot_dimension_numbers<[1], [0], [0], [1], [0, 0, 1, 1], [], []>} : vector<32x32xf32>, vector<32x256xf32>, vector<32x256xf32> -> vector<32x256xf32>
    %111 = vector.broadcast %11 : vector<32x1xf32> to vector<32x256xf32>
    %112 = arith.addf %110, %111 : vector<32x256xf32>
    %c0_24 = arith.constant 0 : index
    %c0_25 = arith.constant 0 : index
    %c0_26 = arith.constant 0 : index
    %113 = vector.load %arg1[%c0_24, %c0_25, %c0_26] : memref<2x32x256xf32, #tpu.memory_space<vmem>>, vector<1x32x256xf32>
    %114 = vector.shape_cast %113 : vector<1x32x256xf32> to vector<32x256xf32>
    %cst_27 = arith.constant dense<0.000000e+00> : vector<256xf32>
    %115 = vector.multi_reduction <add>, %114, %cst_27 [0] : vector<32x256xf32> to vector<256xf32>
    %116 = vector.shape_cast %115 : vector<256xf32> to vector<1x256xf32>
    %cst_28 = arith.constant 3.200000e+01 : f32
    %117 = vector.broadcast %cst_28 : f32 to vector<1x256xf32>
    %118 = arith.divf %116, %117 : vector<1x256xf32>
    %119 = vector.broadcast %118 : vector<1x256xf32> to vector<32x256xf32>
    %120 = arith.subf %114, %119 : vector<32x256xf32>
    %121 = arith.mulf %120, %120 : vector<32x256xf32>
    %cst_29 = arith.constant dense<0.000000e+00> : vector<256xf32>
    %122 = vector.multi_reduction <add>, %121, %cst_29 [0] : vector<32x256xf32> to vector<256xf32>
    %123 = vector.shape_cast %122 : vector<256xf32> to vector<1x256xf32>
    %cst_30 = arith.constant 3.200000e+01 : f32
    %124 = vector.broadcast %cst_30 : f32 to vector<1x256xf32>
    %125 = arith.divf %123, %124 : vector<1x256xf32>
    %cst_31 = arith.constant 9.99999997E-7 : f32
    %126 = vector.broadcast %cst_31 : f32 to vector<1x256xf32>
    %127 = arith.addf %125, %126 : vector<1x256xf32>
    %128 = math.rsqrt %127 : vector<1x256xf32>
    %129 = vector.broadcast %128 : vector<1x256xf32> to vector<32x256xf32>
    %130 = arith.mulf %120, %129 : vector<32x256xf32>
    %131 = vector.broadcast %1 : vector<32x1xf32> to vector<32x256xf32>
    %132 = arith.mulf %131, %130 : vector<32x256xf32>
    %133 = vector.broadcast %2 : vector<32x1xf32> to vector<32x256xf32>
    %134 = arith.addf %132, %133 : vector<32x256xf32>
    %135 = arith.mulf %134, %112 : vector<32x256xf32>
    %cst_32 = arith.constant dense<0.000000e+00> : vector<256xf32>
    %136 = vector.multi_reduction <add>, %135, %cst_32 [0] : vector<32x256xf32> to vector<256xf32>
    %137 = vector.shape_cast %136 : vector<256xf32> to vector<1x256xf32>
    %cst_33 = arith.constant 3.200000e+01 : f32
    %138 = vector.broadcast %cst_33 : f32 to vector<1x256xf32>
    %139 = arith.divf %137, %138 : vector<1x256xf32>
    %140 = vector.broadcast %139 : vector<1x256xf32> to vector<32x256xf32>
    %141 = arith.subf %135, %140 : vector<32x256xf32>
    %142 = arith.mulf %141, %141 : vector<32x256xf32>
    %cst_34 = arith.constant dense<0.000000e+00> : vector<256xf32>
    %143 = vector.multi_reduction <add>, %142, %cst_34 [0] : vector<32x256xf32> to vector<256xf32>
    %144 = vector.shape_cast %143 : vector<256xf32> to vector<1x256xf32>
    %cst_35 = arith.constant 3.200000e+01 : f32
    %145 = vector.broadcast %cst_35 : f32 to vector<1x256xf32>
    %146 = arith.divf %144, %145 : vector<1x256xf32>
    %cst_36 = arith.constant 9.99999997E-7 : f32
    %147 = vector.broadcast %cst_36 : f32 to vector<1x256xf32>
    %148 = arith.addf %146, %147 : vector<1x256xf32>
    %149 = math.rsqrt %148 : vector<1x256xf32>
    %150 = vector.broadcast %149 : vector<1x256xf32> to vector<32x256xf32>
    %151 = arith.mulf %141, %150 : vector<32x256xf32>
    %152 = vector.broadcast %3 : vector<32x1xf32> to vector<32x256xf32>
    %153 = arith.mulf %152, %151 : vector<32x256xf32>
    %154 = vector.broadcast %4 : vector<32x1xf32> to vector<32x256xf32>
    %155 = arith.addf %153, %154 : vector<32x256xf32>
    %c1_i32_37 = arith.constant 1 : i32
    %156 = tpu.dynamic_rotate %155 by %c1_i32_37 dim 1 : vector<32x256xf32>, i32 -> vector<32x256xf32>
    %157 = vector.broadcast %16 : vector<1x256xf32> to vector<32x256xf32>
    %158 = arith.mulf %156, %157 : vector<32x256xf32>
    %c255_i32_38 = arith.constant 255 : i32
    %159 = tpu.dynamic_rotate %155 by %c255_i32_38 dim 1 : vector<32x256xf32>, i32 -> vector<32x256xf32>
    %160 = vector.broadcast %17 : vector<1x256xf32> to vector<32x256xf32>
    %161 = arith.mulf %159, %160 : vector<32x256xf32>
    %162 = vector.extract_strided_slice %6 {offsets = [0, 3], sizes = [32, 1], strides = [1, 1]} : vector<32x9xf32> to vector<32x1xf32>
    %163 = vector.broadcast %162 : vector<32x1xf32> to vector<32x256xf32>
    %164 = arith.mulf %163, %158 : vector<32x256xf32>
    %165 = vector.extract_strided_slice %6 {offsets = [0, 4], sizes = [32, 1], strides = [1, 1]} : vector<32x9xf32> to vector<32x1xf32>
    %166 = vector.broadcast %165 : vector<32x1xf32> to vector<32x256xf32>
    %167 = arith.mulf %166, %155 : vector<32x256xf32>
    %168 = arith.addf %164, %167 : vector<32x256xf32>
    %169 = vector.extract_strided_slice %6 {offsets = [0, 5], sizes = [32, 1], strides = [1, 1]} : vector<32x9xf32> to vector<32x1xf32>
    %170 = vector.broadcast %169 : vector<32x1xf32> to vector<32x256xf32>
    %171 = arith.mulf %170, %161 : vector<32x256xf32>
    %172 = arith.addf %168, %171 : vector<32x256xf32>
    %173 = vector.extract_strided_slice %6 {offsets = [0, 0], sizes = [32, 1], strides = [1, 1]} : vector<32x9xf32> to vector<32x1xf32>
    %174 = vector.broadcast %173 : vector<32x1xf32> to vector<32x256xf32>
    %175 = arith.mulf %174, %158 : vector<32x256xf32>
    %176 = vector.extract_strided_slice %6 {offsets = [0, 1], sizes = [32, 1], strides = [1, 1]} : vector<32x9xf32> to vector<32x1xf32>
    %177 = vector.broadcast %176 : vector<32x1xf32> to vector<32x256xf32>
    %178 = arith.mulf %177, %155 : vector<32x256xf32>
    %179 = arith.addf %175, %178 : vector<32x256xf32>
    %180 = vector.extract_strided_slice %6 {offsets = [0, 2], sizes = [32, 1], strides = [1, 1]} : vector<32x9xf32> to vector<32x1xf32>
    %181 = vector.broadcast %180 : vector<32x1xf32> to vector<32x256xf32>
    %182 = arith.mulf %181, %161 : vector<32x256xf32>
    %183 = arith.addf %179, %182 : vector<32x256xf32>
    %c16_i32_39 = arith.constant 16 : i32
    %184 = tpu.dynamic_rotate %183 by %c16_i32_39 dim 1 : vector<32x256xf32>, i32 -> vector<32x256xf32>
    %185 = vector.broadcast %18 : vector<1x256xf32> to vector<32x256xf32>
    %186 = arith.mulf %185, %184 : vector<32x256xf32>
    %187 = arith.addf %172, %186 : vector<32x256xf32>
    %188 = vector.extract_strided_slice %6 {offsets = [0, 6], sizes = [32, 1], strides = [1, 1]} : vector<32x9xf32> to vector<32x1xf32>
    %189 = vector.broadcast %188 : vector<32x1xf32> to vector<32x256xf32>
    %190 = arith.mulf %189, %158 : vector<32x256xf32>
    %191 = vector.extract_strided_slice %6 {offsets = [0, 7], sizes = [32, 1], strides = [1, 1]} : vector<32x9xf32> to vector<32x1xf32>
    %192 = vector.broadcast %191 : vector<32x1xf32> to vector<32x256xf32>
    %193 = arith.mulf %192, %155 : vector<32x256xf32>
    %194 = arith.addf %190, %193 : vector<32x256xf32>
    %195 = vector.extract_strided_slice %6 {offsets = [0, 8], sizes = [32, 1], strides = [1, 1]} : vector<32x9xf32> to vector<32x1xf32>
    %196 = vector.broadcast %195 : vector<32x1xf32> to vector<32x256xf32>
    %197 = arith.mulf %196, %161 : vector<32x256xf32>
    %198 = arith.addf %194, %197 : vector<32x256xf32>
    %c240_i32_40 = arith.constant 240 : i32
    %199 = tpu.dynamic_rotate %198 by %c240_i32_40 dim 1 : vector<32x256xf32>, i32 -> vector<32x256xf32>
    %200 = vector.broadcast %19 : vector<1x256xf32> to vector<32x256xf32>
    %201 = arith.mulf %200, %199 : vector<32x256xf32>
    %202 = arith.addf %187, %201 : vector<32x256xf32>
    %203 = vector.broadcast %5 : vector<32x1xf32> to vector<32x256xf32>
    %204 = arith.addf %202, %203 : vector<32x256xf32>
    %cst_41 = arith.constant 5.000000e-01 : f32
    %205 = vector.broadcast %cst_41 : f32 to vector<32x256xf32>
    %206 = arith.mulf %205, %204 : vector<32x256xf32>
    %cst_42 = arith.constant 0.707106769 : f32
    %207 = vector.broadcast %cst_42 : f32 to vector<32x256xf32>
    %208 = arith.mulf %204, %207 : vector<32x256xf32>
    %209 = math.absf %208 : vector<32x256xf32>
    %cst_43 = arith.constant 0.327591091 : f32
    %210 = vector.broadcast %cst_43 : f32 to vector<32x256xf32>
    %211 = arith.mulf %210, %209 : vector<32x256xf32>
    %cst_44 = arith.constant 1.000000e+00 : f32
    %212 = vector.broadcast %cst_44 : f32 to vector<32x256xf32>
    %213 = arith.addf %212, %211 : vector<32x256xf32>
    %cst_45 = arith.constant 1.000000e+00 : f32
    %214 = vector.broadcast %cst_45 : f32 to vector<32x256xf32>
    %215 = arith.divf %214, %213 : vector<32x256xf32>
    %cst_46 = arith.constant 1.06140542 : f32
    %216 = vector.broadcast %cst_46 : f32 to vector<32x256xf32>
    %217 = arith.mulf %216, %215 : vector<32x256xf32>
    %cst_47 = arith.constant 1.45315206 : f32
    %218 = vector.broadcast %cst_47 : f32 to vector<32x256xf32>
    %219 = arith.subf %217, %218 : vector<32x256xf32>
    %220 = arith.mulf %219, %215 : vector<32x256xf32>
    %cst_48 = arith.constant 1.42141378 : f32
    %221 = vector.broadcast %cst_48 : f32 to vector<32x256xf32>
    %222 = arith.addf %220, %221 : vector<32x256xf32>
    %223 = arith.mulf %222, %215 : vector<32x256xf32>
    %cst_49 = arith.constant 0.284496725 : f32
    %224 = vector.broadcast %cst_49 : f32 to vector<32x256xf32>
    %225 = arith.subf %223, %224 : vector<32x256xf32>
    %226 = arith.mulf %225, %215 : vector<32x256xf32>
    %cst_50 = arith.constant 0.254829586 : f32
    %227 = vector.broadcast %cst_50 : f32 to vector<32x256xf32>
    %228 = arith.addf %226, %227 : vector<32x256xf32>
    %229 = arith.mulf %228, %215 : vector<32x256xf32>
    %cst_51 = arith.constant 0.000000e+00 : f32
    %230 = vector.broadcast %cst_51 : f32 to vector<32x256xf32>
    %231 = arith.subf %230, %209 : vector<32x256xf32>
    %232 = arith.mulf %231, %209 : vector<32x256xf32>
    %233 = math.exp %232 : vector<32x256xf32>
    %234 = arith.mulf %229, %233 : vector<32x256xf32>
    %cst_52 = arith.constant 1.000000e+00 : f32
    %235 = vector.broadcast %cst_52 : f32 to vector<32x256xf32>
    %236 = arith.subf %235, %234 : vector<32x256xf32>
    %cst_53 = arith.constant 0.000000e+00 : f32
    %237 = vector.broadcast %cst_53 : f32 to vector<32x256xf32>
    %238 = arith.cmpf oge, %208, %237 : vector<32x256xf32>
    %cst_54 = arith.constant 0.000000e+00 : f32
    %239 = vector.broadcast %cst_54 : f32 to vector<32x256xf32>
    %240 = arith.subf %239, %236 : vector<32x256xf32>
    %241 = arith.select %238, %236, %240 : vector<32x256xi1>, vector<32x256xf32>
    %cst_55 = arith.constant 1.000000e+00 : f32
    %242 = vector.broadcast %cst_55 : f32 to vector<32x256xf32>
    %243 = arith.addf %242, %241 : vector<32x256xf32>
    %244 = arith.mulf %206, %243 : vector<32x256xf32>
    %cst_56 = arith.constant dense<0.000000e+00> : vector<64x256xf32>
    %245 = tpu.matmul %13, %244, %cst_56 {dimension_numbers = #tpu.dot_dimension_numbers<[1], [0], [0], [1], [0, 0, 1, 1], [], []>} : vector<64x32xf32>, vector<32x256xf32>, vector<64x256xf32> -> vector<64x256xf32>
    %246 = vector.broadcast %14 : vector<64x1xf32> to vector<64x256xf32>
    %247 = arith.addf %245, %246 : vector<64x256xf32>
    %c0_57 = arith.constant 0 : index
    %c0_58 = arith.constant 0 : index
    %c0_59 = arith.constant 0 : index
    %248 = vector.load %arg7[%c0_57, %c0_58, %c0_59] : memref<2x64x256xf32, #tpu.memory_space<vmem>>, vector<1x64x256xf32>
    %249 = vector.shape_cast %248 : vector<1x64x256xf32> to vector<64x256xf32>
    %250 = vector.shape_cast %247 : vector<64x256xf32> to vector<1x64x256xf32>
    tpu.vector_store %arg7[%c0_57, %c0_58, %c0_59], %250 {strides = array<i32>} : memref<2x64x256xf32, #tpu.memory_space<vmem>>, vector<1x64x256xf32>,
    %c1 = arith.constant 1 : index
    %c0_60 = arith.constant 0 : index
    %c0_61 = arith.constant 0 : index
    %251 = vector.load %arg1[%c1, %c0_60, %c0_61] : memref<2x32x256xf32, #tpu.memory_space<vmem>>, vector<1x32x256xf32>
    %252 = vector.shape_cast %251 : vector<1x32x256xf32> to vector<32x256xf32>
    %cst_62 = arith.constant dense<0.000000e+00> : vector<256xf32>
    %253 = vector.multi_reduction <add>, %252, %cst_62 [0] : vector<32x256xf32> to vector<256xf32>
    %254 = vector.shape_cast %253 : vector<256xf32> to vector<1x256xf32>
    %cst_63 = arith.constant 3.200000e+01 : f32
    %255 = vector.broadcast %cst_63 : f32 to vector<1x256xf32>
    %256 = arith.divf %254, %255 : vector<1x256xf32>
    %257 = vector.broadcast %256 : vector<1x256xf32> to vector<32x256xf32>
    %258 = arith.subf %252, %257 : vector<32x256xf32>
    %259 = arith.mulf %258, %258 : vector<32x256xf32>
    %cst_64 = arith.constant dense<0.000000e+00> : vector<256xf32>
    %260 = vector.multi_reduction <add>, %259, %cst_64 [0] : vector<32x256xf32> to vector<256xf32>
    %261 = vector.shape_cast %260 : vector<256xf32> to vector<1x256xf32>
    %cst_65 = arith.constant 3.200000e+01 : f32
    %262 = vector.broadcast %cst_65 : f32 to vector<1x256xf32>
    %263 = arith.divf %261, %262 : vector<1x256xf32>
    %cst_66 = arith.constant 9.99999997E-7 : f32
    %264 = vector.broadcast %cst_66 : f32 to vector<1x256xf32>
    %265 = arith.addf %263, %264 : vector<1x256xf32>
    %266 = math.rsqrt %265 : vector<1x256xf32>
    %267 = vector.broadcast %266 : vector<1x256xf32> to vector<32x256xf32>
    %268 = arith.mulf %258, %267 : vector<32x256xf32>
    %269 = vector.broadcast %1 : vector<32x1xf32> to vector<32x256xf32>
    %270 = arith.mulf %269, %268 : vector<32x256xf32>
    %271 = vector.broadcast %2 : vector<32x1xf32> to vector<32x256xf32>
    %272 = arith.addf %270, %271 : vector<32x256xf32>
    %273 = arith.mulf %272, %112 : vector<32x256xf32>
    %cst_67 = arith.constant dense<0.000000e+00> : vector<256xf32>
    %274 = vector.multi_reduction <add>, %273, %cst_67 [0] : vector<32x256xf32> to vector<256xf32>
    %275 = vector.shape_cast %274 : vector<256xf32> to vector<1x256xf32>
    %cst_68 = arith.constant 3.200000e+01 : f32
    %276 = vector.broadcast %cst_68 : f32 to vector<1x256xf32>
    %277 = arith.divf %275, %276 : vector<1x256xf32>
    %278 = vector.broadcast %277 : vector<1x256xf32> to vector<32x256xf32>
    %279 = arith.subf %273, %278 : vector<32x256xf32>
    %280 = arith.mulf %279, %279 : vector<32x256xf32>
    %cst_69 = arith.constant dense<0.000000e+00> : vector<256xf32>
    %281 = vector.multi_reduction <add>, %280, %cst_69 [0] : vector<32x256xf32> to vector<256xf32>
    %282 = vector.shape_cast %281 : vector<256xf32> to vector<1x256xf32>
    %cst_70 = arith.constant 3.200000e+01 : f32
    %283 = vector.broadcast %cst_70 : f32 to vector<1x256xf32>
    %284 = arith.divf %282, %283 : vector<1x256xf32>
    %cst_71 = arith.constant 9.99999997E-7 : f32
    %285 = vector.broadcast %cst_71 : f32 to vector<1x256xf32>
    %286 = arith.addf %284, %285 : vector<1x256xf32>
    %287 = math.rsqrt %286 : vector<1x256xf32>
    %288 = vector.broadcast %287 : vector<1x256xf32> to vector<32x256xf32>
    %289 = arith.mulf %279, %288 : vector<32x256xf32>
    %290 = vector.broadcast %3 : vector<32x1xf32> to vector<32x256xf32>
    %291 = arith.mulf %290, %289 : vector<32x256xf32>
    %292 = vector.broadcast %4 : vector<32x1xf32> to vector<32x256xf32>
    %293 = arith.addf %291, %292 : vector<32x256xf32>
    %c1_i32_72 = arith.constant 1 : i32
    %294 = tpu.dynamic_rotate %293 by %c1_i32_72 dim 1 : vector<32x256xf32>, i32 -> vector<32x256xf32>
    %295 = vector.broadcast %16 : vector<1x256xf32> to vector<32x256xf32>
    %296 = arith.mulf %294, %295 : vector<32x256xf32>
    %c255_i32_73 = arith.constant 255 : i32
    %297 = tpu.dynamic_rotate %293 by %c255_i32_73 dim 1 : vector<32x256xf32>, i32 -> vector<32x256xf32>
    %298 = vector.broadcast %17 : vector<1x256xf32> to vector<32x256xf32>
    %299 = arith.mulf %297, %298 : vector<32x256xf32>
    %300 = vector.extract_strided_slice %6 {offsets = [0, 3], sizes = [32, 1], strides = [1, 1]} : vector<32x9xf32> to vector<32x1xf32>
    %301 = vector.broadcast %300 : vector<32x1xf32> to vector<32x256xf32>
    %302 = arith.mulf %301, %296 : vector<32x256xf32>
    %303 = vector.extract_strided_slice %6 {offsets = [0, 4], sizes = [32, 1], strides = [1, 1]} : vector<32x9xf32> to vector<32x1xf32>
    %304 = vector.broadcast %303 : vector<32x1xf32> to vector<32x256xf32>
    %305 = arith.mulf %304, %293 : vector<32x256xf32>
    %306 = arith.addf %302, %305 : vector<32x256xf32>
    %307 = vector.extract_strided_slice %6 {offsets = [0, 5], sizes = [32, 1], strides = [1, 1]} : vector<32x9xf32> to vector<32x1xf32>
    %308 = vector.broadcast %307 : vector<32x1xf32> to vector<32x256xf32>
    %309 = arith.mulf %308, %299 : vector<32x256xf32>
    %310 = arith.addf %306, %309 : vector<32x256xf32>
    %311 = vector.extract_strided_slice %6 {offsets = [0, 0], sizes = [32, 1], strides = [1, 1]} : vector<32x9xf32> to vector<32x1xf32>
    %312 = vector.broadcast %311 : vector<32x1xf32> to vector<32x256xf32>
    %313 = arith.mulf %312, %296 : vector<32x256xf32>
    %314 = vector.extract_strided_slice %6 {offsets = [0, 1], sizes = [32, 1], strides = [1, 1]} : vector<32x9xf32> to vector<32x1xf32>
    %315 = vector.broadcast %314 : vector<32x1xf32> to vector<32x256xf32>
    %316 = arith.mulf %315, %293 : vector<32x256xf32>
    %317 = arith.addf %313, %316 : vector<32x256xf32>
    %318 = vector.extract_strided_slice %6 {offsets = [0, 2], sizes = [32, 1], strides = [1, 1]} : vector<32x9xf32> to vector<32x1xf32>
    %319 = vector.broadcast %318 : vector<32x1xf32> to vector<32x256xf32>
    %320 = arith.mulf %319, %299 : vector<32x256xf32>
    %321 = arith.addf %317, %320 : vector<32x256xf32>
    %c16_i32_74 = arith.constant 16 : i32
    %322 = tpu.dynamic_rotate %321 by %c16_i32_74 dim 1 : vector<32x256xf32>, i32 -> vector<32x256xf32>
    %323 = vector.broadcast %18 : vector<1x256xf32> to vector<32x256xf32>
    %324 = arith.mulf %323, %322 : vector<32x256xf32>
    %325 = arith.addf %310, %324 : vector<32x256xf32>
    %326 = vector.extract_strided_slice %6 {offsets = [0, 6], sizes = [32, 1], strides = [1, 1]} : vector<32x9xf32> to vector<32x1xf32>
    %327 = vector.broadcast %326 : vector<32x1xf32> to vector<32x256xf32>
    %328 = arith.mulf %327, %296 : vector<32x256xf32>
    %329 = vector.extract_strided_slice %6 {offsets = [0, 7], sizes = [32, 1], strides = [1, 1]} : vector<32x9xf32> to vector<32x1xf32>
    %330 = vector.broadcast %329 : vector<32x1xf32> to vector<32x256xf32>
    %331 = arith.mulf %330, %293 : vector<32x256xf32>
    %332 = arith.addf %328, %331 : vector<32x256xf32>
    %333 = vector.extract_strided_slice %6 {offsets = [0, 8], sizes = [32, 1], strides = [1, 1]} : vector<32x9xf32> to vector<32x1xf32>
    %334 = vector.broadcast %333 : vector<32x1xf32> to vector<32x256xf32>
    %335 = arith.mulf %334, %299 : vector<32x256xf32>
    %336 = arith.addf %332, %335 : vector<32x256xf32>
    %c240_i32_75 = arith.constant 240 : i32
    %337 = tpu.dynamic_rotate %336 by %c240_i32_75 dim 1 : vector<32x256xf32>, i32 -> vector<32x256xf32>
    %338 = vector.broadcast %19 : vector<1x256xf32> to vector<32x256xf32>
    %339 = arith.mulf %338, %337 : vector<32x256xf32>
    %340 = arith.addf %325, %339 : vector<32x256xf32>
    %341 = vector.broadcast %5 : vector<32x1xf32> to vector<32x256xf32>
    %342 = arith.addf %340, %341 : vector<32x256xf32>
    %cst_76 = arith.constant 5.000000e-01 : f32
    %343 = vector.broadcast %cst_76 : f32 to vector<32x256xf32>
    %344 = arith.mulf %343, %342 : vector<32x256xf32>
    %cst_77 = arith.constant 0.707106769 : f32
    %345 = vector.broadcast %cst_77 : f32 to vector<32x256xf32>
    %346 = arith.mulf %342, %345 : vector<32x256xf32>
    %347 = math.absf %346 : vector<32x256xf32>
    %cst_78 = arith.constant 0.327591091 : f32
    %348 = vector.broadcast %cst_78 : f32 to vector<32x256xf32>
    %349 = arith.mulf %348, %347 : vector<32x256xf32>
    %cst_79 = arith.constant 1.000000e+00 : f32
    %350 = vector.broadcast %cst_79 : f32 to vector<32x256xf32>
    %351 = arith.addf %350, %349 : vector<32x256xf32>
    %cst_80 = arith.constant 1.000000e+00 : f32
    %352 = vector.broadcast %cst_80 : f32 to vector<32x256xf32>
    %353 = arith.divf %352, %351 : vector<32x256xf32>
    %cst_81 = arith.constant 1.06140542 : f32
    %354 = vector.broadcast %cst_81 : f32 to vector<32x256xf32>
    %355 = arith.mulf %354, %353 : vector<32x256xf32>
    %cst_82 = arith.constant 1.45315206 : f32
    %356 = vector.broadcast %cst_82 : f32 to vector<32x256xf32>
    %357 = arith.subf %355, %356 : vector<32x256xf32>
    %358 = arith.mulf %357, %353 : vector<32x256xf32>
    %cst_83 = arith.constant 1.42141378 : f32
    %359 = vector.broadcast %cst_83 : f32 to vector<32x256xf32>
    %360 = arith.addf %358, %359 : vector<32x256xf32>
    %361 = arith.mulf %360, %353 : vector<32x256xf32>
    %cst_84 = arith.constant 0.284496725 : f32
    %362 = vector.broadcast %cst_84 : f32 to vector<32x256xf32>
    %363 = arith.subf %361, %362 : vector<32x256xf32>
    %364 = arith.mulf %363, %353 : vector<32x256xf32>
    %cst_85 = arith.constant 0.254829586 : f32
    %365 = vector.broadcast %cst_85 : f32 to vector<32x256xf32>
    %366 = arith.addf %364, %365 : vector<32x256xf32>
    %367 = arith.mulf %366, %353 : vector<32x256xf32>
    %cst_86 = arith.constant 0.000000e+00 : f32
    %368 = vector.broadcast %cst_86 : f32 to vector<32x256xf32>
    %369 = arith.subf %368, %347 : vector<32x256xf32>
    %370 = arith.mulf %369, %347 : vector<32x256xf32>
    %371 = math.exp %370 : vector<32x256xf32>
    %372 = arith.mulf %367, %371 : vector<32x256xf32>
    %cst_87 = arith.constant 1.000000e+00 : f32
    %373 = vector.broadcast %cst_87 : f32 to vector<32x256xf32>
    %374 = arith.subf %373, %372 : vector<32x256xf32>
    %cst_88 = arith.constant 0.000000e+00 : f32
    %375 = vector.broadcast %cst_88 : f32 to vector<32x256xf32>
    %376 = arith.cmpf oge, %346, %375 : vector<32x256xf32>
    %cst_89 = arith.constant 0.000000e+00 : f32
    %377 = vector.broadcast %cst_89 : f32 to vector<32x256xf32>
    %378 = arith.subf %377, %374 : vector<32x256xf32>
    %379 = arith.select %376, %374, %378 : vector<32x256xi1>, vector<32x256xf32>
    %cst_90 = arith.constant 1.000000e+00 : f32
    %380 = vector.broadcast %cst_90 : f32 to vector<32x256xf32>
    %381 = arith.addf %380, %379 : vector<32x256xf32>
    %382 = arith.mulf %344, %381 : vector<32x256xf32>
    %cst_91 = arith.constant dense<0.000000e+00> : vector<64x256xf32>
    %383 = tpu.matmul %13, %382, %cst_91 {dimension_numbers = #tpu.dot_dimension_numbers<[1], [0], [0], [1], [0, 0, 1, 1], [], []>} : vector<64x32xf32>, vector<32x256xf32>, vector<64x256xf32> -> vector<64x256xf32>
    %384 = vector.broadcast %14 : vector<64x1xf32> to vector<64x256xf32>
    %385 = arith.addf %383, %384 : vector<64x256xf32>
    %c1_92 = arith.constant 1 : index
    %c0_93 = arith.constant 0 : index
    %c0_94 = arith.constant 0 : index
    %386 = vector.load %arg7[%c1_92, %c0_93, %c0_94] : memref<2x64x256xf32, #tpu.memory_space<vmem>>, vector<1x64x256xf32>
    %387 = vector.shape_cast %386 : vector<1x64x256xf32> to vector<64x256xf32>
    %388 = vector.shape_cast %385 : vector<64x256xf32> to vector<1x64x256xf32>
    tpu.vector_store %arg7[%c1_92, %c0_93, %c0_94], %388 {strides = array<i32>} : memref<2x64x256xf32, #tpu.memory_space<vmem>>, vector<1x64x256xf32>,
    return
  }
  func.func @transform_0(%arg0: i32) -> (i32, i32, i32) {
    %c0_i32 = arith.constant 0 : i32
    %c0_i32_0 = arith.constant 0 : i32
    %c0_i32_1 = arith.constant 0 : i32
    return %arg0, %c0_i32, %c0_i32_0 : i32, i32, i32
  }
  func.func @transform_1(%arg0: i32) -> (i32, i32) {
    %c0_i32 = arith.constant 0 : i32
    %c0_i32_0 = arith.constant 0 : i32
    %c0_i32_1 = arith.constant 0 : i32
    return %c0_i32, %c0_i32_0 : i32, i32
  }
  func.func @transform_2(%arg0: i32) -> (i32, i32) {
    %c0_i32 = arith.constant 0 : i32
    %c0_i32_0 = arith.constant 0 : i32
    %c0_i32_1 = arith.constant 0 : i32
    return %c0_i32, %c0_i32_0 : i32, i32
  }
  func.func @transform_3(%arg0: i32) -> (i32, i32) {
    %c0_i32 = arith.constant 0 : i32
    %c0_i32_0 = arith.constant 0 : i32
    %c0_i32_1 = arith.constant 0 : i32
    return %c0_i32, %c0_i32_0 : i32, i32
  }
  func.func @transform_4(%arg0: i32) -> (i32, i32) {
    %c0_i32 = arith.constant 0 : i32
    %c0_i32_0 = arith.constant 0 : i32
    %c0_i32_1 = arith.constant 0 : i32
    return %c0_i32, %c0_i32_0 : i32, i32
  }
  func.func @transform_5(%arg0: i32) -> (i32, i32) {
    %c0_i32 = arith.constant 0 : i32
    %c0_i32_0 = arith.constant 0 : i32
    %c0_i32_1 = arith.constant 0 : i32
    return %c0_i32, %c0_i32_0 : i32, i32
  }
  func.func @transform_6(%arg0: i32) -> (i32, i32, i32) {
    %c0_i32 = arith.constant 0 : i32
    %c0_i32_0 = arith.constant 0 : i32
    %c0_i32_1 = arith.constant 0 : i32
    return %arg0, %c0_i32, %c0_i32_0 : i32, i32, i32
  }
}

</mosaic_0001>

<llo_original>
// kernel: group_shuffle_block_forward.1
$region0: #{group_shuffle_block_forward.1}
  #allocation0 [shape = 'u32[]', space=smem, size = 0x4, offset = 0x4, fixed_abs, tag = 'smem constant byte address 0x4 - core index']
  #allocation1 [shape = 'u32[144,128]{1,0:T(1,128)}', space=vmem, size = 0x12000, scoped, tag = 'internal scratch']
  %s0 = inlined_call_operand.vmem [shape: f32[2,32,256], index: 0, kind: input, shape index: {}]
  %s1 = inlined_call_operand.vmem [shape: f32[32,256], index: 1, kind: input, shape index: {}]
  %s2 = inlined_call_operand.vmem [shape: f32[32,24], index: 2, kind: input, shape index: {}]
  %s3 = inlined_call_operand.vmem [shape: f32[32,33], index: 3, kind: input, shape index: {}]
  %s4 = inlined_call_operand.vmem [shape: f32[64,33], index: 4, kind: input, shape index: {}]
  %s5 = inlined_call_operand.vmem [shape: f32[4,256], index: 5, kind: input, shape index: {}]
  %s6 = inlined_call_operand.vmem [shape: f32[2,64,256], index: 6, kind: output, shape index: {}]
  %s7 = sld [smem:[#allocation0]]
  $region34: #{group_shuffle_block_forward.1} parent=0
    _
  %s9 = ssub.s32 1, %s7
  %s10 = scalar_select 0, %s9, %s7
  // Predicated region
  $region2: #{group_shuffle_block_forward.1} parent=0 // pred_check
    _
  $region3: #{group_shuffle_block_forward.1} parent=0 // pred_check_branch
    %12 = sbr.rel (0) target = $region5
  $region4: #{group_shuffle_block_forward.1} parent=0 // pred_region
    _
  $region5: #{group_shuffle_block_forward.1} parent=0 // pred_fallthru
    _
  // Predicated region
  $region6: #{group_shuffle_block_forward.1} parent=0 // pred_check
    _
  $region7: #{group_shuffle_block_forward.1} parent=0 // pred_check_branch
    %14 = sbr.rel (0) target = $region9
  $region8: #{group_shuffle_block_forward.1} parent=0 // pred_region
    _
  $region9: #{group_shuffle_block_forward.1} parent=0 // pred_fallthru
    _
  // Predicated region
  $region10: #{group_shuffle_block_forward.1} parent=0 // pred_check
    _
  $region11: #{group_shuffle_block_forward.1} parent=0 // pred_check_branch
    %16 = sbr.rel (0) target = $region13
  $region12: #{group_shuffle_block_forward.1} parent=0 // pred_region
    _
  $region13: #{group_shuffle_block_forward.1} parent=0 // pred_fallthru
    _
  // Predicated region
  $region14: #{group_shuffle_block_forward.1} parent=0 // pred_check
    _
  $region15: #{group_shuffle_block_forward.1} parent=0 // pred_check_branch
    %18 = sbr.rel (0) target = $region17
  $region16: #{group_shuffle_block_forward.1} parent=0 // pred_region
    _
  $region17: #{group_shuffle_block_forward.1} parent=0 // pred_fallthru
    _
  // Predicated region
  $region18: #{group_shuffle_block_forward.1} parent=0 // pred_check
    _
  $region19: #{group_shuffle_block_forward.1} parent=0 // pred_check_branch
    %20 = sbr.rel (0) target = $region21
  $region20: #{group_shuffle_block_forward.1} parent=0 // pred_region
    _
  $region21: #{group_shuffle_block_forward.1} parent=0 // pred_fallthru
    _
  // Predicated region
  $region22: #{group_shuffle_block_forward.1} parent=0 // pred_check
    _
  $region23: #{group_shuffle_block_forward.1} parent=0 // pred_check_branch
    %22 = sbr.rel (0) target = $region25
  $region24: #{group_shuffle_block_forward.1} parent=0 // pred_region
    _
  $region25: #{group_shuffle_block_forward.1} parent=0 // pred_fallthru
    _
  %v23 = vld [vmem:[%s2] sm:$0xff]
  %v24 = vld [vmem:[%s2 + $0x8] sm:$0xff]
  %v25 = vld [vmem:[%s2 + $0x10] sm:$0xff]
  %v26 = vld [vmem:[%s2 + $0x18] sm:$0xff]
  %v27 = vld [vmem:[%s3] sm:$0xff]
  %v28 = vld [vmem:[%s3 + $0x8] sm:$0xff]
  %v29 = vld [vmem:[%s3 + $0x10] sm:$0xff]
  %v30 = vld [vmem:[%s3 + $0x18] sm:$0xff]
  %v31 = vld [vmem:[%s4] sm:$0xff]
  %v32 = vld [vmem:[%s4 + $0x8] sm:$0xff]
  %v33 = vld [vmem:[%s4 + $0x10] sm:$0xff]
  %v34 = vld [vmem:[%s4 + $0x18] sm:$0xff]
  %v35 = vld [vmem:[%s4 + $0x20] sm:$0xff]
  %v36 = vld [vmem:[%s4 + $0x28] sm:$0xff]
  %v37 = vld [vmem:[%s4 + $0x30] sm:$0xff]
  %v38 = vld [vmem:[%s4 + $0x38] sm:$0xff]
  %v39 = vld [vmem:[%s5] sm:$0xff]
  %v40 = vld [vmem:[%s1] sm:$0xff]
  %v41 = vld [vmem:[%s1 + $0x8] sm:$0xff]
  %v42 = vld [vmem:[%s1 + $0x10] sm:$0xff]
  %v43 = vld [vmem:[%s1 + $0x18] sm:$0xff]
  %v44 = vld [vmem:[%s1 + $0x20] sm:$0xff]
  %v45 = vld [vmem:[%s1 + $0x28] sm:$0xff]
  %v46 = vld [vmem:[%s1 + $0x30] sm:$0xff]
  %v47 = vld [vmem:[%s1 + $0x38] sm:$0xff]
  %48 = vrot.lane.b32.xlu0 %v40, 1
  %v49 = vpop.permute.xlu0 %48
  %50 = vrot.lane.b32.xlu0 %v42, 1
  %v51 = vpop.permute.xlu0 %50
  %52 = vrot.lane.b32.xlu0 %v44, 1
  %v53 = vpop.permute.xlu0 %52
  %54 = vrot.lane.b32.xlu0 %v46, 1
  %v55 = vpop.permute.xlu0 %54
  %56 = vrot.lane.b32.xlu0 %v41, 1
  %v57 = vpop.permute.xlu0 %56
  %58 = vrot.lane.b32.xlu0 %v43, 1
  %v59 = vpop.permute.xlu0 %58
  %60 = vrot.lane.b32.xlu0 %v45, 1
  %v61 = vpop.permute.xlu0 %60
  %62 = vrot.lane.b32.xlu0 %v47, 1
  %v63 = vpop.permute.xlu0 %62
  %v64 = vlaneseq
  %v65 = vand.u32 %v64, 127
  %vm66 = vcmp.lt.s32.totalorder %v65, 1
  %v67 = vsel %vm66, %v49, %v57
  %v68 = vsel %vm66, %v51, %v59
  %v69 = vsel %vm66, %v53, %v61
  %v70 = vsel %vm66, %v55, %v63
  %v71 = vsel %vm66, %v57, %v49
  %v72 = vsel %vm66, %v59, %v51
  %v73 = vsel %vm66, %v61, %v53
  %v74 = vsel %vm66, %v63, %v55
  %v76 = vlaneseq
  %v77 = vshrl.u32 %v76, 7
  %v78 = vsub.s32 0, %v77
  %v79 = vrot.slane %v39, %v78
  %v80 = vlaneseq
  %v81 = vshrl.u32 %v80, 7
  %v82 = vsub.s32 4, %v81
  %v83 = vrot.slane %v39, %v82
  %v86 = vlaneseq
  %v87 = vshrl.u32 %v86, 7
  %v88 = vsub.s32 0, %v87
  %v89 = vrot.slane %v79, %v88
  %v90 = vlaneseq
  %v91 = vshrl.u32 %v90, 7
  %v92 = vsub.s32 0, %v91
  %v93 = vrot.slane %v83, %v92
  %v94 = vmul.f32 %v71, %v89
  %v95 = vmul.f32 %v67, %v93
  %v96 = vmul.f32 %v72, %v89
  %v97 = vmul.f32 %v68, %v93
  %v98 = vmul.f32 %v73, %v89
  %v99 = vmul.f32 %v69, %v93
  %v100 = vmul.f32 %v74, %v89
  %v101 = vmul.f32 %v70, %v93
  %102 = vrot.lane.b32.xlu0 %v40, 127
  %v103 = vpop.permute.xlu0 %102
  %104 = vrot.lane.b32.xlu0 %v42, 127
  %v105 = vpop.permute.xlu0 %104
  %106 = vrot.lane.b32.xlu0 %v44, 127
  %v107 = vpop.permute.xlu0 %106
  %108 = vrot.lane.b32.xlu0 %v46, 127
  %v109 = vpop.permute.xlu0 %108
  %110 = vrot.lane.b32.xlu0 %v41, 127
  %v111 = vpop.permute.xlu0 %110
  %112 = vrot.lane.b32.xlu0 %v43, 127
  %v113 = vpop.permute.xlu0 %112
  %114 = vrot.lane.b32.xlu0 %v45, 127
  %v115 = vpop.permute.xlu0 %114
  %116 = vrot.lane.b32.xlu0 %v47, 127
  %v117 = vpop.permute.xlu0 %116
  %vm118 = vcmp.lt.s32.totalorder %v65, 127
  %v119 = vsel %vm118, %v103, %v111
  %v120 = vsel %vm118, %v105, %v113
  %v121 = vsel %vm118, %v107, %v115
  %v122 = vsel %vm118, %v109, %v117
  %v123 = vsel %vm118, %v111, %v103
  %v124 = vsel %vm118, %v113, %v105
  %v125 = vsel %vm118, %v115, %v107
  %v126 = vsel %vm118, %v117, %v109
  %v127 = vlaneseq
  %v128 = vshrl.u32 %v127, 7
  %v129 = vsub.s32 1, %v128
  %v130 = vrot.slane %v39, %v129
  %v131 = vlaneseq
  %v132 = vshrl.u32 %v131, 7
  %v133 = vsub.s32 5, %v132
  %v134 = vrot.slane %v39, %v133
  %v137 = vlaneseq
  %v138 = vshrl.u32 %v137, 7
  %v139 = vsub.s32 1, %v138
  %v140 = vrot.slane %v130, %v139
  %v141 = vlaneseq
  %v142 = vshrl.u32 %v141, 7
  %v143 = vsub.s32 1, %v142
  %v144 = vrot.slane %v134, %v143
  %v145 = vmul.f32 %v119, %v140
  %v146 = vmul.f32 %v123, %v144
  %v147 = vmul.f32 %v120, %v140
  %v148 = vmul.f32 %v124, %v144
  %v149 = vmul.f32 %v121, %v140
  %v150 = vmul.f32 %v125, %v144
  %v151 = vmul.f32 %v122, %v140
  %v152 = vmul.f32 %v126, %v144
  %154 = vset.pattern.permute.xlu0 18
  %155 = vperm.xlu0 %154, %v23
  %v156 = vpop.permute.xlu0 %155
  %159 = vset.pattern.permute.xlu0 18
  %160 = vperm.xlu0 %159, %v24
  %v161 = vpop.permute.xlu0 %160
  %164 = vset.pattern.permute.xlu0 18
  %165 = vperm.xlu0 %164, %v25
  %v166 = vpop.permute.xlu0 %165
  %169 = vset.pattern.permute.xlu0 18
  %170 = vperm.xlu0 %169, %v26
  %v171 = vpop.permute.xlu0 %170
  %v173 = vmul.f32 %v156, %v94
  %v174 = vmul.f32 %v156, %v95
  %v175 = vmul.f32 %v161, %v96
  %v176 = vmul.f32 %v161, %v97
  %v177 = vmul.f32 %v166, %v98
  %v178 = vmul.f32 %v166, %v99
  %v179 = vmul.f32 %v171, %v100
  %v180 = vmul.f32 %v171, %v101
  %181 = vset.pattern.permute.xlu0 19
  %182 = vperm.xlu0 %181, %v23
  %v183 = vpop.permute.xlu0 %182
  %185 = vset.pattern.permute.xlu0 19
  %186 = vperm.xlu0 %185, %v24
  %v187 = vpop.permute.xlu0 %186
  %189 = vset.pattern.permute.xlu0 19
  %190 = vperm.xlu0 %189, %v25
  %v191 = vpop.permute.xlu0 %190
  %193 = vset.pattern.permute.xlu0 19
  %194 = vperm.xlu0 %193, %v26
  %v195 = vpop.permute.xlu0 %194
  %v197 = vmul.f32 %v183, %v40
  %v198 = vmul.f32 %v183, %v41
  %v199 = vmul.f32 %v187, %v42
  %v200 = vmul.f32 %v187, %v43
  %v201 = vmul.f32 %v191, %v44
  %v202 = vmul.f32 %v191, %v45
  %v203 = vmul.f32 %v195, %v46
  %v204 = vmul.f32 %v195, %v47
  %v205 = vadd.f32 %v173, %v197
  %v206 = vadd.f32 %v174, %v198
  %v207 = vadd.f32 %v175, %v199
  %v208 = vadd.f32 %v176, %v200
  %v209 = vadd.f32 %v177, %v201
  %v210 = vadd.f32 %v178, %v202
  %v211 = vadd.f32 %v179, %v203
  %v212 = vadd.f32 %v180, %v204
  %213 = vset.pattern.permute.xlu0 20
  %214 = vperm.xlu0 %213, %v23
  %v215 = vpop.permute.xlu0 %214
  %217 = vset.pattern.permute.xlu0 20
  %218 = vperm.xlu0 %217, %v24
  %v219 = vpop.permute.xlu0 %218
  %221 = vset.pattern.permute.xlu0 20
  %222 = vperm.xlu0 %221, %v25
  %v223 = vpop.permute.xlu0 %222
  %225 = vset.pattern.permute.xlu0 20
  %226 = vperm.xlu0 %225, %v26
  %v227 = vpop.permute.xlu0 %226
  %v229 = vmul.f32 %v215, %v145
  %v230 = vmul.f32 %v215, %v146
  %v231 = vmul.f32 %v219, %v147
  %v232 = vmul.f32 %v219, %v148
  %v233 = vmul.f32 %v223, %v149
  %v234 = vmul.f32 %v223, %v150
  %v235 = vmul.f32 %v227, %v151
  %v236 = vmul.f32 %v227, %v152
  %v237 = vadd.f32 %v205, %v229
  %v238 = vadd.f32 %v206, %v230
  %v239 = vadd.f32 %v207, %v231
  %v240 = vadd.f32 %v208, %v232
  %v241 = vadd.f32 %v209, %v233
  %v242 = vadd.f32 %v210, %v234
  %v243 = vadd.f32 %v211, %v235
  %v244 = vadd.f32 %v212, %v236
  %245 = vset.pattern.permute.xlu0 15
  %246 = vperm.xlu0 %245, %v23
  %v247 = vpop.permute.xlu0 %246
  %249 = vset.pattern.permute.xlu0 15
  %250 = vperm.xlu0 %249, %v24
  %v251 = vpop.permute.xlu0 %250
  %253 = vset.pattern.permute.xlu0 15
  %254 = vperm.xlu0 %253, %v25
  %v255 = vpop.permute.xlu0 %254
  %257 = vset.pattern.permute.xlu0 15
  %258 = vperm.xlu0 %257, %v26
  %v259 = vpop.permute.xlu0 %258
  %v261 = vmul.f32 %v247, %v94
  %v262 = vmul.f32 %v247, %v95
  %v263 = vmul.f32 %v251, %v96
  %v264 = vmul.f32 %v251, %v97
  %v265 = vmul.f32 %v255, %v98
  %v266 = vmul.f32 %v255, %v99
  %v267 = vmul.f32 %v259, %v100
  %v268 = vmul.f32 %v259, %v101
  %269 = vset.pattern.permute.xlu0 16
  %270 = vperm.xlu0 %269, %v23
  %v271 = vpop.permute.xlu0 %270
  %273 = vset.pattern.permute.xlu0 16
  %274 = vperm.xlu0 %273, %v24
  %v275 = vpop.permute.xlu0 %274
  %277 = vset.pattern.permute.xlu0 16
  %278 = vperm.xlu0 %277, %v25
  %v279 = vpop.permute.xlu0 %278
  %281 = vset.pattern.permute.xlu0 16
  %282 = vperm.xlu0 %281, %v26
  %v283 = vpop.permute.xlu0 %282
  %v285 = vmul.f32 %v271, %v40
  %v286 = vmul.f32 %v271, %v41
  %v287 = vmul.f32 %v275, %v42
  %v288 = vmul.f32 %v275, %v43
  %v289 = vmul.f32 %v279, %v44
  %v290 = vmul.f32 %v279, %v45
  %v291 = vmul.f32 %v283, %v46
  %v292 = vmul.f32 %v283, %v47
  %v293 = vadd.f32 %v261, %v285
  %v294 = vadd.f32 %v262, %v286
  %v295 = vadd.f32 %v263, %v287
  %v296 = vadd.f32 %v264, %v288
  %v297 = vadd.f32 %v265, %v289
  %v298 = vadd.f32 %v266, %v290
  %v299 = vadd.f32 %v267, %v291
  %v300 = vadd.f32 %v268, %v292
  %301 = vset.pattern.permute.xlu0 17
  %302 = vperm.xlu0 %301, %v23
  %v303 = vpop.permute.xlu0 %302
  %305 = vset.pattern.permute.xlu0 17
  %306 = vperm.xlu0 %305, %v24
  %v307 = vpop.permute.xlu0 %306
  %309 = vset.pattern.permute.xlu0 17
  %310 = vperm.xlu0 %309, %v25
  %v311 = vpop.permute.xlu0 %310
  %313 = vset.pattern.permute.xlu0 17
  %314 = vperm.xlu0 %313, %v26
  %v315 = vpop.permute.xlu0 %314
  %v317 = vmul.f32 %v303, %v145
  %v318 = vmul.f32 %v303, %v146
  %v319 = vmul.f32 %v307, %v147
  %v320 = vmul.f32 %v307, %v148
  %v321 = vmul.f32 %v311, %v149
  %v322 = vmul.f32 %v311, %v150
  %v323 = vmul.f32 %v315, %v151
  %v324 = vmul.f32 %v315, %v152
  %v325 = vadd.f32 %v293, %v317
  %v326 = vadd.f32 %v294, %v318
  %v327 = vadd.f32 %v295, %v319
  %v328 = vadd.f32 %v296, %v320
  %v329 = vadd.f32 %v297, %v321
  %v330 = vadd.f32 %v298, %v322
  %v331 = vadd.f32 %v299, %v323
  %v332 = vadd.f32 %v300, %v324
  %333 = vrot.lane.b32.xlu0 %v325, 16
  %v334 = vpop.permute.xlu0 %333
  %335 = vrot.lane.b32.xlu0 %v327, 16
  %v336 = vpop.permute.xlu0 %335
  %337 = vrot.lane.b32.xlu0 %v329, 16
  %v338 = vpop.permute.xlu0 %337
  %339 = vrot.lane.b32.xlu0 %v331, 16
  %v340 = vpop.permute.xlu0 %339
  %341 = vrot.lane.b32.xlu0 %v326, 16
  %v342 = vpop.permute.xlu0 %341
  %343 = vrot.lane.b32.xlu0 %v328, 16
  %v344 = vpop.permute.xlu0 %343
  %345 = vrot.lane.b32.xlu0 %v330, 16
  %v346 = vpop.permute.xlu0 %345
  %347 = vrot.lane.b32.xlu0 %v332, 16
  %v348 = vpop.permute.xlu0 %347
  %vm349 = vcmp.lt.s32.totalorder %v65, 16
  %v350 = vsel %vm349, %v334, %v342
  %v351 = vsel %vm349, %v336, %v344
  %v352 = vsel %vm349, %v338, %v346
  %v353 = vsel %vm349, %v340, %v348
  %v354 = vsel %vm349, %v342, %v334
  %v355 = vsel %vm349, %v344, %v336
  %v356 = vsel %vm349, %v346, %v338
  %v357 = vsel %vm349, %v348, %v340
  %v358 = vlaneseq
  %v359 = vshrl.u32 %v358, 7
  %v360 = vsub.s32 2, %v359
  %v361 = vrot.slane %v39, %v360
  %v362 = vlaneseq
  %v363 = vshrl.u32 %v362, 7
  %v364 = vsub.s32 6, %v363
  %v365 = vrot.slane %v39, %v364
  %v368 = vlaneseq
  %v369 = vshrl.u32 %v368, 7
  %v370 = vsub.s32 2, %v369
  %v371 = vrot.slane %v361, %v370
  %v372 = vlaneseq
  %v373 = vshrl.u32 %v372, 7
  %v374 = vsub.s32 2, %v373
  %v375 = vrot.slane %v365, %v374
  %v376 = vmul.f32 %v371, %v354
  %v377 = vmul.f32 %v375, %v350
  %v378 = vmul.f32 %v371, %v355
  %v379 = vmul.f32 %v375, %v351
  %v380 = vmul.f32 %v371, %v356
  %v381 = vmul.f32 %v375, %v352
  %v382 = vmul.f32 %v371, %v357
  %v383 = vmul.f32 %v375, %v353
  %v384 = vadd.f32 %v237, %v376
  %v385 = vadd.f32 %v238, %v377
  %v386 = vadd.f32 %v239, %v378
  %v387 = vadd.f32 %v240, %v379
  %v388 = vadd.f32 %v241, %v380
  %v389 = vadd.f32 %v242, %v381
  %v390 = vadd.f32 %v243, %v382
  %v391 = vadd.f32 %v244, %v383
  %392 = vset.pattern.permute.xlu0 21
  %393 = vperm.xlu0 %392, %v23
  %v394 = vpop.permute.xlu0 %393
  %396 = vset.pattern.permute.xlu0 21
  %397 = vperm.xlu0 %396, %v24
  %v398 = vpop.permute.xlu0 %397
  %400 = vset.pattern.permute.xlu0 21
  %401 = vperm.xlu0 %400, %v25
  %v402 = vpop.permute.xlu0 %401
  %404 = vset.pattern.permute.xlu0 21
  %405 = vperm.xlu0 %404, %v26
  %v406 = vpop.permute.xlu0 %405
  %v408 = vmul.f32 %v394, %v94
  %v409 = vmul.f32 %v394, %v95
  %v410 = vmul.f32 %v398, %v96
  %v411 = vmul.f32 %v398, %v97
  %v412 = vmul.f32 %v402, %v98
  %v413 = vmul.f32 %v402, %v99
  %v414 = vmul.f32 %v406, %v100
  %v415 = vmul.f32 %v406, %v101
  %416 = vset.pattern.permute.xlu0 22
  %417 = vperm.xlu0 %416, %v23
  %v418 = vpop.permute.xlu0 %417
  %420 = vset.pattern.permute.xlu0 22
  %421 = vperm.xlu0 %420, %v24
  %v422 = vpop.permute.xlu0 %421
  %424 = vset.pattern.permute.xlu0 22
  %425 = vperm.xlu0 %424, %v25
  %v426 = vpop.permute.xlu0 %425
  %428 = vset.pattern.permute.xlu0 22
  %429 = vperm.xlu0 %428, %v26
  %v430 = vpop.permute.xlu0 %429
  %v432 = vmul.f32 %v418, %v40
  %v433 = vmul.f32 %v418, %v41
  %v434 = vmul.f32 %v422, %v42
  %v435 = vmul.f32 %v422, %v43
  %v436 = vmul.f32 %v426, %v44
  %v437 = vmul.f32 %v426, %v45
  %v438 = vmul.f32 %v430, %v46
  %v439 = vmul.f32 %v430, %v47
  %v440 = vadd.f32 %v408, %v432
  %v441 = vadd.f32 %v409, %v433
  %v442 = vadd.f32 %v410, %v434
  %v443 = vadd.f32 %v411, %v435
  %v444 = vadd.f32 %v412, %v436
  %v445 = vadd.f32 %v413, %v437
  %v446 = vadd.f32 %v414, %v438
  %v447 = vadd.f32 %v415, %v439
  %448 = vset.pattern.permute.xlu0 23
  %449 = vperm.xlu0 %448, %v23
  %v450 = vpop.permute.xlu0 %449
  %452 = vset.pattern.permute.xlu0 23
  %453 = vperm.xlu0 %452, %v24
  %v454 = vpop.permute.xlu0 %453
  %456 = vset.pattern.permute.xlu0 23
  %457 = vperm.xlu0 %456, %v25
  %v458 = vpop.permute.xlu0 %457
  %460 = vset.pattern.permute.xlu0 23
  %461 = vperm.xlu0 %460, %v26
  %v462 = vpop.permute.xlu0 %461
  %v464 = vmul.f32 %v450, %v145
  %v465 = vmul.f32 %v450, %v146
  %v466 = vmul.f32 %v454, %v147
  %v467 = vmul.f32 %v454, %v148
  %v468 = vmul.f32 %v458, %v149
  %v469 = vmul.f32 %v458, %v150
  %v470 = vmul.f32 %v462, %v151
  %v471 = vmul.f32 %v462, %v152
  %v472 = vadd.f32 %v440, %v464
  %v473 = vadd.f32 %v441, %v465
  %v474 = vadd.f32 %v442, %v466
  %v475 = vadd.f32 %v443, %v467
  %v476 = vadd.f32 %v444, %v468
  %v477 = vadd.f32 %v445, %v469
  %v478 = vadd.f32 %v446, %v470
  %v479 = vadd.f32 %v447, %v471
  %480 = vrot.lane.b32.xlu0 %v472, 112
  %v481 = vpop.permute.xlu0 %480
  %482 = vrot.lane.b32.xlu0 %v474, 112
  %v483 = vpop.permute.xlu0 %482
  %484 = vrot.lane.b32.xlu0 %v476, 112
  %v485 = vpop.permute.xlu0 %484
  %486 = vrot.lane.b32.xlu0 %v478, 112
  %v487 = vpop.permute.xlu0 %486
  %488 = vrot.lane.b32.xlu0 %v473, 112
  %v489 = vpop.permute.xlu0 %488
  %490 = vrot.lane.b32.xlu0 %v475, 112
  %v491 = vpop.permute.xlu0 %490
  %492 = vrot.lane.b32.xlu0 %v477, 112
  %v493 = vpop.permute.xlu0 %492
  %494 = vrot.lane.b32.xlu0 %v479, 112
  %v495 = vpop.permute.xlu0 %494
  %vm496 = vcmp.lt.s32.totalorder %v65, 112
  %v497 = vsel %vm496, %v481, %v489
  %v498 = vsel %vm496, %v483, %v491
  %v499 = vsel %vm496, %v485, %v493
  %v500 = vsel %vm496, %v487, %v495
  %v501 = vsel %vm496, %v489, %v481
  %v502 = vsel %vm496, %v491, %v483
  %v503 = vsel %vm496, %v493, %v485
  %v504 = vsel %vm496, %v495, %v487
  %v505 = vlaneseq
  %v506 = vshrl.u32 %v505, 7
  %v507 = vsub.s32 3, %v506
  %v508 = vrot.slane %v39, %v507
  %v509 = vlaneseq
  %v510 = vshrl.u32 %v509, 7
  %v511 = vsub.s32 7, %v510
  %v512 = vrot.slane %v39, %v511
  %v515 = vlaneseq
  %v516 = vshrl.u32 %v515, 7
  %v517 = vsub.s32 3, %v516
  %v518 = vrot.slane %v508, %v517
  %v519 = vlaneseq
  %v520 = vshrl.u32 %v519, 7
  %v521 = vsub.s32 3, %v520
  %v522 = vrot.slane %v512, %v521
  %v523 = vmul.f32 %v518, %v497
  %v524 = vmul.f32 %v522, %v501
  %v525 = vmul.f32 %v518, %v498
  %v526 = vmul.f32 %v522, %v502
  %v527 = vmul.f32 %v518, %v499
  %v528 = vmul.f32 %v522, %v503
  %v529 = vmul.f32 %v518, %v500
  %v530 = vmul.f32 %v522, %v504
  %v531 = vadd.f32 %v384, %v523
  %v532 = vadd.f32 %v385, %v524
  %v533 = vadd.f32 %v386, %v525
  %v534 = vadd.f32 %v387, %v526
  %v535 = vadd.f32 %v388, %v527
  %v536 = vadd.f32 %v389, %v528
  %v537 = vadd.f32 %v390, %v529
  %v538 = vadd.f32 %v391, %v530
  %539 = vset.pattern.permute.xlu0 14
  %540 = vperm.xlu0 %539, %v23
  %v541 = vpop.permute.xlu0 %540
  %543 = vset.pattern.permute.xlu0 14
  %544 = vperm.xlu0 %543, %v24
  %v545 = vpop.permute.xlu0 %544
  %547 = vset.pattern.permute.xlu0 14
  %548 = vperm.xlu0 %547, %v25
  %v549 = vpop.permute.xlu0 %548
  %551 = vset.pattern.permute.xlu0 14
  %552 = vperm.xlu0 %551, %v26
  %v553 = vpop.permute.xlu0 %552
  %v555 = vadd.f32 %v531, %v541
  %v556 = vadd.f32 %v532, %v541
  %v557 = vadd.f32 %v533, %v545
  %v558 = vadd.f32 %v534, %v545
  %v559 = vadd.f32 %v535, %v549
  %v560 = vadd.f32 %v536, %v549
  %v561 = vadd.f32 %v537, %v553
  %v562 = vadd.f32 %v538, %v553
  %v563 = vmul.f32 %v555, 0.5
  %v564 = vmul.f32 %v556, 0.5
  %v565 = vmul.f32 %v557, 0.5
  %v566 = vmul.f32 %v558, 0.5
  %v567 = vmul.f32 %v559, 0.5
  %v568 = vmul.f32 %v560, 0.5
  %v569 = vmul.f32 %v561, 0.5
  %v570 = vmul.f32 %v562, 0.5
  %v571 = vmul.f32 %v555, 0.70710677
  %v572 = vmul.f32 %v556, 0.70710677
  %v573 = vmul.f32 %v557, 0.70710677
  %v574 = vmul.f32 %v558, 0.70710677
  %v575 = vmul.f32 %v559, 0.70710677
  %v576 = vmul.f32 %v560, 0.70710677
  %v577 = vmul.f32 %v561, 0.70710677
  %v578 = vmul.f32 %v562, 0.70710677
  %v579 = vand.u32 2147483647, %v571
  %v580 = vand.u32 2147483647, %v572
  %v581 = vand.u32 2147483647, %v573
  %v582 = vand.u32 2147483647, %v574
  %v583 = vand.u32 2147483647, %v575
  %v584 = vand.u32 2147483647, %v576
  %v585 = vand.u32 2147483647, %v577
  %v586 = vand.u32 2147483647, %v578
  %v587 = vmul.f32 %v579, 0.3275911
  %v588 = vmul.f32 %v580, 0.3275911
  %v589 = vmul.f32 %v581, 0.3275911
  %v590 = vmul.f32 %v582, 0.3275911
  %v591 = vmul.f32 %v583, 0.3275911
  %v592 = vmul.f32 %v584, 0.3275911
  %v593 = vmul.f32 %v585, 0.3275911
  %v594 = vmul.f32 %v586, 0.3275911
  %v595 = vadd.f32 %v587, 1.0
  %v596 = vadd.f32 %v588, 1.0
  %v597 = vadd.f32 %v589, 1.0
  %v598 = vadd.f32 %v590, 1.0
  %v599 = vadd.f32 %v591, 1.0
  %v600 = vadd.f32 %v592, 1.0
  %v601 = vadd.f32 %v593, 1.0
  %v602 = vadd.f32 %v594, 1.0
  %v603 = vrcp.pop %v595
  %v604 = vmul.f32 1.0, %v603
  %v605 = vrcp.pop %v596
  %v606 = vmul.f32 1.0, %v605
  %v607 = vrcp.pop %v597
  %v608 = vmul.f32 1.0, %v607
  %v609 = vrcp.pop %v598
  %v610 = vmul.f32 1.0, %v609
  %v611 = vrcp.pop %v599
  %v612 = vmul.f32 1.0, %v611
  %v613 = vrcp.pop %v600
  %v614 = vmul.f32 1.0, %v613
  %v615 = vrcp.pop %v601
  %v616 = vmul.f32 1.0, %v615
  %v617 = vrcp.pop %v602
  %v618 = vmul.f32 1.0, %v617
  %v619 = vmul.f32 %v604, 1.0614054
  %v620 = vmul.f32 %v606, 1.0614054
  %v621 = vmul.f32 %v608, 1.0614054
  %v622 = vmul.f32 %v610, 1.0614054
  %v623 = vmul.f32 %v612, 1.0614054
  %v624 = vmul.f32 %v614, 1.0614054
  %v625 = vmul.f32 %v616, 1.0614054
  %v626 = vmul.f32 %v618, 1.0614054
  %v627 = vsub.f32 %v619, 1.4531521
  %v628 = vsub.f32 %v620, 1.4531521
  %v629 = vsub.f32 %v621, 1.4531521
  %v630 = vsub.f32 %v622, 1.4531521
  %v631 = vsub.f32 %v623, 1.4531521
  %v632 = vsub.f32 %v624, 1.4531521
  %v633 = vsub.f32 %v625, 1.4531521
  %v634 = vsub.f32 %v626, 1.4531521
  %v635 = vmul.f32 %v627, %v604
  %v636 = vmul.f32 %v628, %v606
  %v637 = vmul.f32 %v629, %v608
  %v638 = vmul.f32 %v630, %v610
  %v639 = vmul.f32 %v631, %v612
  %v640 = vmul.f32 %v632, %v614
  %v641 = vmul.f32 %v633, %v616
  %v642 = vmul.f32 %v634, %v618
  %v643 = vadd.f32 %v635, 1.4214138
  %v644 = vadd.f32 %v636, 1.4214138
  %v645 = vadd.f32 %v637, 1.4214138
  %v646 = vadd.f32 %v638, 1.4214138
  %v647 = vadd.f32 %v639, 1.4214138
  %v648 = vadd.f32 %v640, 1.4214138
  %v649 = vadd.f32 %v641, 1.4214138
  %v650 = vadd.f32 %v642, 1.4214138
  %v651 = vmul.f32 %v643, %v604
  %v652 = vmul.f32 %v644, %v606
  %v653 = vmul.f32 %v645, %v608
  %v654 = vmul.f32 %v646, %v610
  %v655 = vmul.f32 %v647, %v612
  %v656 = vmul.f32 %v648, %v614
  %v657 = vmul.f32 %v649, %v616
  %v658 = vmul.f32 %v650, %v618
  %v659 = vsub.f32 %v651, 0.28449672
  %v660 = vsub.f32 %v652, 0.28449672
  %v661 = vsub.f32 %v653, 0.28449672
  %v662 = vsub.f32 %v654, 0.28449672
  %v663 = vsub.f32 %v655, 0.28449672
  %v664 = vsub.f32 %v656, 0.28449672
  %v665 = vsub.f32 %v657, 0.28449672
  %v666 = vsub.f32 %v658, 0.28449672
  %v667 = vmul.f32 %v659, %v604
  %v668 = vmul.f32 %v660, %v606
  %v669 = vmul.f32 %v661, %v608
  %v670 = vmul.f32 %v662, %v610
  %v671 = vmul.f32 %v663, %v612
  %v672 = vmul.f32 %v664, %v614
  %v673 = vmul.f32 %v665, %v616
  %v674 = vmul.f32 %v666, %v618
  %v675 = vadd.f32 %v667, 0.2548296
  %v676 = vadd.f32 %v668, 0.2548296
  %v677 = vadd.f32 %v669, 0.2548296
  %v678 = vadd.f32 %v670, 0.2548296
  %v679 = vadd.f32 %v671, 0.2548296
  %v680 = vadd.f32 %v672, 0.2548296
  %v681 = vadd.f32 %v673, 0.2548296
  %v682 = vadd.f32 %v674, 0.2548296
  %v683 = vmul.f32 %v675, %v604
  %v684 = vmul.f32 %v676, %v606
  %v685 = vmul.f32 %v677, %v608
  %v686 = vmul.f32 %v678, %v610
  %v687 = vmul.f32 %v679, %v612
  %v688 = vmul.f32 %v680, %v614
  %v689 = vmul.f32 %v681, %v616
  %v690 = vmul.f32 %v682, %v618
  %v691 = vsub.f32 0.0, %v579
  %v692 = vsub.f32 0.0, %v580
  %v693 = vsub.f32 0.0, %v581
  %v694 = vsub.f32 0.0, %v582
  %v695 = vsub.f32 0.0, %v583
  %v696 = vsub.f32 0.0, %v584
  %v697 = vsub.f32 0.0, %v585
  %v698 = vsub.f32 0.0, %v586
  %v699 = vmul.f32 %v691, %v579
  %v700 = vmul.f32 %v692, %v580
  %v701 = vmul.f32 %v693, %v581
  %v702 = vmul.f32 %v694, %v582
  %v703 = vmul.f32 %v695, %v583
  %v704 = vmul.f32 %v696, %v584
  %v705 = vmul.f32 %v697, %v585
  %v706 = vmul.f32 %v698, %v586
  %v707 = vmul.f32 %v699, 1.442695
  %v708 = vpow.pop %v707
  %v709 = vmul.f32 %v700, 1.442695
  %v710 = vpow.pop %v709
  %v711 = vmul.f32 %v701, 1.442695
  %v712 = vpow.pop %v711
  %v713 = vmul.f32 %v702, 1.442695
  %v714 = vpow.pop %v713
  %v715 = vmul.f32 %v703, 1.442695
  %v716 = vpow.pop %v715
  %v717 = vmul.f32 %v704, 1.442695
  %v718 = vpow.pop %v717
  %v719 = vmul.f32 %v705, 1.442695
  %v720 = vpow.pop %v719
  %v721 = vmul.f32 %v706, 1.442695
  %v722 = vpow.pop %v721
  %v723 = vmul.f32 %v683, %v708
  %v724 = vmul.f32 %v684, %v710
  %v725 = vmul.f32 %v685, %v712
  %v726 = vmul.f32 %v686, %v714
  %v727 = vmul.f32 %v687, %v716
  %v728 = vmul.f32 %v688, %v718
  %v729 = vmul.f32 %v689, %v720
  %v730 = vmul.f32 %v690, %v722
  %v731 = vsub.f32 1.0, %v723
  %v732 = vsub.f32 1.0, %v724
  %v733 = vsub.f32 1.0, %v725
  %v734 = vsub.f32 1.0, %v726
  %v735 = vsub.f32 1.0, %v727
  %v736 = vsub.f32 1.0, %v728
  %v737 = vsub.f32 1.0, %v729
  %v738 = vsub.f32 1.0, %v730
  %vm739 = vcmp.ge.f32.partialorder %v571, 0.0
  %vm740 = vcmp.ge.f32.partialorder %v572, 0.0
  %vm741 = vcmp.ge.f32.partialorder %v573, 0.0
  %vm742 = vcmp.ge.f32.partialorder %v574, 0.0
  %vm743 = vcmp.ge.f32.partialorder %v575, 0.0
  %vm744 = vcmp.ge.f32.partialorder %v576, 0.0
  %vm745 = vcmp.ge.f32.partialorder %v577, 0.0
  %vm746 = vcmp.ge.f32.partialorder %v578, 0.0
  %v747 = vsub.f32 0.0, %v731
  %v748 = vsub.f32 0.0, %v732
  %v749 = vsub.f32 0.0, %v733
  %v750 = vsub.f32 0.0, %v734
  %v751 = vsub.f32 0.0, %v735
  %v752 = vsub.f32 0.0, %v736
  %v753 = vsub.f32 0.0, %v737
  %v754 = vsub.f32 0.0, %v738
  %v755 = vsel %vm739, %v731, %v747
  %v756 = vsel %vm740, %v732, %v748
  %v757 = vsel %vm741, %v733, %v749
  %v758 = vsel %vm742, %v734, %v750
  %v759 = vsel %vm743, %v735, %v751
  %v760 = vsel %vm744, %v736, %v752
  %v761 = vsel %vm745, %v737, %v753
  %v762 = vsel %vm746, %v738, %v754
  %v763 = vadd.f32 %v755, 1.0
  %v764 = vadd.f32 %v756, 1.0
  %v765 = vadd.f32 %v757, 1.0
  %v766 = vadd.f32 %v758, 1.0
  %v767 = vadd.f32 %v759, 1.0
  %v768 = vadd.f32 %v760, 1.0
  %v769 = vadd.f32 %v761, 1.0
  %v770 = vadd.f32 %v762, 1.0
  %v771 = vmul.f32 %v563, %v763
  %v772 = vmul.f32 %v564, %v764
  %v773 = vmul.f32 %v565, %v765
  %v774 = vmul.f32 %v566, %v766
  %v775 = vmul.f32 %v567, %v767
  %v776 = vmul.f32 %v568, %v768
  %v777 = vmul.f32 %v569, %v769
  %v778 = vmul.f32 %v570, %v770
  %780 = vset.pattern.permute.xlu0 32
  %781 = vperm.xlu0 %780, %v27
  %v782 = vpop.permute.xlu0 %781
  %785 = vset.pattern.permute.xlu0 32
  %786 = vperm.xlu0 %785, %v28
  %v787 = vpop.permute.xlu0 %786
  %790 = vset.pattern.permute.xlu0 32
  %791 = vperm.xlu0 %790, %v29
  %v792 = vpop.permute.xlu0 %791
  %795 = vset.pattern.permute.xlu0 32
  %796 = vperm.xlu0 %795, %v30
  %v797 = vpop.permute.xlu0 %796
  %vm799 = vcmask 261120
  %v800 = vsel %vm799, %v27, 0
  %v802 = vsel %vm799, %v28, 0
  %v804 = vsel %vm799, %v29, 0
  %v806 = vsel %vm799, %v30, 0
  %808 = vmatprep.subr.mxu0 %v772
  %809 = vmatpush1.msra.mxu0 %v771
  %810 = vmatprep.subr.mxu0 %v774
  %811 = vmatpush1.msra.mxu0 %v773
  %812 = vmatprep.subr.mxu0 %v776
  %813 = vmatpush1.msra.mxu0 %v775
  %814 = vmatprep.subr.mxu0 %v778
  %815 = vmatpush1.msra.mxu0 %v777
  %816 = vmatprep.subr.mxu0 0.0
  %817 = vmatpush1.msra.mxu0 0.0
  %818 = vmatprep.subr.mxu0 0.0
  %819 = vmatpush1.msra.mxu0 0.0
  %820 = vmatprep.subr.mxu0 0.0
  %821 = vmatpush1.msra.mxu0 0.0
  %822 = vmatprep.subr.mxu0 0.0
  %823 = vmatpush1.msra.mxu0 0.0
  %824 = vmatprep.subr.mxu0 0.0
  %825 = vmatpush1.msra.mxu0 0.0
  %826 = vmatprep.subr.mxu0 0.0
  %827 = vmatpush1.msra.mxu0 0.0
  %828 = vmatprep.subr.mxu0 0.0
  %829 = vmatpush1.msra.mxu0 0.0
  %830 = vmatprep.subr.mxu0 0.0
  %831 = vmatpush1.msra.mxu0 0.0
  %832 = vmatprep.subr.mxu0 0.0
  %833 = vmatpush1.msra.mxu0 0.0
  %834 = vmatprep.subr.mxu0 0.0
  %835 = vmatpush1.msra.mxu0 0.0
  %836 = vmatprep.subr.mxu0 0.0
  %837 = vmatpush1.msra.mxu0 0.0
  %838 = vmatprep.subr.mxu0 0.0
  %839 = vmatpush1.msra.mxu0 0.0
  %840 = vmatprep.subr.mxu0 0.0
  %841 = vmatpush1.msra.mxu0 0.0
  %842 = vmatprep.subr.mxu0 0.0
  %843 = vmatpush1.msra.mxu0 0.0
  %844 = vmatprep.subr.mxu0 0.0
  %845 = vmatpush1.msra.mxu0 0.0
  %846 = vmatprep.subr.mxu0 0.0
  %847 = vmatpush1.msra.mxu0 0.0
  %848 = vmatprep.subr.mxu0 0.0
  %849 = vmatpush1.msra.mxu0 0.0
  %850 = vmatprep.subr.mxu0 0.0
  %851 = vmatpush1.msra.mxu0 0.0
  %852 = vmatprep.subr.mxu0 0.0
  %853 = vmatpush1.msra.mxu0 0.0
  %854 = vmatprep.subr.mxu0 0.0
  %855 = vmatpush1.msra.mxu0 0.0
  %856 = vmatprep.subr.mxu0 0.0
  %857 = vmatpush1.msra.mxu0 0.0
  %858 = vmatprep.subr.mxu0 0.0
  %859 = vmatpush1.msra.mxu0 0.0
  %860 = vmatprep.subr.mxu0 0.0
  %861 = vmatpush1.msra.mxu0 0.0
  %862 = vmatprep.subr.mxu0 0.0
  %863 = vmatpush1.msra.mxu0 0.0
  %864 = vmatprep.subr.mxu0 0.0
  %865 = vmatpush1.msra.mxu0 0.0
  %866 = vmatprep.subr.mxu0 0.0
  %867 = vmatpush1.msra.mxu0 0.0
  %868 = vmatprep.subr.mxu0 0.0
  %869 = vmatpush1.msra.mxu0 0.0
  %870 = vmatprep.subr.mxu0 0.0
  %871 = vmatpush1.msra.mxu0 0.0
  %872 = vmatprep.mubr.f32.mxu0 0.0
  %873 = vmatmul.mubr.f32.gmra.mrb[0].mxu0 %v800
  %v874 = vpop.f32.mrb[0].mxu0
  %v875 = vadd.f32 %v782, %v874
  %v876 = vpop.f32.mrb[0].mxu0
  %v877 = vadd.f32 %v782, %v876
  %878 = vmatprep.mubr.f32.mxu0 0.0
  %879 = vmatmul.mubr.f32.gmra.mrb[0].mxu0 %v802
  %v880 = vpop.f32.mrb[0].mxu0
  %v881 = vadd.f32 %v787, %v880
  %v882 = vpop.f32.mrb[0].mxu0
  %v883 = vadd.f32 %v787, %v882
  %884 = vmatprep.mubr.f32.mxu0 0.0
  %885 = vmatmul.mubr.f32.gmra.mrb[0].mxu0 %v804
  %v886 = vpop.f32.mrb[0].mxu0
  %v887 = vadd.f32 %v792, %v886
  %v888 = vpop.f32.mrb[0].mxu0
  %v889 = vadd.f32 %v792, %v888
  %890 = vmatprep.mubr.f32.mxu0 0.0
  %891 = vmatmul.mubr.f32.gmra.mrb[0].mxu0 %v806
  %v892 = vpop.f32.mrb[0].mxu0
  %v893 = vadd.f32 %v797, %v892
  %v894 = vpop.f32.mrb[0].mxu0
  %v895 = vadd.f32 %v797, %v894
  %896 = vdwg.mxu0
  %v897 = vld [vmem:[%s0] sm:$0xff]
  %v898 = vld [vmem:[%s0 + $0x8] sm:$0xff]
  %v899 = vld [vmem:[%s0 + $0x10] sm:$0xff]
  %v900 = vld [vmem:[%s0 + $0x18] sm:$0xff]
  %v901 = vld [vmem:[%s0 + $0x20] sm:$0xff]
  %v902 = vld [vmem:[%s0 + $0x28] sm:$0xff]
  %v903 = vld [vmem:[%s0 + $0x30] sm:$0xff]
  %v904 = vld [vmem:[%s0 + $0x38] sm:$0xff]
  %v905 = vadd.f32 %v897, %v899
  %v906 = vadd.f32 %v905, %v901
  %v907 = vadd.f32 %v906, %v903
  %v908 = vrot.slane %v907, 4
  %v909 = vadd.f32 %v907, %v908
  %v910 = vrot.slane %v909, 2
  %v911 = vadd.f32 %v909, %v910
  %v912 = vrot.slane %v911, 1
  %v913 = vadd.f32 %v911, %v912
  %v914 = vadd.f32 %v898, %v900
  %v915 = vadd.f32 %v914, %v902
  %v916 = vadd.f32 %v915, %v904
  %v917 = vrot.slane %v916, 4
  %v918 = vadd.f32 %v916, %v917
  %v919 = vrot.slane %v918, 2
  %v920 = vadd.f32 %v918, %v919
  %v921 = vrot.slane %v920, 1
  %v922 = vadd.f32 %v920, %v921
  %v923 = vrcp.pop 32.0
  %v924 = vmul.f32 %v913, %v923
  %v925 = vmul.f32 %v922, %v923
  %v926 = vsub.f32 %v897, %v924
  %v927 = vsub.f32 %v898, %v925
  %v928 = vsub.f32 %v899, %v924
  %v929 = vsub.f32 %v900, %v925
  %v930 = vsub.f32 %v901, %v924
  %v931 = vsub.f32 %v902, %v925
  %v932 = vsub.f32 %v903, %v924
  %v933 = vsub.f32 %v904, %v925
  %v934 = vmul.f32 %v926, %v926
  %v935 = vmul.f32 %v927, %v927
  %v936 = vmul.f32 %v928, %v928
  %v937 = vmul.f32 %v929, %v929
  %v938 = vmul.f32 %v930, %v930
  %v939 = vmul.f32 %v931, %v931
  %v940 = vmul.f32 %v932, %v932
  %v941 = vmul.f32 %v933, %v933
  %v942 = vadd.f32 %v934, %v936
  %v943 = vadd.f32 %v942, %v938
  %v944 = vadd.f32 %v943, %v940
  %v945 = vrot.slane %v944, 4
  %v946 = vadd.f32 %v944, %v945
  %v947 = vrot.slane %v946, 2
  %v948 = vadd.f32 %v946, %v947
  %v949 = vrot.slane %v948, 1
  %v950 = vadd.f32 %v948, %v949
  %v951 = vadd.f32 %v935, %v937
  %v952 = vadd.f32 %v951, %v939
  %v953 = vadd.f32 %v952, %v941
  %v954 = vrot.slane %v953, 4
  %v955 = vadd.f32 %v953, %v954
  %v956 = vrot.slane %v955, 2
  %v957 = vadd.f32 %v955, %v956
  %v958 = vrot.slane %v957, 1
  %v959 = vadd.f32 %v957, %v958
  %v960 = vmul.f32 %v950, %v923
  %v961 = vmul.f32 %v959, %v923
  %v962 = vadd.f32 %v960, 1e-06
  %v963 = vadd.f32 %v961, 1e-06
  %v964 = vrsqrt.pop %v962
  %v965 = vrsqrt.pop %v963
  %v966 = vmul.f32 %v926, %v964
  %v967 = vmul.f32 %v927, %v965
  %v968 = vmul.f32 %v928, %v964
  %v969 = vmul.f32 %v929, %v965
  %v970 = vmul.f32 %v930, %v964
  %v971 = vmul.f32 %v931, %v965
  %v972 = vmul.f32 %v932, %v964
  %v973 = vmul.f32 %v933, %v965
  %974 = vset.pattern.permute.xlu0 0
  %975 = vperm.xlu0 %974, %v23
  %v976 = vpop.permute.xlu0 %975
  %978 = vset.pattern.permute.xlu0 0
  %979 = vperm.xlu0 %978, %v24
  %v980 = vpop.permute.xlu0 %979
  %982 = vset.pattern.permute.xlu0 0
  %983 = vperm.xlu0 %982, %v25
  %v984 = vpop.permute.xlu0 %983
  %986 = vset.pattern.permute.xlu0 0
  %987 = vperm.xlu0 %986, %v26
  %v988 = vpop.permute.xlu0 %987
  %v990 = vmul.f32 %v976, %v966
  %v991 = vmul.f32 %v976, %v967
  %v992 = vmul.f32 %v980, %v968
  %v993 = vmul.f32 %v980, %v969
  %v994 = vmul.f32 %v984, %v970
  %v995 = vmul.f32 %v984, %v971
  %v996 = vmul.f32 %v988, %v972
  %v997 = vmul.f32 %v988, %v973
  %998 = vset.pattern.permute.xlu0 1
  %999 = vperm.xlu0 %998, %v23
  %v1000 = vpop.permute.xlu0 %999
  %1002 = vset.pattern.permute.xlu0 1
  %1003 = vperm.xlu0 %1002, %v24
  %v1004 = vpop.permute.xlu0 %1003
  %1006 = vset.pattern.permute.xlu0 1
  %1007 = vperm.xlu0 %1006, %v25
  %v1008 = vpop.permute.xlu0 %1007
  %1010 = vset.pattern.permute.xlu0 1
  %1011 = vperm.xlu0 %1010, %v26
  %v1012 = vpop.permute.xlu0 %1011
  %v1014 = vadd.f32 %v990, %v1000
  %v1015 = vadd.f32 %v991, %v1000
  %v1016 = vadd.f32 %v992, %v1004
  %v1017 = vadd.f32 %v993, %v1004
  %v1018 = vadd.f32 %v994, %v1008
  %v1019 = vadd.f32 %v995, %v1008
  %v1020 = vadd.f32 %v996, %v1012
  %v1021 = vadd.f32 %v997, %v1012
  %v1022 = vmul.f32 %v1014, %v875
  %v1023 = vmul.f32 %v1015, %v877
  %v1024 = vmul.f32 %v1016, %v881
  %v1025 = vmul.f32 %v1017, %v883
  %v1026 = vmul.f32 %v1018, %v887
  %v1027 = vmul.f32 %v1019, %v889
  %v1028 = vmul.f32 %v1020, %v893
  %v1029 = vmul.f32 %v1021, %v895
  %v1030 = vadd.f32 %v1022, %v1024
  %v1031 = vadd.f32 %v1030, %v1026
  %v1032 = vadd.f32 %v1031, %v1028
  %v1033 = vrot.slane %v1032, 4
  %v1034 = vadd.f32 %v1032, %v1033
  %v1035 = vrot.slane %v1034, 2
  %v1036 = vadd.f32 %v1034, %v1035
  %v1037 = vrot.slane %v1036, 1
  %v1038 = vadd.f32 %v1036, %v1037
  %v1039 = vadd.f32 %v1023, %v1025
  %v1040 = vadd.f32 %v1039, %v1027
  %v1041 = vadd.f32 %v1040, %v1029
  %v1042 = vrot.slane %v1041, 4
  %v1043 = vadd.f32 %v1041, %v1042
  %v1044 = vrot.slane %v1043, 2
  %v1045 = vadd.f32 %v1043, %v1044
  %v1046 = vrot.slane %v1045, 1
  %v1047 = vadd.f32 %v1045, %v1046
  %v1048 = vmul.f32 %v1038, %v923
  %v1049 = vmul.f32 %v1047, %v923
  %v1050 = vsub.f32 %v1022, %v1048
  %v1051 = vsub.f32 %v1023, %v1049
  %v1052 = vsub.f32 %v1024, %v1048
  %v1053 = vsub.f32 %v1025, %v1049
  %v1054 = vsub.f32 %v1026, %v1048
  %v1055 = vsub.f32 %v1027, %v1049
  %v1056 = vsub.f32 %v1028, %v1048
  %v1057 = vsub.f32 %v1029, %v1049
  %v1058 = vmul.f32 %v1050, %v1050
  %v1059 = vmul.f32 %v1051, %v1051
  %v1060 = vmul.f32 %v1052, %v1052
  %v1061 = vmul.f32 %v1053, %v1053
  %v1062 = vmul.f32 %v1054, %v1054
  %v1063 = vmul.f32 %v1055, %v1055
  %v1064 = vmul.f32 %v1056, %v1056
  %v1065 = vmul.f32 %v1057, %v1057
  %v1066 = vadd.f32 %v1058, %v1060
  %v1067 = vadd.f32 %v1066, %v1062
  %v1068 = vadd.f32 %v1067, %v1064
  %v1069 = vrot.slane %v1068, 4
  %v1070 = vadd.f32 %v1068, %v1069
  %v1071 = vrot.slane %v1070, 2
  %v1072 = vadd.f32 %v1070, %v1071
  %v1073 = vrot.slane %v1072, 1
  %v1074 = vadd.f32 %v1072, %v1073
  %v1075 = vadd.f32 %v1059, %v1061
  %v1076 = vadd.f32 %v1075, %v1063
  %v1077 = vadd.f32 %v1076, %v1065
  %v1078 = vrot.slane %v1077, 4
  %v1079 = vadd.f32 %v1077, %v1078
  %v1080 = vrot.slane %v1079, 2
  %v1081 = vadd.f32 %v1079, %v1080
  %v1082 = vrot.slane %v1081, 1
  %v1083 = vadd.f32 %v1081, %v1082
  %v1084 = vmul.f32 %v1074, %v923
  %v1085 = vmul.f32 %v1083, %v923
  %v1086 = vadd.f32 %v1084, 1e-06
  %v1087 = vadd.f32 %v1085, 1e-06
  %v1088 = vrsqrt.pop %v1086
  %v1089 = vrsqrt.pop %v1087
  %v1090 = vmul.f32 %v1050, %v1088
  %v1091 = vmul.f32 %v1051, %v1089
  %v1092 = vmul.f32 %v1052, %v1088
  %v1093 = vmul.f32 %v1053, %v1089
  %v1094 = vmul.f32 %v1054, %v1088
  %v1095 = vmul.f32 %v1055, %v1089
  %v1096 = vmul.f32 %v1056, %v1088
  %v1097 = vmul.f32 %v1057, %v1089
  %1098 = vset.pattern.permute.xlu0 2
  %1099 = vperm.xlu0 %1098, %v23
  %v1100 = vpop.permute.xlu0 %1099
  %1102 = vset.pattern.permute.xlu0 2
  %1103 = vperm.xlu0 %1102, %v24
  %v1104 = vpop.permute.xlu0 %1103
  %1106 = vset.pattern.permute.xlu0 2
  %1107 = vperm.xlu0 %1106, %v25
  %v1108 = vpop.permute.xlu0 %1107
  %1110 = vset.pattern.permute.xlu0 2
  %1111 = vperm.xlu0 %1110, %v26
  %v1112 = vpop.permute.xlu0 %1111
  %v1114 = vmul.f32 %v1100, %v1090
  %v1115 = vmul.f32 %v1100, %v1091
  %v1116 = vmul.f32 %v1104, %v1092
  %v1117 = vmul.f32 %v1104, %v1093
  %v1118 = vmul.f32 %v1108, %v1094
  %v1119 = vmul.f32 %v1108, %v1095
  %v1120 = vmul.f32 %v1112, %v1096
  %v1121 = vmul.f32 %v1112, %v1097
  %1122 = vset.pattern.permute.xlu0 3
  %1123 = vperm.xlu0 %1122, %v23
  %v1124 = vpop.permute.xlu0 %1123
  %1126 = vset.pattern.permute.xlu0 3
  %1127 = vperm.xlu0 %1126, %v24
  %v1128 = vpop.permute.xlu0 %1127
  %1130 = vset.pattern.permute.xlu0 3
  %1131 = vperm.xlu0 %1130, %v25
  %v1132 = vpop.permute.xlu0 %1131
  %1134 = vset.pattern.permute.xlu0 3
  %1135 = vperm.xlu0 %1134, %v26
  %v1136 = vpop.permute.xlu0 %1135
  %v1138 = vadd.f32 %v1114, %v1124
  %v1139 = vadd.f32 %v1115, %v1124
  %v1140 = vadd.f32 %v1116, %v1128
  %v1141 = vadd.f32 %v1117, %v1128
  %v1142 = vadd.f32 %v1118, %v1132
  %v1143 = vadd.f32 %v1119, %v1132
  %v1144 = vadd.f32 %v1120, %v1136
  %v1145 = vadd.f32 %v1121, %v1136
  %1146 = vrot.lane.b32.xlu0 %v1138, 1
  %v1147 = vpop.permute.xlu0 %1146
  %1148 = vrot.lane.b32.xlu0 %v1140, 1
  %v1149 = vpop.permute.xlu0 %1148
  %1150 = vrot.lane.b32.xlu0 %v1142, 1
  %v1151 = vpop.permute.xlu0 %1150
  %1152 = vrot.lane.b32.xlu0 %v1144, 1
  %v1153 = vpop.permute.xlu0 %1152
  %1154 = vrot.lane.b32.xlu0 %v1139, 1
  %v1155 = vpop.permute.xlu0 %1154
  %1156 = vrot.lane.b32.xlu0 %v1141, 1
  %v1157 = vpop.permute.xlu0 %1156
  %1158 = vrot.lane.b32.xlu0 %v1143, 1
  %v1159 = vpop.permute.xlu0 %1158
  %1160 = vrot.lane.b32.xlu0 %v1145, 1
  %v1161 = vpop.permute.xlu0 %1160
  %v1162 = vsel %vm66, %v1147, %v1155
  %v1163 = vsel %vm66, %v1149, %v1157
  %v1164 = vsel %vm66, %v1151, %v1159
  %v1165 = vsel %vm66, %v1153, %v1161
  %v1166 = vsel %vm66, %v1155, %v1147
  %v1167 = vsel %vm66, %v1157, %v1149
  %v1168 = vsel %vm66, %v1159, %v1151
  %v1169 = vsel %vm66, %v1161, %v1153
  %v1170 = vmul.f32 %v1166, %v89
  %v1171 = vmul.f32 %v1162, %v93
  %v1172 = vmul.f32 %v1167, %v89
  %v1173 = vmul.f32 %v1163, %v93
  %v1174 = vmul.f32 %v1168, %v89
  %v1175 = vmul.f32 %v1164, %v93
  %v1176 = vmul.f32 %v1169, %v89
  %v1177 = vmul.f32 %v1165, %v93
  %1178 = vrot.lane.b32.xlu0 %v1138, 127
  %v1179 = vpop.permute.xlu0 %1178
  %1180 = vrot.lane.b32.xlu0 %v1140, 127
  %v1181 = vpop.permute.xlu0 %1180
  %1182 = vrot.lane.b32.xlu0 %v1142, 127
  %v1183 = vpop.permute.xlu0 %1182
  %1184 = vrot.lane.b32.xlu0 %v1144, 127
  %v1185 = vpop.permute.xlu0 %1184
  %1186 = vrot.lane.b32.xlu0 %v1139, 127
  %v1187 = vpop.permute.xlu0 %1186
  %1188 = vrot.lane.b32.xlu0 %v1141, 127
  %v1189 = vpop.permute.xlu0 %1188
  %1190 = vrot.lane.b32.xlu0 %v1143, 127
  %v1191 = vpop.permute.xlu0 %1190
  %1192 = vrot.lane.b32.xlu0 %v1145, 127
  %v1193 = vpop.permute.xlu0 %1192
  %v1194 = vsel %vm118, %v1179, %v1187
  %v1195 = vsel %vm118, %v1181, %v1189
  %v1196 = vsel %vm118, %v1183, %v1191
  %v1197 = vsel %vm118, %v1185, %v1193
  %v1198 = vsel %vm118, %v1187, %v1179
  %v1199 = vsel %vm118, %v1189, %v1181
  %v1200 = vsel %vm118, %v1191, %v1183
  %v1201 = vsel %vm118, %v1193, %v1185
  %v1202 = vmul.f32 %v1194, %v140
  %v1203 = vmul.f32 %v1198, %v144
  %v1204 = vmul.f32 %v1195, %v140
  %v1205 = vmul.f32 %v1199, %v144
  %v1206 = vmul.f32 %v1196, %v140
  %v1207 = vmul.f32 %v1200, %v144
  %v1208 = vmul.f32 %v1197, %v140
  %v1209 = vmul.f32 %v1201, %v144
  %1210 = vset.pattern.permute.xlu0 8
  %1211 = vperm.xlu0 %1210, %v23
  %v1212 = vpop.permute.xlu0 %1211
  %1214 = vset.pattern.permute.xlu0 8
  %1215 = vperm.xlu0 %1214, %v24
  %v1216 = vpop.permute.xlu0 %1215
  %1218 = vset.pattern.permute.xlu0 8
  %1219 = vperm.xlu0 %1218, %v25
  %v1220 = vpop.permute.xlu0 %1219
  %1222 = vset.pattern.permute.xlu0 8
  %1223 = vperm.xlu0 %1222, %v26
  %v1224 = vpop.permute.xlu0 %1223
  %v1226 = vmul.f32 %v1212, %v1170
  %v1227 = vmul.f32 %v1212, %v1171
  %v1228 = vmul.f32 %v1216, %v1172
  %v1229 = vmul.f32 %v1216, %v1173
  %v1230 = vmul.f32 %v1220, %v1174
  %v1231 = vmul.f32 %v1220, %v1175
  %v1232 = vmul.f32 %v1224, %v1176
  %v1233 = vmul.f32 %v1224, %v1177
  %1234 = vset.pattern.permute.xlu0 9
  %1235 = vperm.xlu0 %1234, %v23
  %v1236 = vpop.permute.xlu0 %1235
  %1238 = vset.pattern.permute.xlu0 9
  %1239 = vperm.xlu0 %1238, %v24
  %v1240 = vpop.permute.xlu0 %1239
  %1242 = vset.pattern.permute.xlu0 9
  %1243 = vperm.xlu0 %1242, %v25
  %v1244 = vpop.permute.xlu0 %1243
  %1246 = vset.pattern.permute.xlu0 9
  %1247 = vperm.xlu0 %1246, %v26
  %v1248 = vpop.permute.xlu0 %1247
  %v1250 = vmul.f32 %v1236, %v1138
  %v1251 = vmul.f32 %v1236, %v1139
  %v1252 = vmul.f32 %v1240, %v1140
  %v1253 = vmul.f32 %v1240, %v1141
  %v1254 = vmul.f32 %v1244, %v1142
  %v1255 = vmul.f32 %v1244, %v1143
  %v1256 = vmul.f32 %v1248, %v1144
  %v1257 = vmul.f32 %v1248, %v1145
  %v1258 = vadd.f32 %v1226, %v1250
  %v1259 = vadd.f32 %v1227, %v1251
  %v1260 = vadd.f32 %v1228, %v1252
  %v1261 = vadd.f32 %v1229, %v1253
  %v1262 = vadd.f32 %v1230, %v1254
  %v1263 = vadd.f32 %v1231, %v1255
  %v1264 = vadd.f32 %v1232, %v1256
  %v1265 = vadd.f32 %v1233, %v1257
  %1266 = vset.pattern.permute.xlu0 10
  %1267 = vperm.xlu0 %1266, %v23
  %v1268 = vpop.permute.xlu0 %1267
  %1270 = vset.pattern.permute.xlu0 10
  %1271 = vperm.xlu0 %1270, %v24
  %v1272 = vpop.permute.xlu0 %1271
  %1274 = vset.pattern.permute.xlu0 10
  %1275 = vperm.xlu0 %1274, %v25
  %v1276 = vpop.permute.xlu0 %1275
  %1278 = vset.pattern.permute.xlu0 10
  %1279 = vperm.xlu0 %1278, %v26
  %v1280 = vpop.permute.xlu0 %1279
  %v1282 = vmul.f32 %v1268, %v1202
  %v1283 = vmul.f32 %v1268, %v1203
  %v1284 = vmul.f32 %v1272, %v1204
  %v1285 = vmul.f32 %v1272, %v1205
  %v1286 = vmul.f32 %v1276, %v1206
  %v1287 = vmul.f32 %v1276, %v1207
  %v1288 = vmul.f32 %v1280, %v1208
  %v1289 = vmul.f32 %v1280, %v1209
  %v1290 = vadd.f32 %v1258, %v1282
  %v1291 = vadd.f32 %v1259, %v1283
  %v1292 = vadd.f32 %v1260, %v1284
  %v1293 = vadd.f32 %v1261, %v1285
  %v1294 = vadd.f32 %v1262, %v1286
  %v1295 = vadd.f32 %v1263, %v1287
  %v1296 = vadd.f32 %v1264, %v1288
  %v1297 = vadd.f32 %v1265, %v1289
  %1298 = vset.pattern.permute.xlu0 5
  %1299 = vperm.xlu0 %1298, %v23
  %v1300 = vpop.permute.xlu0 %1299
  %1302 = vset.pattern.permute.xlu0 5
  %1303 = vperm.xlu0 %1302, %v24
  %v1304 = vpop.permute.xlu0 %1303
  %1306 = vset.pattern.permute.xlu0 5
  %1307 = vperm.xlu0 %1306, %v25
  %v1308 = vpop.permute.xlu0 %1307
  %1310 = vset.pattern.permute.xlu0 5
  %1311 = vperm.xlu0 %1310, %v26
  %v1312 = vpop.permute.xlu0 %1311
  %v1314 = vmul.f32 %v1300, %v1170
  %v1315 = vmul.f32 %v1300, %v1171
  %v1316 = vmul.f32 %v1304, %v1172
  %v1317 = vmul.f32 %v1304, %v1173
  %v1318 = vmul.f32 %v1308, %v1174
  %v1319 = vmul.f32 %v1308, %v1175
  %v1320 = vmul.f32 %v1312, %v1176
  %v1321 = vmul.f32 %v1312, %v1177
  %1322 = vset.pattern.permute.xlu0 6
  %1323 = vperm.xlu0 %1322, %v23
  %v1324 = vpop.permute.xlu0 %1323
  %1326 = vset.pattern.permute.xlu0 6
  %1327 = vperm.xlu0 %1326, %v24
  %v1328 = vpop.permute.xlu0 %1327
  %1330 = vset.pattern.permute.xlu0 6
  %1331 = vperm.xlu0 %1330, %v25
  %v1332 = vpop.permute.xlu0 %1331
  %1334 = vset.pattern.permute.xlu0 6
  %1335 = vperm.xlu0 %1334, %v26
  %v1336 = vpop.permute.xlu0 %1335
  %v1338 = vmul.f32 %v1324, %v1138
  %v1339 = vmul.f32 %v1324, %v1139
  %v1340 = vmul.f32 %v1328, %v1140
  %v1341 = vmul.f32 %v1328, %v1141
  %v1342 = vmul.f32 %v1332, %v1142
  %v1343 = vmul.f32 %v1332, %v1143
  %v1344 = vmul.f32 %v1336, %v1144
  %v1345 = vmul.f32 %v1336, %v1145
  %v1346 = vadd.f32 %v1314, %v1338
  %v1347 = vadd.f32 %v1315, %v1339
  %v1348 = vadd.f32 %v1316, %v1340
  %v1349 = vadd.f32 %v1317, %v1341
  %v1350 = vadd.f32 %v1318, %v1342
  %v1351 = vadd.f32 %v1319, %v1343
  %v1352 = vadd.f32 %v1320, %v1344
  %v1353 = vadd.f32 %v1321, %v1345
  %1354 = vset.pattern.permute.xlu0 7
  %1355 = vperm.xlu0 %1354, %v23
  %v1356 = vpop.permute.xlu0 %1355
  %1358 = vset.pattern.permute.xlu0 7
  %1359 = vperm.xlu0 %1358, %v24
  %v1360 = vpop.permute.xlu0 %1359
  %1362 = vset.pattern.permute.xlu0 7
  %1363 = vperm.xlu0 %1362, %v25
  %v1364 = vpop.permute.xlu0 %1363
  %1366 = vset.pattern.permute.xlu0 7
  %1367 = vperm.xlu0 %1366, %v26
  %v1368 = vpop.permute.xlu0 %1367
  %v1370 = vmul.f32 %v1356, %v1202
  %v1371 = vmul.f32 %v1356, %v1203
  %v1372 = vmul.f32 %v1360, %v1204
  %v1373 = vmul.f32 %v1360, %v1205
  %v1374 = vmul.f32 %v1364, %v1206
  %v1375 = vmul.f32 %v1364, %v1207
  %v1376 = vmul.f32 %v1368, %v1208
  %v1377 = vmul.f32 %v1368, %v1209
  %v1378 = vadd.f32 %v1346, %v1370
  %v1379 = vadd.f32 %v1347, %v1371
  %v1380 = vadd.f32 %v1348, %v1372
  %v1381 = vadd.f32 %v1349, %v1373
  %v1382 = vadd.f32 %v1350, %v1374
  %v1383 = vadd.f32 %v1351, %v1375
  %v1384 = vadd.f32 %v1352, %v1376
  %v1385 = vadd.f32 %v1353, %v1377
  %1386 = vrot.lane.b32.xlu0 %v1378, 16
  %v1387 = vpop.permute.xlu0 %1386
  %1388 = vrot.lane.b32.xlu0 %v1380, 16
  %v1389 = vpop.permute.xlu0 %1388
  %1390 = vrot.lane.b32.xlu0 %v1382, 16
  %v1391 = vpop.permute.xlu0 %1390
  %1392 = vrot.lane.b32.xlu0 %v1384, 16
  %v1393 = vpop.permute.xlu0 %1392
  %1394 = vrot.lane.b32.xlu0 %v1379, 16
  %v1395 = vpop.permute.xlu0 %1394
  %1396 = vrot.lane.b32.xlu0 %v1381, 16
  %v1397 = vpop.permute.xlu0 %1396
  %1398 = vrot.lane.b32.xlu0 %v1383, 16
  %v1399 = vpop.permute.xlu0 %1398
  %1400 = vrot.lane.b32.xlu0 %v1385, 16
  %v1401 = vpop.permute.xlu0 %1400
  %v1402 = vsel %vm349, %v1387, %v1395
  %v1403 = vsel %vm349, %v1389, %v1397
  %v1404 = vsel %vm349, %v1391, %v1399
  %v1405 = vsel %vm349, %v1393, %v1401
  %v1406 = vsel %vm349, %v1395, %v1387
  %v1407 = vsel %vm349, %v1397, %v1389
  %v1408 = vsel %vm349, %v1399, %v1391
  %v1409 = vsel %vm349, %v1401, %v1393
  %v1410 = vmul.f32 %v371, %v1406
  %v1411 = vmul.f32 %v375, %v1402
  %v1412 = vmul.f32 %v371, %v1407
  %v1413 = vmul.f32 %v375, %v1403
  %v1414 = vmul.f32 %v371, %v1408
  %v1415 = vmul.f32 %v375, %v1404
  %v1416 = vmul.f32 %v371, %v1409
  %v1417 = vmul.f32 %v375, %v1405
  %v1418 = vadd.f32 %v1290, %v1410
  %v1419 = vadd.f32 %v1291, %v1411
  %v1420 = vadd.f32 %v1292, %v1412
  %v1421 = vadd.f32 %v1293, %v1413
  %v1422 = vadd.f32 %v1294, %v1414
  %v1423 = vadd.f32 %v1295, %v1415
  %v1424 = vadd.f32 %v1296, %v1416
  %v1425 = vadd.f32 %v1297, %v1417
  %1426 = vset.pattern.permute.xlu0 11
  %1427 = vperm.xlu0 %1426, %v23
  %v1428 = vpop.permute.xlu0 %1427
  %1430 = vset.pattern.permute.xlu0 11
  %1431 = vperm.xlu0 %1430, %v24
  %v1432 = vpop.permute.xlu0 %1431
  %1434 = vset.pattern.permute.xlu0 11
  %1435 = vperm.xlu0 %1434, %v25
  %v1436 = vpop.permute.xlu0 %1435
  %1438 = vset.pattern.permute.xlu0 11
  %1439 = vperm.xlu0 %1438, %v26
  %v1440 = vpop.permute.xlu0 %1439
  %v1442 = vmul.f32 %v1428, %v1170
  %v1443 = vmul.f32 %v1428, %v1171
  %v1444 = vmul.f32 %v1432, %v1172
  %v1445 = vmul.f32 %v1432, %v1173
  %v1446 = vmul.f32 %v1436, %v1174
  %v1447 = vmul.f32 %v1436, %v1175
  %v1448 = vmul.f32 %v1440, %v1176
  %v1449 = vmul.f32 %v1440, %v1177
  %1450 = vset.pattern.permute.xlu0 12
  %1451 = vperm.xlu0 %1450, %v23
  %v1452 = vpop.permute.xlu0 %1451
  %1454 = vset.pattern.permute.xlu0 12
  %1455 = vperm.xlu0 %1454, %v24
  %v1456 = vpop.permute.xlu0 %1455
  %1458 = vset.pattern.permute.xlu0 12
  %1459 = vperm.xlu0 %1458, %v25
  %v1460 = vpop.permute.xlu0 %1459
  %1462 = vset.pattern.permute.xlu0 12
  %1463 = vperm.xlu0 %1462, %v26
  %v1464 = vpop.permute.xlu0 %1463
  %v1466 = vmul.f32 %v1452, %v1138
  %v1467 = vmul.f32 %v1452, %v1139
  %v1468 = vmul.f32 %v1456, %v1140
  %v1469 = vmul.f32 %v1456, %v1141
  %v1470 = vmul.f32 %v1460, %v1142
  %v1471 = vmul.f32 %v1460, %v1143
  %v1472 = vmul.f32 %v1464, %v1144
  %v1473 = vmul.f32 %v1464, %v1145
  %v1474 = vadd.f32 %v1442, %v1466
  %v1475 = vadd.f32 %v1443, %v1467
  %v1476 = vadd.f32 %v1444, %v1468
  %v1477 = vadd.f32 %v1445, %v1469
  %v1478 = vadd.f32 %v1446, %v1470
  %v1479 = vadd.f32 %v1447, %v1471
  %v1480 = vadd.f32 %v1448, %v1472
  %v1481 = vadd.f32 %v1449, %v1473
  %1482 = vset.pattern.permute.xlu0 13
  %1483 = vperm.xlu0 %1482, %v23
  %v1484 = vpop.permute.xlu0 %1483
  %1486 = vset.pattern.permute.xlu0 13
  %1487 = vperm.xlu0 %1486, %v24
  %v1488 = vpop.permute.xlu0 %1487
  %1490 = vset.pattern.permute.xlu0 13
  %1491 = vperm.xlu0 %1490, %v25
  %v1492 = vpop.permute.xlu0 %1491
  %1494 = vset.pattern.permute.xlu0 13
  %1495 = vperm.xlu0 %1494, %v26
  %v1496 = vpop.permute.xlu0 %1495
  %v1498 = vmul.f32 %v1484, %v1202
  %v1499 = vmul.f32 %v1484, %v1203
  %v1500 = vmul.f32 %v1488, %v1204
  %v1501 = vmul.f32 %v1488, %v1205
  %v1502 = vmul.f32 %v1492, %v1206
  %v1503 = vmul.f32 %v1492, %v1207
  %v1504 = vmul.f32 %v1496, %v1208
  %v1505 = vmul.f32 %v1496, %v1209
  %v1506 = vadd.f32 %v1474, %v1498
  %v1507 = vadd.f32 %v1475, %v1499
  %v1508 = vadd.f32 %v1476, %v1500
  %v1509 = vadd.f32 %v1477, %v1501
  %v1510 = vadd.f32 %v1478, %v1502
  %v1511 = vadd.f32 %v1479, %v1503
  %v1512 = vadd.f32 %v1480, %v1504
  %v1513 = vadd.f32 %v1481, %v1505
  %1514 = vrot.lane.b32.xlu0 %v1506, 112
  %v1515 = vpop.permute.xlu0 %1514
  %1516 = vrot.lane.b32.xlu0 %v1508, 112
  %v1517 = vpop.permute.xlu0 %1516
  %1518 = vrot.lane.b32.xlu0 %v1510, 112
  %v1519 = vpop.permute.xlu0 %1518
  %1520 = vrot.lane.b32.xlu0 %v1512, 112
  %v1521 = vpop.permute.xlu0 %1520
  %1522 = vrot.lane.b32.xlu0 %v1507, 112
  %v1523 = vpop.permute.xlu0 %1522
  %1524 = vrot.lane.b32.xlu0 %v1509, 112
  %v1525 = vpop.permute.xlu0 %1524
  %1526 = vrot.lane.b32.xlu0 %v1511, 112
  %v1527 = vpop.permute.xlu0 %1526
  %1528 = vrot.lane.b32.xlu0 %v1513, 112
  %v1529 = vpop.permute.xlu0 %1528
  %v1530 = vsel %vm496, %v1515, %v1523
  %v1531 = vsel %vm496, %v1517, %v1525
  %v1532 = vsel %vm496, %v1519, %v1527
  %v1533 = vsel %vm496, %v1521, %v1529
  %v1534 = vsel %vm496, %v1523, %v1515
  %v1535 = vsel %vm496, %v1525, %v1517
  %v1536 = vsel %vm496, %v1527, %v1519
  %v1537 = vsel %vm496, %v1529, %v1521
  %v1538 = vmul.f32 %v518, %v1530
  %v1539 = vmul.f32 %v522, %v1534
  %v1540 = vmul.f32 %v518, %v1531
  %v1541 = vmul.f32 %v522, %v1535
  %v1542 = vmul.f32 %v518, %v1532
  %v1543 = vmul.f32 %v522, %v1536
  %v1544 = vmul.f32 %v518, %v1533
  %v1545 = vmul.f32 %v522, %v1537
  %v1546 = vadd.f32 %v1418, %v1538
  %v1547 = vadd.f32 %v1419, %v1539
  %v1548 = vadd.f32 %v1420, %v1540
  %v1549 = vadd.f32 %v1421, %v1541
  %v1550 = vadd.f32 %v1422, %v1542
  %v1551 = vadd.f32 %v1423, %v1543
  %v1552 = vadd.f32 %v1424, %v1544
  %v1553 = vadd.f32 %v1425, %v1545
  %1554 = vset.pattern.permute.xlu0 4
  %1555 = vperm.xlu0 %1554, %v23
  %v1556 = vpop.permute.xlu0 %1555
  %1558 = vset.pattern.permute.xlu0 4
  %1559 = vperm.xlu0 %1558, %v24
  %v1560 = vpop.permute.xlu0 %1559
  %1562 = vset.pattern.permute.xlu0 4
  %1563 = vperm.xlu0 %1562, %v25
  %v1564 = vpop.permute.xlu0 %1563
  %1566 = vset.pattern.permute.xlu0 4
  %1567 = vperm.xlu0 %1566, %v26
  %v1568 = vpop.permute.xlu0 %1567
  %v1570 = vadd.f32 %v1546, %v1556
  %v1571 = vadd.f32 %v1547, %v1556
  %v1572 = vadd.f32 %v1548, %v1560
  %v1573 = vadd.f32 %v1549, %v1560
  %v1574 = vadd.f32 %v1550, %v1564
  %v1575 = vadd.f32 %v1551, %v1564
  %v1576 = vadd.f32 %v1552, %v1568
  %v1577 = vadd.f32 %v1553, %v1568
  %v1578 = vmul.f32 %v1570, 0.5
  %v1579 = vmul.f32 %v1571, 0.5
  %v1580 = vmul.f32 %v1572, 0.5
  %v1581 = vmul.f32 %v1573, 0.5
  %v1582 = vmul.f32 %v1574, 0.5
  %v1583 = vmul.f32 %v1575, 0.5
  %v1584 = vmul.f32 %v1576, 0.5
  %v1585 = vmul.f32 %v1577, 0.5
  %v1586 = vmul.f32 %v1570, 0.70710677
  %v1587 = vmul.f32 %v1571, 0.70710677
  %v1588 = vmul.f32 %v1572, 0.70710677
  %v1589 = vmul.f32 %v1573, 0.70710677
  %v1590 = vmul.f32 %v1574, 0.70710677
  %v1591 = vmul.f32 %v1575, 0.70710677
  %v1592 = vmul.f32 %v1576, 0.70710677
  %v1593 = vmul.f32 %v1577, 0.70710677
  %v1594 = vand.u32 2147483647, %v1586
  %v1595 = vand.u32 2147483647, %v1587
  %v1596 = vand.u32 2147483647, %v1588
  %v1597 = vand.u32 2147483647, %v1589
  %v1598 = vand.u32 2147483647, %v1590
  %v1599 = vand.u32 2147483647, %v1591
  %v1600 = vand.u32 2147483647, %v1592
  %v1601 = vand.u32 2147483647, %v1593
  %v1602 = vmul.f32 %v1594, 0.3275911
  %v1603 = vmul.f32 %v1595, 0.3275911
  %v1604 = vmul.f32 %v1596, 0.3275911
  %v1605 = vmul.f32 %v1597, 0.3275911
  %v1606 = vmul.f32 %v1598, 0.3275911
  %v1607 = vmul.f32 %v1599, 0.3275911
  %v1608 = vmul.f32 %v1600, 0.3275911
  %v1609 = vmul.f32 %v1601, 0.3275911
  %v1610 = vadd.f32 %v1602, 1.0
  %v1611 = vadd.f32 %v1603, 1.0
  %v1612 = vadd.f32 %v1604, 1.0
  %v1613 = vadd.f32 %v1605, 1.0
  %v1614 = vadd.f32 %v1606, 1.0
  %v1615 = vadd.f32 %v1607, 1.0
  %v1616 = vadd.f32 %v1608, 1.0
  %v1617 = vadd.f32 %v1609, 1.0
  %v1618 = vrcp.pop %v1610
  %v1619 = vmul.f32 1.0, %v1618
  %v1620 = vrcp.pop %v1611
  %v1621 = vmul.f32 1.0, %v1620
  %v1622 = vrcp.pop %v1612
  %v1623 = vmul.f32 1.0, %v1622
  %v1624 = vrcp.pop %v1613
  %v1625 = vmul.f32 1.0, %v1624
  %v1626 = vrcp.pop %v1614
  %v1627 = vmul.f32 1.0, %v1626
  %v1628 = vrcp.pop %v1615
  %v1629 = vmul.f32 1.0, %v1628
  %v1630 = vrcp.pop %v1616
  %v1631 = vmul.f32 1.0, %v1630
  %v1632 = vrcp.pop %v1617
  %v1633 = vmul.f32 1.0, %v1632
  %v1634 = vmul.f32 %v1619, 1.0614054
  %v1635 = vmul.f32 %v1621, 1.0614054
  %v1636 = vmul.f32 %v1623, 1.0614054
  %v1637 = vmul.f32 %v1625, 1.0614054
  %v1638 = vmul.f32 %v1627, 1.0614054
  %v1639 = vmul.f32 %v1629, 1.0614054
  %v1640 = vmul.f32 %v1631, 1.0614054
  %v1641 = vmul.f32 %v1633, 1.0614054
  %v1642 = vsub.f32 %v1634, 1.4531521
  %v1643 = vsub.f32 %v1635, 1.4531521
  %v1644 = vsub.f32 %v1636, 1.4531521
  %v1645 = vsub.f32 %v1637, 1.4531521
  %v1646 = vsub.f32 %v1638, 1.4531521
  %v1647 = vsub.f32 %v1639, 1.4531521
  %v1648 = vsub.f32 %v1640, 1.4531521
  %v1649 = vsub.f32 %v1641, 1.4531521
  %v1650 = vmul.f32 %v1642, %v1619
  %v1651 = vmul.f32 %v1643, %v1621
  %v1652 = vmul.f32 %v1644, %v1623
  %v1653 = vmul.f32 %v1645, %v1625
  %v1654 = vmul.f32 %v1646, %v1627
  %v1655 = vmul.f32 %v1647, %v1629
  %v1656 = vmul.f32 %v1648, %v1631
  %v1657 = vmul.f32 %v1649, %v1633
  %v1658 = vadd.f32 %v1650, 1.4214138
  %v1659 = vadd.f32 %v1651, 1.4214138
  %v1660 = vadd.f32 %v1652, 1.4214138
  %v1661 = vadd.f32 %v1653, 1.4214138
  %v1662 = vadd.f32 %v1654, 1.4214138
  %v1663 = vadd.f32 %v1655, 1.4214138
  %v1664 = vadd.f32 %v1656, 1.4214138
  %v1665 = vadd.f32 %v1657, 1.4214138
  %v1666 = vmul.f32 %v1658, %v1619
  %v1667 = vmul.f32 %v1659, %v1621
  %v1668 = vmul.f32 %v1660, %v1623
  %v1669 = vmul.f32 %v1661, %v1625
  %v1670 = vmul.f32 %v1662, %v1627
  %v1671 = vmul.f32 %v1663, %v1629
  %v1672 = vmul.f32 %v1664, %v1631
  %v1673 = vmul.f32 %v1665, %v1633
  %v1674 = vsub.f32 %v1666, 0.28449672
  %v1675 = vsub.f32 %v1667, 0.28449672
  %v1676 = vsub.f32 %v1668, 0.28449672
  %v1677 = vsub.f32 %v1669, 0.28449672
  %v1678 = vsub.f32 %v1670, 0.28449672
  %v1679 = vsub.f32 %v1671, 0.28449672
  %v1680 = vsub.f32 %v1672, 0.28449672
  %v1681 = vsub.f32 %v1673, 0.28449672
  %v1682 = vmul.f32 %v1674, %v1619
  %v1683 = vmul.f32 %v1675, %v1621
  %v1684 = vmul.f32 %v1676, %v1623
  %v1685 = vmul.f32 %v1677, %v1625
  %v1686 = vmul.f32 %v1678, %v1627
  %v1687 = vmul.f32 %v1679, %v1629
  %v1688 = vmul.f32 %v1680, %v1631
  %v1689 = vmul.f32 %v1681, %v1633
  %v1690 = vadd.f32 %v1682, 0.2548296
  %v1691 = vadd.f32 %v1683, 0.2548296
  %v1692 = vadd.f32 %v1684, 0.2548296
  %v1693 = vadd.f32 %v1685, 0.2548296
  %v1694 = vadd.f32 %v1686, 0.2548296
  %v1695 = vadd.f32 %v1687, 0.2548296
  %v1696 = vadd.f32 %v1688, 0.2548296
  %v1697 = vadd.f32 %v1689, 0.2548296
  %v1698 = vmul.f32 %v1690, %v1619
  %v1699 = vmul.f32 %v1691, %v1621
  %v1700 = vmul.f32 %v1692, %v1623
  %v1701 = vmul.f32 %v1693, %v1625
  %v1702 = vmul.f32 %v1694, %v1627
  %v1703 = vmul.f32 %v1695, %v1629
  %v1704 = vmul.f32 %v1696, %v1631
  %v1705 = vmul.f32 %v1697, %v1633
  %v1706 = vsub.f32 0.0, %v1594
  %v1707 = vsub.f32 0.0, %v1595
  %v1708 = vsub.f32 0.0, %v1596
  %v1709 = vsub.f32 0.0, %v1597
  %v1710 = vsub.f32 0.0, %v1598
  %v1711 = vsub.f32 0.0, %v1599
  %v1712 = vsub.f32 0.0, %v1600
  %v1713 = vsub.f32 0.0, %v1601
  %v1714 = vmul.f32 %v1706, %v1594
  %v1715 = vmul.f32 %v1707, %v1595
  %v1716 = vmul.f32 %v1708, %v1596
  %v1717 = vmul.f32 %v1709, %v1597
  %v1718 = vmul.f32 %v1710, %v1598
  %v1719 = vmul.f32 %v1711, %v1599
  %v1720 = vmul.f32 %v1712, %v1600
  %v1721 = vmul.f32 %v1713, %v1601
  %v1722 = vmul.f32 %v1714, 1.442695
  %v1723 = vpow.pop %v1722
  %v1724 = vmul.f32 %v1715, 1.442695
  %v1725 = vpow.pop %v1724
  %v1726 = vmul.f32 %v1716, 1.442695
  %v1727 = vpow.pop %v1726
  %v1728 = vmul.f32 %v1717, 1.442695
  %v1729 = vpow.pop %v1728
  %v1730 = vmul.f32 %v1718, 1.442695
  %v1731 = vpow.pop %v1730
  %v1732 = vmul.f32 %v1719, 1.442695
  %v1733 = vpow.pop %v1732
  %v1734 = vmul.f32 %v1720, 1.442695
  %v1735 = vpow.pop %v1734
  %v1736 = vmul.f32 %v1721, 1.442695
  %v1737 = vpow.pop %v1736
  %v1738 = vmul.f32 %v1698, %v1723
  %v1739 = vmul.f32 %v1699, %v1725
  %v1740 = vmul.f32 %v1700, %v1727
  %v1741 = vmul.f32 %v1701, %v1729
  %v1742 = vmul.f32 %v1702, %v1731
  %v1743 = vmul.f32 %v1703, %v1733
  %v1744 = vmul.f32 %v1704, %v1735
  %v1745 = vmul.f32 %v1705, %v1737
  %v1746 = vsub.f32 1.0, %v1738
  %v1747 = vsub.f32 1.0, %v1739
  %v1748 = vsub.f32 1.0, %v1740
  %v1749 = vsub.f32 1.0, %v1741
  %v1750 = vsub.f32 1.0, %v1742
  %v1751 = vsub.f32 1.0, %v1743
  %v1752 = vsub.f32 1.0, %v1744
  %v1753 = vsub.f32 1.0, %v1745
  %vm1754 = vcmp.ge.f32.partialorder %v1586, 0.0
  %vm1755 = vcmp.ge.f32.partialorder %v1587, 0.0
  %vm1756 = vcmp.ge.f32.partialorder %v1588, 0.0
  %vm1757 = vcmp.ge.f32.partialorder %v1589, 0.0
  %vm1758 = vcmp.ge.f32.partialorder %v1590, 0.0
  %vm1759 = vcmp.ge.f32.partialorder %v1591, 0.0
  %vm1760 = vcmp.ge.f32.partialorder %v1592, 0.0
  %vm1761 = vcmp.ge.f32.partialorder %v1593, 0.0
  %v1762 = vsub.f32 0.0, %v1746
  %v1763 = vsub.f32 0.0, %v1747
  %v1764 = vsub.f32 0.0, %v1748
  %v1765 = vsub.f32 0.0, %v1749
  %v1766 = vsub.f32 0.0, %v1750
  %v1767 = vsub.f32 0.0, %v1751
  %v1768 = vsub.f32 0.0, %v1752
  %v1769 = vsub.f32 0.0, %v1753
  %v1770 = vsel %vm1754, %v1746, %v1762
  %v1771 = vsel %vm1755, %v1747, %v1763
  %v1772 = vsel %vm1756, %v1748, %v1764
  %v1773 = vsel %vm1757, %v1749, %v1765
  %v1774 = vsel %vm1758, %v1750, %v1766
  %v1775 = vsel %vm1759, %v1751, %v1767
  %v1776 = vsel %vm1760, %v1752, %v1768
  %v1777 = vsel %vm1761, %v1753, %v1769
  %v1778 = vadd.f32 %v1770, 1.0
  %v1779 = vadd.f32 %v1771, 1.0
  %v1780 = vadd.f32 %v1772, 1.0
  %v1781 = vadd.f32 %v1773, 1.0
  %v1782 = vadd.f32 %v1774, 1.0
  %v1783 = vadd.f32 %v1775, 1.0
  %v1784 = vadd.f32 %v1776, 1.0
  %v1785 = vadd.f32 %v1777, 1.0
  %v1786 = vmul.f32 %v1578, %v1778
  %v1787 = vmul.f32 %v1579, %v1779
  %v1788 = vmul.f32 %v1580, %v1780
  %v1789 = vmul.f32 %v1581, %v1781
  %v1790 = vmul.f32 %v1582, %v1782
  %v1791 = vmul.f32 %v1583, %v1783
  %v1792 = vmul.f32 %v1584, %v1784
  %v1793 = vmul.f32 %v1585, %v1785
  %1795 = vset.pattern.permute.xlu0 32
  %1796 = vperm.xlu0 %1795, %v31
  %v1797 = vpop.permute.xlu0 %1796
  %1800 = vset.pattern.permute.xlu0 32
  %1801 = vperm.xlu0 %1800, %v32
  %v1802 = vpop.permute.xlu0 %1801
  %1805 = vset.pattern.permute.xlu0 32
  %1806 = vperm.xlu0 %1805, %v33
  %v1807 = vpop.permute.xlu0 %1806
  %1810 = vset.pattern.permute.xlu0 32
  %1811 = vperm.xlu0 %1810, %v34
  %v1812 = vpop.permute.xlu0 %1811
  %1815 = vset.pattern.permute.xlu0 32
  %1816 = vperm.xlu0 %1815, %v35
  %v1817 = vpop.permute.xlu0 %1816
  %1820 = vset.pattern.permute.xlu0 32
  %1821 = vperm.xlu0 %1820, %v36
  %v1822 = vpop.permute.xlu0 %1821
  %1825 = vset.pattern.permute.xlu0 32
  %1826 = vperm.xlu0 %1825, %v37
  %v1827 = vpop.permute.xlu0 %1826
  %1830 = vset.pattern.permute.xlu0 32
  %1831 = vperm.xlu0 %1830, %v38
  %v1832 = vpop.permute.xlu0 %1831
  %v1834 = vsel %vm799, %v31, 0
  %v1836 = vsel %vm799, %v32, 0
  %v1838 = vsel %vm799, %v33, 0
  %v1840 = vsel %vm799, %v34, 0
  %v1842 = vsel %vm799, %v35, 0
  %v1844 = vsel %vm799, %v36, 0
  %v1846 = vsel %vm799, %v37, 0
  %v1848 = vsel %vm799, %v38, 0
  %1850 = vmatprep.subr.mxu0 %v1787
  %1851 = vmatpush1.msra.mxu0 %v1786
  %1852 = vmatprep.subr.mxu0 %v1789
  %1853 = vmatpush1.msra.mxu0 %v1788
  %1854 = vmatprep.subr.mxu0 %v1791
  %1855 = vmatpush1.msra.mxu0 %v1790
  %1856 = vmatprep.subr.mxu0 %v1793
  %1857 = vmatpush1.msra.mxu0 %v1792
  %1858 = vmatprep.subr.mxu0 0.0
  %1859 = vmatpush1.msra.mxu0 0.0
  %1860 = vmatprep.subr.mxu0 0.0
  %1861 = vmatpush1.msra.mxu0 0.0
  %1862 = vmatprep.subr.mxu0 0.0
  %1863 = vmatpush1.msra.mxu0 0.0
  %1864 = vmatprep.subr.mxu0 0.0
  %1865 = vmatpush1.msra.mxu0 0.0
  %1866 = vmatprep.subr.mxu0 0.0
  %1867 = vmatpush1.msra.mxu0 0.0
  %1868 = vmatprep.subr.mxu0 0.0
  %1869 = vmatpush1.msra.mxu0 0.0
  %1870 = vmatprep.subr.mxu0 0.0
  %1871 = vmatpush1.msra.mxu0 0.0
  %1872 = vmatprep.subr.mxu0 0.0
  %1873 = vmatpush1.msra.mxu0 0.0
  %1874 = vmatprep.subr.mxu0 0.0
  %1875 = vmatpush1.msra.mxu0 0.0
  %1876 = vmatprep.subr.mxu0 0.0
  %1877 = vmatpush1.msra.mxu0 0.0
  %1878 = vmatprep.subr.mxu0 0.0
  %1879 = vmatpush1.msra.mxu0 0.0
  %1880 = vmatprep.subr.mxu0 0.0
  %1881 = vmatpush1.msra.mxu0 0.0
  %1882 = vmatprep.subr.mxu0 0.0
  %1883 = vmatpush1.msra.mxu0 0.0
  %1884 = vmatprep.subr.mxu0 0.0
  %1885 = vmatpush1.msra.mxu0 0.0
  %1886 = vmatprep.subr.mxu0 0.0
  %1887 = vmatpush1.msra.mxu0 0.0
  %1888 = vmatprep.subr.mxu0 0.0
  %1889 = vmatpush1.msra.mxu0 0.0
  %1890 = vmatprep.subr.mxu0 0.0
  %1891 = vmatpush1.msra.mxu0 0.0
  %1892 = vmatprep.subr.mxu0 0.0
  %1893 = vmatpush1.msra.mxu0 0.0
  %1894 = vmatprep.subr.mxu0 0.0
  %1895 = vmatpush1.msra.mxu0 0.0
  %1896 = vmatprep.subr.mxu0 0.0
  %1897 = vmatpush1.msra.mxu0 0.0
  %1898 = vmatprep.subr.mxu0 0.0
  %1899 = vmatpush1.msra.mxu0 0.0
  %1900 = vmatprep.subr.mxu0 0.0
  %1901 = vmatpush1.msra.mxu0 0.0
  %1902 = vmatprep.subr.mxu0 0.0
  %1903 = vmatpush1.msra.mxu0 0.0
  %1904 = vmatprep.subr.mxu0 0.0
  %1905 = vmatpush1.msra.mxu0 0.0
  %1906 = vmatprep.subr.mxu0 0.0
  %1907 = vmatpush1.msra.mxu0 0.0
  %1908 = vmatprep.subr.mxu0 0.0
  %1909 = vmatpush1.msra.mxu0 0.0
  %1910 = vmatprep.subr.mxu0 0.0
  %1911 = vmatpush1.msra.mxu0 0.0
  %1912 = vmatprep.subr.mxu0 0.0
  %1913 = vmatpush1.msra.mxu0 0.0
  %1914 = vmatprep.mubr.f32.mxu0 0.0
  %1915 = vmatmul.mubr.f32.gmra.mrb[0].mxu0 %v1834
  %v1916 = vpop.f32.mrb[0].mxu0
  %v1917 = vadd.f32 %v1797, %v1916
  %v1918 = vpop.f32.mrb[0].mxu0
  %v1919 = vadd.f32 %v1797, %v1918
  %1920 = vmatprep.mubr.f32.mxu0 0.0
  %1921 = vmatmul.mubr.f32.gmra.mrb[0].mxu0 %v1836
  %v1922 = vpop.f32.mrb[0].mxu0
  %v1923 = vadd.f32 %v1802, %v1922
  %v1924 = vpop.f32.mrb[0].mxu0
  %v1925 = vadd.f32 %v1802, %v1924
  %1926 = vmatprep.mubr.f32.mxu0 0.0
  %1927 = vmatmul.mubr.f32.gmra.mrb[0].mxu0 %v1838
  %v1928 = vpop.f32.mrb[0].mxu0
  %v1929 = vadd.f32 %v1807, %v1928
  %v1930 = vpop.f32.mrb[0].mxu0
  %v1931 = vadd.f32 %v1807, %v1930
  %1932 = vmatprep.mubr.f32.mxu0 0.0
  %1933 = vmatmul.mubr.f32.gmra.mrb[0].mxu0 %v1840
  %v1934 = vpop.f32.mrb[0].mxu0
  %v1935 = vadd.f32 %v1812, %v1934
  %v1936 = vpop.f32.mrb[0].mxu0
  %v1937 = vadd.f32 %v1812, %v1936
  %1938 = vmatprep.mubr.f32.mxu0 0.0
  %1939 = vmatmul.mubr.f32.gmra.mrb[0].mxu0 %v1842
  %v1940 = vpop.f32.mrb[0].mxu0
  %v1941 = vadd.f32 %v1817, %v1940
  %v1942 = vpop.f32.mrb[0].mxu0
  %v1943 = vadd.f32 %v1817, %v1942
  %1944 = vmatprep.mubr.f32.mxu0 0.0
  %1945 = vmatmul.mubr.f32.gmra.mrb[0].mxu0 %v1844
  %v1946 = vpop.f32.mrb[0].mxu0
  %v1947 = vadd.f32 %v1822, %v1946
  %v1948 = vpop.f32.mrb[0].mxu0
  %v1949 = vadd.f32 %v1822, %v1948
  %1950 = vmatprep.mubr.f32.mxu0 0.0
  %1951 = vmatmul.mubr.f32.gmra.mrb[0].mxu0 %v1846
  %v1952 = vpop.f32.mrb[0].mxu0
  %v1953 = vadd.f32 %v1827, %v1952
  %v1954 = vpop.f32.mrb[0].mxu0
  %v1955 = vadd.f32 %v1827, %v1954
  %1956 = vmatprep.mubr.f32.mxu0 0.0
  %1957 = vmatmul.mubr.f32.gmra.mrb[0].mxu0 %v1848
  %v1958 = vpop.f32.mrb[0].mxu0
  %v1959 = vadd.f32 %v1832, %v1958
  %v1960 = vpop.f32.mrb[0].mxu0
  %v1961 = vadd.f32 %v1832, %v1960
  %1962 = vdwg.mxu0
  %1963 = vst [vmem:[%s6] sm:$0xff] %v1917
  %1964 = vst [vmem:[%s6 + $0x8] sm:$0xff] %v1919
  %1965 = vst [vmem:[%s6 + $0x10] sm:$0xff] %v1923
  %1966 = vst [vmem:[%s6 + $0x18] sm:$0xff] %v1925
  %1967 = vst [vmem:[%s6 + $0x20] sm:$0xff] %v1929
  %1968 = vst [vmem:[%s6 + $0x28] sm:$0xff] %v1931
  %1969 = vst [vmem:[%s6 + $0x30] sm:$0xff] %v1935
  %1970 = vst [vmem:[%s6 + $0x38] sm:$0xff] %v1937
  %1971 = vst [vmem:[%s6 + $0x40] sm:$0xff] %v1941
  %1972 = vst [vmem:[%s6 + $0x48] sm:$0xff] %v1943
  %1973 = vst [vmem:[%s6 + $0x50] sm:$0xff] %v1947
  %1974 = vst [vmem:[%s6 + $0x58] sm:$0xff] %v1949
  %1975 = vst [vmem:[%s6 + $0x60] sm:$0xff] %v1953
  %1976 = vst [vmem:[%s6 + $0x68] sm:$0xff] %v1955
  %1977 = vst [vmem:[%s6 + $0x70] sm:$0xff] %v1959
  %1978 = vst [vmem:[%s6 + $0x78] sm:$0xff] %v1961
  %s1979 = scalar_lea.vmem %s0, 64
  %v1980 = vld [vmem:[%s1979] sm:$0xff]
  %v1981 = vld [vmem:[%s1979 + $0x8] sm:$0xff]
  %v1982 = vld [vmem:[%s1979 + $0x10] sm:$0xff]
  %v1983 = vld [vmem:[%s1979 + $0x18] sm:$0xff]
  %v1984 = vld [vmem:[%s1979 + $0x20] sm:$0xff]
  %v1985 = vld [vmem:[%s1979 + $0x28] sm:$0xff]
  %v1986 = vld [vmem:[%s1979 + $0x30] sm:$0xff]
  %v1987 = vld [vmem:[%s1979 + $0x38] sm:$0xff]
  %v1988 = vadd.f32 %v1980, %v1982
  %v1989 = vadd.f32 %v1988, %v1984
  %v1990 = vadd.f32 %v1989, %v1986
  %v1991 = vrot.slane %v1990, 4
  %v1992 = vadd.f32 %v1990, %v1991
  %v1993 = vrot.slane %v1992, 2
  %v1994 = vadd.f32 %v1992, %v1993
  %v1995 = vrot.slane %v1994, 1
  %v1996 = vadd.f32 %v1994, %v1995
  %v1997 = vadd.f32 %v1981, %v1983
  %v1998 = vadd.f32 %v1997, %v1985
  %v1999 = vadd.f32 %v1998, %v1987
  %v2000 = vrot.slane %v1999, 4
  %v2001 = vadd.f32 %v1999, %v2000
  %v2002 = vrot.slane %v2001, 2
  %v2003 = vadd.f32 %v2001, %v2002
  %v2004 = vrot.slane %v2003, 1
  %v2005 = vadd.f32 %v2003, %v2004
  %v2006 = vmul.f32 %v1996, %v923
  %v2007 = vmul.f32 %v2005, %v923
  %v2008 = vsub.f32 %v1980, %v2006
  %v2009 = vsub.f32 %v1981, %v2007
  %v2010 = vsub.f32 %v1982, %v2006
  %v2011 = vsub.f32 %v1983, %v2007
  %v2012 = vsub.f32 %v1984, %v2006
  %v2013 = vsub.f32 %v1985, %v2007
  %v2014 = vsub.f32 %v1986, %v2006
  %v2015 = vsub.f32 %v1987, %v2007
  %v2016 = vmul.f32 %v2008, %v2008
  %v2017 = vmul.f32 %v2009, %v2009
  %v2018 = vmul.f32 %v2010, %v2010
  %v2019 = vmul.f32 %v2011, %v2011
  %v2020 = vmul.f32 %v2012, %v2012
  %v2021 = vmul.f32 %v2013, %v2013
  %v2022 = vmul.f32 %v2014, %v2014
  %v2023 = vmul.f32 %v2015, %v2015
  %v2024 = vadd.f32 %v2016, %v2018
  %v2025 = vadd.f32 %v2024, %v2020
  %v2026 = vadd.f32 %v2025, %v2022
  %v2027 = vrot.slane %v2026, 4
  %v2028 = vadd.f32 %v2026, %v2027
  %v2029 = vrot.slane %v2028, 2
  %v2030 = vadd.f32 %v2028, %v2029
  %v2031 = vrot.slane %v2030, 1
  %v2032 = vadd.f32 %v2030, %v2031
  %v2033 = vadd.f32 %v2017, %v2019
  %v2034 = vadd.f32 %v2033, %v2021
  %v2035 = vadd.f32 %v2034, %v2023
  %v2036 = vrot.slane %v2035, 4
  %v2037 = vadd.f32 %v2035, %v2036
  %v2038 = vrot.slane %v2037, 2
  %v2039 = vadd.f32 %v2037, %v2038
  %v2040 = vrot.slane %v2039, 1
  %v2041 = vadd.f32 %v2039, %v2040
  %v2042 = vmul.f32 %v2032, %v923
  %v2043 = vmul.f32 %v2041, %v923
  %v2044 = vadd.f32 %v2042, 1e-06
  %v2045 = vadd.f32 %v2043, 1e-06
  %v2046 = vrsqrt.pop %v2044
  %v2047 = vrsqrt.pop %v2045
  %v2048 = vmul.f32 %v2008, %v2046
  %v2049 = vmul.f32 %v2009, %v2047
  %v2050 = vmul.f32 %v2010, %v2046
  %v2051 = vmul.f32 %v2011, %v2047
  %v2052 = vmul.f32 %v2012, %v2046
  %v2053 = vmul.f32 %v2013, %v2047
  %v2054 = vmul.f32 %v2014, %v2046
  %v2055 = vmul.f32 %v2015, %v2047
  %v2056 = vmul.f32 %v976, %v2048
  %v2057 = vmul.f32 %v976, %v2049
  %v2058 = vmul.f32 %v980, %v2050
  %v2059 = vmul.f32 %v980, %v2051
  %v2060 = vmul.f32 %v984, %v2052
  %v2061 = vmul.f32 %v984, %v2053
  %v2062 = vmul.f32 %v988, %v2054
  %v2063 = vmul.f32 %v988, %v2055
  %v2064 = vadd.f32 %v2056, %v1000
  %v2065 = vadd.f32 %v2057, %v1000
  %v2066 = vadd.f32 %v2058, %v1004
  %v2067 = vadd.f32 %v2059, %v1004
  %v2068 = vadd.f32 %v2060, %v1008
  %v2069 = vadd.f32 %v2061, %v1008
  %v2070 = vadd.f32 %v2062, %v1012
  %v2071 = vadd.f32 %v2063, %v1012
  %v2072 = vmul.f32 %v2064, %v875
  %v2073 = vmul.f32 %v2065, %v877
  %v2074 = vmul.f32 %v2066, %v881
  %v2075 = vmul.f32 %v2067, %v883
  %v2076 = vmul.f32 %v2068, %v887
  %v2077 = vmul.f32 %v2069, %v889
  %v2078 = vmul.f32 %v2070, %v893
  %v2079 = vmul.f32 %v2071, %v895
  %v2080 = vadd.f32 %v2072, %v2074
  %v2081 = vadd.f32 %v2080, %v2076
  %v2082 = vadd.f32 %v2081, %v2078
  %v2083 = vrot.slane %v2082, 4
  %v2084 = vadd.f32 %v2082, %v2083
  %v2085 = vrot.slane %v2084, 2
  %v2086 = vadd.f32 %v2084, %v2085
  %v2087 = vrot.slane %v2086, 1
  %v2088 = vadd.f32 %v2086, %v2087
  %v2089 = vadd.f32 %v2073, %v2075
  %v2090 = vadd.f32 %v2089, %v2077
  %v2091 = vadd.f32 %v2090, %v2079
  %v2092 = vrot.slane %v2091, 4
  %v2093 = vadd.f32 %v2091, %v2092
  %v2094 = vrot.slane %v2093, 2
  %v2095 = vadd.f32 %v2093, %v2094
  %v2096 = vrot.slane %v2095, 1
  %v2097 = vadd.f32 %v2095, %v2096
  %v2098 = vmul.f32 %v2088, %v923
  %v2099 = vmul.f32 %v2097, %v923
  %v2100 = vsub.f32 %v2072, %v2098
  %v2101 = vsub.f32 %v2073, %v2099
  %v2102 = vsub.f32 %v2074, %v2098
  %v2103 = vsub.f32 %v2075, %v2099
  %v2104 = vsub.f32 %v2076, %v2098
  %v2105 = vsub.f32 %v2077, %v2099
  %v2106 = vsub.f32 %v2078, %v2098
  %v2107 = vsub.f32 %v2079, %v2099
  %v2108 = vmul.f32 %v2100, %v2100
  %v2109 = vmul.f32 %v2101, %v2101
  %v2110 = vmul.f32 %v2102, %v2102
  %v2111 = vmul.f32 %v2103, %v2103
  %v2112 = vmul.f32 %v2104, %v2104
  %v2113 = vmul.f32 %v2105, %v2105
  %v2114 = vmul.f32 %v2106, %v2106
  %v2115 = vmul.f32 %v2107, %v2107
  %v2116 = vadd.f32 %v2108, %v2110
  %v2117 = vadd.f32 %v2116, %v2112
  %v2118 = vadd.f32 %v2117, %v2114
  %v2119 = vrot.slane %v2118, 4
  %v2120 = vadd.f32 %v2118, %v2119
  %v2121 = vrot.slane %v2120, 2
  %v2122 = vadd.f32 %v2120, %v2121
  %v2123 = vrot.slane %v2122, 1
  %v2124 = vadd.f32 %v2122, %v2123
  %v2125 = vadd.f32 %v2109, %v2111
  %v2126 = vadd.f32 %v2125, %v2113
  %v2127 = vadd.f32 %v2126, %v2115
  %v2128 = vrot.slane %v2127, 4
  %v2129 = vadd.f32 %v2127, %v2128
  %v2130 = vrot.slane %v2129, 2
  %v2131 = vadd.f32 %v2129, %v2130
  %v2132 = vrot.slane %v2131, 1
  %v2133 = vadd.f32 %v2131, %v2132
  %v2134 = vmul.f32 %v2124, %v923
  %v2135 = vmul.f32 %v2133, %v923
  %v2136 = vadd.f32 %v2134, 1e-06
  %v2137 = vadd.f32 %v2135, 1e-06
  %v2138 = vrsqrt.pop %v2136
  %v2139 = vrsqrt.pop %v2137
  %v2140 = vmul.f32 %v2100, %v2138
  %v2141 = vmul.f32 %v2101, %v2139
  %v2142 = vmul.f32 %v2102, %v2138
  %v2143 = vmul.f32 %v2103, %v2139
  %v2144 = vmul.f32 %v2104, %v2138
  %v2145 = vmul.f32 %v2105, %v2139
  %v2146 = vmul.f32 %v2106, %v2138
  %v2147 = vmul.f32 %v2107, %v2139
  %v2148 = vmul.f32 %v1100, %v2140
  %v2149 = vmul.f32 %v1100, %v2141
  %v2150 = vmul.f32 %v1104, %v2142
  %v2151 = vmul.f32 %v1104, %v2143
  %v2152 = vmul.f32 %v1108, %v2144
  %v2153 = vmul.f32 %v1108, %v2145
  %v2154 = vmul.f32 %v1112, %v2146
  %v2155 = vmul.f32 %v1112, %v2147
  %v2156 = vadd.f32 %v2148, %v1124
  %v2157 = vadd.f32 %v2149, %v1124
  %v2158 = vadd.f32 %v2150, %v1128
  %v2159 = vadd.f32 %v2151, %v1128
  %v2160 = vadd.f32 %v2152, %v1132
  %v2161 = vadd.f32 %v2153, %v1132
  %v2162 = vadd.f32 %v2154, %v1136
  %v2163 = vadd.f32 %v2155, %v1136
  %2164 = vrot.lane.b32.xlu0 %v2156, 1
  %v2165 = vpop.permute.xlu0 %2164
  %2166 = vrot.lane.b32.xlu0 %v2158, 1
  %v2167 = vpop.permute.xlu0 %2166
  %2168 = vrot.lane.b32.xlu0 %v2160, 1
  %v2169 = vpop.permute.xlu0 %2168
  %2170 = vrot.lane.b32.xlu0 %v2162, 1
  %v2171 = vpop.permute.xlu0 %2170
  %2172 = vrot.lane.b32.xlu0 %v2157, 1
  %v2173 = vpop.permute.xlu0 %2172
  %2174 = vrot.lane.b32.xlu0 %v2159, 1
  %v2175 = vpop.permute.xlu0 %2174
  %2176 = vrot.lane.b32.xlu0 %v2161, 1
  %v2177 = vpop.permute.xlu0 %2176
  %2178 = vrot.lane.b32.xlu0 %v2163, 1
  %v2179 = vpop.permute.xlu0 %2178
  %v2180 = vsel %vm66, %v2165, %v2173
  %v2181 = vsel %vm66, %v2167, %v2175
  %v2182 = vsel %vm66, %v2169, %v2177
  %v2183 = vsel %vm66, %v2171, %v2179
  %v2184 = vsel %vm66, %v2173, %v2165
  %v2185 = vsel %vm66, %v2175, %v2167
  %v2186 = vsel %vm66, %v2177, %v2169
  %v2187 = vsel %vm66, %v2179, %v2171
  %v2188 = vmul.f32 %v2184, %v89
  %v2189 = vmul.f32 %v2180, %v93
  %v2190 = vmul.f32 %v2185, %v89
  %v2191 = vmul.f32 %v2181, %v93
  %v2192 = vmul.f32 %v2186, %v89
  %v2193 = vmul.f32 %v2182, %v93
  %v2194 = vmul.f32 %v2187, %v89
  %v2195 = vmul.f32 %v2183, %v93
  %2196 = vrot.lane.b32.xlu0 %v2156, 127
  %v2197 = vpop.permute.xlu0 %2196
  %2198 = vrot.lane.b32.xlu0 %v2158, 127
  %v2199 = vpop.permute.xlu0 %2198
  %2200 = vrot.lane.b32.xlu0 %v2160, 127
  %v2201 = vpop.permute.xlu0 %2200
  %2202 = vrot.lane.b32.xlu0 %v2162, 127
  %v2203 = vpop.permute.xlu0 %2202
  %2204 = vrot.lane.b32.xlu0 %v2157, 127
  %v2205 = vpop.permute.xlu0 %2204
  %2206 = vrot.lane.b32.xlu0 %v2159, 127
  %v2207 = vpop.permute.xlu0 %2206
  %2208 = vrot.lane.b32.xlu0 %v2161, 127
  %v2209 = vpop.permute.xlu0 %2208
  %2210 = vrot.lane.b32.xlu0 %v2163, 127
  %v2211 = vpop.permute.xlu0 %2210
  %v2212 = vsel %vm118, %v2197, %v2205
  %v2213 = vsel %vm118, %v2199, %v2207
  %v2214 = vsel %vm118, %v2201, %v2209
  %v2215 = vsel %vm118, %v2203, %v2211
  %v2216 = vsel %vm118, %v2205, %v2197
  %v2217 = vsel %vm118, %v2207, %v2199
  %v2218 = vsel %vm118, %v2209, %v2201
  %v2219 = vsel %vm118, %v2211, %v2203
  %v2220 = vmul.f32 %v2212, %v140
  %v2221 = vmul.f32 %v2216, %v144
  %v2222 = vmul.f32 %v2213, %v140
  %v2223 = vmul.f32 %v2217, %v144
  %v2224 = vmul.f32 %v2214, %v140
  %v2225 = vmul.f32 %v2218, %v144
  %v2226 = vmul.f32 %v2215, %v140
  %v2227 = vmul.f32 %v2219, %v144
  %v2228 = vmul.f32 %v1212, %v2188
  %v2229 = vmul.f32 %v1212, %v2189
  %v2230 = vmul.f32 %v1216, %v2190
  %v2231 = vmul.f32 %v1216, %v2191
  %v2232 = vmul.f32 %v1220, %v2192
  %v2233 = vmul.f32 %v1220, %v2193
  %v2234 = vmul.f32 %v1224, %v2194
  %v2235 = vmul.f32 %v1224, %v2195
  %v2236 = vmul.f32 %v1236, %v2156
  %v2237 = vmul.f32 %v1236, %v2157
  %v2238 = vmul.f32 %v1240, %v2158
  %v2239 = vmul.f32 %v1240, %v2159
  %v2240 = vmul.f32 %v1244, %v2160
  %v2241 = vmul.f32 %v1244, %v2161
  %v2242 = vmul.f32 %v1248, %v2162
  %v2243 = vmul.f32 %v1248, %v2163
  %v2244 = vadd.f32 %v2228, %v2236
  %v2245 = vadd.f32 %v2229, %v2237
  %v2246 = vadd.f32 %v2230, %v2238
  %v2247 = vadd.f32 %v2231, %v2239
  %v2248 = vadd.f32 %v2232, %v2240
  %v2249 = vadd.f32 %v2233, %v2241
  %v2250 = vadd.f32 %v2234, %v2242
  %v2251 = vadd.f32 %v2235, %v2243
  %v2252 = vmul.f32 %v1268, %v2220
  %v2253 = vmul.f32 %v1268, %v2221
  %v2254 = vmul.f32 %v1272, %v2222
  %v2255 = vmul.f32 %v1272, %v2223
  %v2256 = vmul.f32 %v1276, %v2224
  %v2257 = vmul.f32 %v1276, %v2225
  %v2258 = vmul.f32 %v1280, %v2226
  %v2259 = vmul.f32 %v1280, %v2227
  %v2260 = vadd.f32 %v2244, %v2252
  %v2261 = vadd.f32 %v2245, %v2253
  %v2262 = vadd.f32 %v2246, %v2254
  %v2263 = vadd.f32 %v2247, %v2255
  %v2264 = vadd.f32 %v2248, %v2256
  %v2265 = vadd.f32 %v2249, %v2257
  %v2266 = vadd.f32 %v2250, %v2258
  %v2267 = vadd.f32 %v2251, %v2259
  %v2268 = vmul.f32 %v1300, %v2188
  %v2269 = vmul.f32 %v1300, %v2189
  %v2270 = vmul.f32 %v1304, %v2190
  %v2271 = vmul.f32 %v1304, %v2191
  %v2272 = vmul.f32 %v1308, %v2192
  %v2273 = vmul.f32 %v1308, %v2193
  %v2274 = vmul.f32 %v1312, %v2194
  %v2275 = vmul.f32 %v1312, %v2195
  %v2276 = vmul.f32 %v1324, %v2156
  %v2277 = vmul.f32 %v1324, %v2157
  %v2278 = vmul.f32 %v1328, %v2158
  %v2279 = vmul.f32 %v1328, %v2159
  %v2280 = vmul.f32 %v1332, %v2160
  %v2281 = vmul.f32 %v1332, %v2161
  %v2282 = vmul.f32 %v1336, %v2162
  %v2283 = vmul.f32 %v1336, %v2163
  %v2284 = vadd.f32 %v2268, %v2276
  %v2285 = vadd.f32 %v2269, %v2277
  %v2286 = vadd.f32 %v2270, %v2278
  %v2287 = vadd.f32 %v2271, %v2279
  %v2288 = vadd.f32 %v2272, %v2280
  %v2289 = vadd.f32 %v2273, %v2281
  %v2290 = vadd.f32 %v2274, %v2282
  %v2291 = vadd.f32 %v2275, %v2283
  %v2292 = vmul.f32 %v1356, %v2220
  %v2293 = vmul.f32 %v1356, %v2221
  %v2294 = vmul.f32 %v1360, %v2222
  %v2295 = vmul.f32 %v1360, %v2223
  %v2296 = vmul.f32 %v1364, %v2224
  %v2297 = vmul.f32 %v1364, %v2225
  %v2298 = vmul.f32 %v1368, %v2226
  %v2299 = vmul.f32 %v1368, %v2227
  %v2300 = vadd.f32 %v2284, %v2292
  %v2301 = vadd.f32 %v2285, %v2293
  %v2302 = vadd.f32 %v2286, %v2294
  %v2303 = vadd.f32 %v2287, %v2295
  %v2304 = vadd.f32 %v2288, %v2296
  %v2305 = vadd.f32 %v2289, %v2297
  %v2306 = vadd.f32 %v2290, %v2298
  %v2307 = vadd.f32 %v2291, %v2299
  %2308 = vrot.lane.b32.xlu0 %v2300, 16
  %v2309 = vpop.permute.xlu0 %2308
  %2310 = vrot.lane.b32.xlu0 %v2302, 16
  %v2311 = vpop.permute.xlu0 %2310
  %2312 = vrot.lane.b32.xlu0 %v2304, 16
  %v2313 = vpop.permute.xlu0 %2312
  %2314 = vrot.lane.b32.xlu0 %v2306, 16
  %v2315 = vpop.permute.xlu0 %2314
  %2316 = vrot.lane.b32.xlu0 %v2301, 16
  %v2317 = vpop.permute.xlu0 %2316
  %2318 = vrot.lane.b32.xlu0 %v2303, 16
  %v2319 = vpop.permute.xlu0 %2318
  %2320 = vrot.lane.b32.xlu0 %v2305, 16
  %v2321 = vpop.permute.xlu0 %2320
  %2322 = vrot.lane.b32.xlu0 %v2307, 16
  %v2323 = vpop.permute.xlu0 %2322
  %v2324 = vsel %vm349, %v2309, %v2317
  %v2325 = vsel %vm349, %v2311, %v2319
  %v2326 = vsel %vm349, %v2313, %v2321
  %v2327 = vsel %vm349, %v2315, %v2323
  %v2328 = vsel %vm349, %v2317, %v2309
  %v2329 = vsel %vm349, %v2319, %v2311
  %v2330 = vsel %vm349, %v2321, %v2313
  %v2331 = vsel %vm349, %v2323, %v2315
  %v2332 = vmul.f32 %v371, %v2328
  %v2333 = vmul.f32 %v375, %v2324
  %v2334 = vmul.f32 %v371, %v2329
  %v2335 = vmul.f32 %v375, %v2325
  %v2336 = vmul.f32 %v371, %v2330
  %v2337 = vmul.f32 %v375, %v2326
  %v2338 = vmul.f32 %v371, %v2331
  %v2339 = vmul.f32 %v375, %v2327
  %v2340 = vadd.f32 %v2260, %v2332
  %v2341 = vadd.f32 %v2261, %v2333
  %v2342 = vadd.f32 %v2262, %v2334
  %v2343 = vadd.f32 %v2263, %v2335
  %v2344 = vadd.f32 %v2264, %v2336
  %v2345 = vadd.f32 %v2265, %v2337
  %v2346 = vadd.f32 %v2266, %v2338
  %v2347 = vadd.f32 %v2267, %v2339
  %v2348 = vmul.f32 %v1428, %v2188
  %v2349 = vmul.f32 %v1428, %v2189
  %v2350 = vmul.f32 %v1432, %v2190
  %v2351 = vmul.f32 %v1432, %v2191
  %v2352 = vmul.f32 %v1436, %v2192
  %v2353 = vmul.f32 %v1436, %v2193
  %v2354 = vmul.f32 %v1440, %v2194
  %v2355 = vmul.f32 %v1440, %v2195
  %v2356 = vmul.f32 %v1452, %v2156
  %v2357 = vmul.f32 %v1452, %v2157
  %v2358 = vmul.f32 %v1456, %v2158
  %v2359 = vmul.f32 %v1456, %v2159
  %v2360 = vmul.f32 %v1460, %v2160
  %v2361 = vmul.f32 %v1460, %v2161
  %v2362 = vmul.f32 %v1464, %v2162
  %v2363 = vmul.f32 %v1464, %v2163
  %v2364 = vadd.f32 %v2348, %v2356
  %v2365 = vadd.f32 %v2349, %v2357
  %v2366 = vadd.f32 %v2350, %v2358
  %v2367 = vadd.f32 %v2351, %v2359
  %v2368 = vadd.f32 %v2352, %v2360
  %v2369 = vadd.f32 %v2353, %v2361
  %v2370 = vadd.f32 %v2354, %v2362
  %v2371 = vadd.f32 %v2355, %v2363
  %v2372 = vmul.f32 %v1484, %v2220
  %v2373 = vmul.f32 %v1484, %v2221
  %v2374 = vmul.f32 %v1488, %v2222
  %v2375 = vmul.f32 %v1488, %v2223
  %v2376 = vmul.f32 %v1492, %v2224
  %v2377 = vmul.f32 %v1492, %v2225
  %v2378 = vmul.f32 %v1496, %v2226
  %v2379 = vmul.f32 %v1496, %v2227
  %v2380 = vadd.f32 %v2364, %v2372
  %v2381 = vadd.f32 %v2365, %v2373
  %v2382 = vadd.f32 %v2366, %v2374
  %v2383 = vadd.f32 %v2367, %v2375
  %v2384 = vadd.f32 %v2368, %v2376
  %v2385 = vadd.f32 %v2369, %v2377
  %v2386 = vadd.f32 %v2370, %v2378
  %v2387 = vadd.f32 %v2371, %v2379
  %2388 = vrot.lane.b32.xlu0 %v2380, 112
  %v2389 = vpop.permute.xlu0 %2388
  %2390 = vrot.lane.b32.xlu0 %v2382, 112
  %v2391 = vpop.permute.xlu0 %2390
  %2392 = vrot.lane.b32.xlu0 %v2384, 112
  %v2393 = vpop.permute.xlu0 %2392
  %2394 = vrot.lane.b32.xlu0 %v2386, 112
  %v2395 = vpop.permute.xlu0 %2394
  %2396 = vrot.lane.b32.xlu0 %v2381, 112
  %v2397 = vpop.permute.xlu0 %2396
  %2398 = vrot.lane.b32.xlu0 %v2383, 112
  %v2399 = vpop.permute.xlu0 %2398
  %2400 = vrot.lane.b32.xlu0 %v2385, 112
  %v2401 = vpop.permute.xlu0 %2400
  %2402 = vrot.lane.b32.xlu0 %v2387, 112
  %v2403 = vpop.permute.xlu0 %2402
  %v2404 = vsel %vm496, %v2389, %v2397
  %v2405 = vsel %vm496, %v2391, %v2399
  %v2406 = vsel %vm496, %v2393, %v2401
  %v2407 = vsel %vm496, %v2395, %v2403
  %v2408 = vsel %vm496, %v2397, %v2389
  %v2409 = vsel %vm496, %v2399, %v2391
  %v2410 = vsel %vm496, %v2401, %v2393
  %v2411 = vsel %vm496, %v2403, %v2395
  %v2412 = vmul.f32 %v518, %v2404
  %v2413 = vmul.f32 %v522, %v2408
  %v2414 = vmul.f32 %v518, %v2405
  %v2415 = vmul.f32 %v522, %v2409
  %v2416 = vmul.f32 %v518, %v2406
  %v2417 = vmul.f32 %v522, %v2410
  %v2418 = vmul.f32 %v518, %v2407
  %v2419 = vmul.f32 %v522, %v2411
  %v2420 = vadd.f32 %v2340, %v2412
  %v2421 = vadd.f32 %v2341, %v2413
  %v2422 = vadd.f32 %v2342, %v2414
  %v2423 = vadd.f32 %v2343, %v2415
  %v2424 = vadd.f32 %v2344, %v2416
  %v2425 = vadd.f32 %v2345, %v2417
  %v2426 = vadd.f32 %v2346, %v2418
  %v2427 = vadd.f32 %v2347, %v2419
  %v2428 = vadd.f32 %v2420, %v1556
  %v2429 = vadd.f32 %v2421, %v1556
  %v2430 = vadd.f32 %v2422, %v1560
  %v2431 = vadd.f32 %v2423, %v1560
  %v2432 = vadd.f32 %v2424, %v1564
  %v2433 = vadd.f32 %v2425, %v1564
  %v2434 = vadd.f32 %v2426, %v1568
  %v2435 = vadd.f32 %v2427, %v1568
  %v2436 = vmul.f32 %v2428, 0.5
  %v2437 = vmul.f32 %v2429, 0.5
  %v2438 = vmul.f32 %v2430, 0.5
  %v2439 = vmul.f32 %v2431, 0.5
  %v2440 = vmul.f32 %v2432, 0.5
  %v2441 = vmul.f32 %v2433, 0.5
  %v2442 = vmul.f32 %v2434, 0.5
  %v2443 = vmul.f32 %v2435, 0.5
  %v2444 = vmul.f32 %v2428, 0.70710677
  %v2445 = vmul.f32 %v2429, 0.70710677
  %v2446 = vmul.f32 %v2430, 0.70710677
  %v2447 = vmul.f32 %v2431, 0.70710677
  %v2448 = vmul.f32 %v2432, 0.70710677
  %v2449 = vmul.f32 %v2433, 0.70710677
  %v2450 = vmul.f32 %v2434, 0.70710677
  %v2451 = vmul.f32 %v2435, 0.70710677
  %v2452 = vand.u32 2147483647, %v2444
  %v2453 = vand.u32 2147483647, %v2445
  %v2454 = vand.u32 2147483647, %v2446
  %v2455 = vand.u32 2147483647, %v2447
  %v2456 = vand.u32 2147483647, %v2448
  %v2457 = vand.u32 2147483647, %v2449
  %v2458 = vand.u32 2147483647, %v2450
  %v2459 = vand.u32 2147483647, %v2451
  %v2460 = vmul.f32 %v2452, 0.3275911
  %v2461 = vmul.f32 %v2453, 0.3275911
  %v2462 = vmul.f32 %v2454, 0.3275911
  %v2463 = vmul.f32 %v2455, 0.3275911
  %v2464 = vmul.f32 %v2456, 0.3275911
  %v2465 = vmul.f32 %v2457, 0.3275911
  %v2466 = vmul.f32 %v2458, 0.3275911
  %v2467 = vmul.f32 %v2459, 0.3275911
  %v2468 = vadd.f32 %v2460, 1.0
  %v2469 = vadd.f32 %v2461, 1.0
  %v2470 = vadd.f32 %v2462, 1.0
  %v2471 = vadd.f32 %v2463, 1.0
  %v2472 = vadd.f32 %v2464, 1.0
  %v2473 = vadd.f32 %v2465, 1.0
  %v2474 = vadd.f32 %v2466, 1.0
  %v2475 = vadd.f32 %v2467, 1.0
  %v2476 = vrcp.pop %v2468
  %v2477 = vmul.f32 1.0, %v2476
  %v2478 = vrcp.pop %v2469
  %v2479 = vmul.f32 1.0, %v2478
  %v2480 = vrcp.pop %v2470
  %v2481 = vmul.f32 1.0, %v2480
  %v2482 = vrcp.pop %v2471
  %v2483 = vmul.f32 1.0, %v2482
  %v2484 = vrcp.pop %v2472
  %v2485 = vmul.f32 1.0, %v2484
  %v2486 = vrcp.pop %v2473
  %v2487 = vmul.f32 1.0, %v2486
  %v2488 = vrcp.pop %v2474
  %v2489 = vmul.f32 1.0, %v2488
  %v2490 = vrcp.pop %v2475
  %v2491 = vmul.f32 1.0, %v2490
  %v2492 = vmul.f32 %v2477, 1.0614054
  %v2493 = vmul.f32 %v2479, 1.0614054
  %v2494 = vmul.f32 %v2481, 1.0614054
  %v2495 = vmul.f32 %v2483, 1.0614054
  %v2496 = vmul.f32 %v2485, 1.0614054
  %v2497 = vmul.f32 %v2487, 1.0614054
  %v2498 = vmul.f32 %v2489, 1.0614054
  %v2499 = vmul.f32 %v2491, 1.0614054
  %v2500 = vsub.f32 %v2492, 1.4531521
  %v2501 = vsub.f32 %v2493, 1.4531521
  %v2502 = vsub.f32 %v2494, 1.4531521
  %v2503 = vsub.f32 %v2495, 1.4531521
  %v2504 = vsub.f32 %v2496, 1.4531521
  %v2505 = vsub.f32 %v2497, 1.4531521
  %v2506 = vsub.f32 %v2498, 1.4531521
  %v2507 = vsub.f32 %v2499, 1.4531521
  %v2508 = vmul.f32 %v2500, %v2477
  %v2509 = vmul.f32 %v2501, %v2479
  %v2510 = vmul.f32 %v2502, %v2481
  %v2511 = vmul.f32 %v2503, %v2483
  %v2512 = vmul.f32 %v2504, %v2485
  %v2513 = vmul.f32 %v2505, %v2487
  %v2514 = vmul.f32 %v2506, %v2489
  %v2515 = vmul.f32 %v2507, %v2491
  %v2516 = vadd.f32 %v2508, 1.4214138
  %v2517 = vadd.f32 %v2509, 1.4214138
  %v2518 = vadd.f32 %v2510, 1.4214138
  %v2519 = vadd.f32 %v2511, 1.4214138
  %v2520 = vadd.f32 %v2512, 1.4214138
  %v2521 = vadd.f32 %v2513, 1.4214138
  %v2522 = vadd.f32 %v2514, 1.4214138
  %v2523 = vadd.f32 %v2515, 1.4214138
  %v2524 = vmul.f32 %v2516, %v2477
  %v2525 = vmul.f32 %v2517, %v2479
  %v2526 = vmul.f32 %v2518, %v2481
  %v2527 = vmul.f32 %v2519, %v2483
  %v2528 = vmul.f32 %v2520, %v2485
  %v2529 = vmul.f32 %v2521, %v2487
  %v2530 = vmul.f32 %v2522, %v2489
  %v2531 = vmul.f32 %v2523, %v2491
  %v2532 = vsub.f32 %v2524, 0.28449672
  %v2533 = vsub.f32 %v2525, 0.28449672
  %v2534 = vsub.f32 %v2526, 0.28449672
  %v2535 = vsub.f32 %v2527, 0.28449672
  %v2536 = vsub.f32 %v2528, 0.28449672
  %v2537 = vsub.f32 %v2529, 0.28449672
  %v2538 = vsub.f32 %v2530, 0.28449672
  %v2539 = vsub.f32 %v2531, 0.28449672
  %v2540 = vmul.f32 %v2532, %v2477
  %v2541 = vmul.f32 %v2533, %v2479
  %v2542 = vmul.f32 %v2534, %v2481
  %v2543 = vmul.f32 %v2535, %v2483
  %v2544 = vmul.f32 %v2536, %v2485
  %v2545 = vmul.f32 %v2537, %v2487
  %v2546 = vmul.f32 %v2538, %v2489
  %v2547 = vmul.f32 %v2539, %v2491
  %v2548 = vadd.f32 %v2540, 0.2548296
  %v2549 = vadd.f32 %v2541, 0.2548296
  %v2550 = vadd.f32 %v2542, 0.2548296
  %v2551 = vadd.f32 %v2543, 0.2548296
  %v2552 = vadd.f32 %v2544, 0.2548296
  %v2553 = vadd.f32 %v2545, 0.2548296
  %v2554 = vadd.f32 %v2546, 0.2548296
  %v2555 = vadd.f32 %v2547, 0.2548296
  %v2556 = vmul.f32 %v2548, %v2477
  %v2557 = vmul.f32 %v2549, %v2479
  %v2558 = vmul.f32 %v2550, %v2481
  %v2559 = vmul.f32 %v2551, %v2483
  %v2560 = vmul.f32 %v2552, %v2485
  %v2561 = vmul.f32 %v2553, %v2487
  %v2562 = vmul.f32 %v2554, %v2489
  %v2563 = vmul.f32 %v2555, %v2491
  %v2564 = vsub.f32 0.0, %v2452
  %v2565 = vsub.f32 0.0, %v2453
  %v2566 = vsub.f32 0.0, %v2454
  %v2567 = vsub.f32 0.0, %v2455
  %v2568 = vsub.f32 0.0, %v2456
  %v2569 = vsub.f32 0.0, %v2457
  %v2570 = vsub.f32 0.0, %v2458
  %v2571 = vsub.f32 0.0, %v2459
  %v2572 = vmul.f32 %v2564, %v2452
  %v2573 = vmul.f32 %v2565, %v2453
  %v2574 = vmul.f32 %v2566, %v2454
  %v2575 = vmul.f32 %v2567, %v2455
  %v2576 = vmul.f32 %v2568, %v2456
  %v2577 = vmul.f32 %v2569, %v2457
  %v2578 = vmul.f32 %v2570, %v2458
  %v2579 = vmul.f32 %v2571, %v2459
  %v2580 = vmul.f32 %v2572, 1.442695
  %v2581 = vpow.pop %v2580
  %v2582 = vmul.f32 %v2573, 1.442695
  %v2583 = vpow.pop %v2582
  %v2584 = vmul.f32 %v2574, 1.442695
  %v2585 = vpow.pop %v2584
  %v2586 = vmul.f32 %v2575, 1.442695
  %v2587 = vpow.pop %v2586
  %v2588 = vmul.f32 %v2576, 1.442695
  %v2589 = vpow.pop %v2588
  %v2590 = vmul.f32 %v2577, 1.442695
  %v2591 = vpow.pop %v2590
  %v2592 = vmul.f32 %v2578, 1.442695
  %v2593 = vpow.pop %v2592
  %v2594 = vmul.f32 %v2579, 1.442695
  %v2595 = vpow.pop %v2594
  %v2596 = vmul.f32 %v2556, %v2581
  %v2597 = vmul.f32 %v2557, %v2583
  %v2598 = vmul.f32 %v2558, %v2585
  %v2599 = vmul.f32 %v2559, %v2587
  %v2600 = vmul.f32 %v2560, %v2589
  %v2601 = vmul.f32 %v2561, %v2591
  %v2602 = vmul.f32 %v2562, %v2593
  %v2603 = vmul.f32 %v2563, %v2595
  %v2604 = vsub.f32 1.0, %v2596
  %v2605 = vsub.f32 1.0, %v2597
  %v2606 = vsub.f32 1.0, %v2598
  %v2607 = vsub.f32 1.0, %v2599
  %v2608 = vsub.f32 1.0, %v2600
  %v2609 = vsub.f32 1.0, %v2601
  %v2610 = vsub.f32 1.0, %v2602
  %v2611 = vsub.f32 1.0, %v2603
  %vm2612 = vcmp.ge.f32.partialorder %v2444, 0.0
  %vm2613 = vcmp.ge.f32.partialorder %v2445, 0.0
  %vm2614 = vcmp.ge.f32.partialorder %v2446, 0.0
  %vm2615 = vcmp.ge.f32.partialorder %v2447, 0.0
  %vm2616 = vcmp.ge.f32.partialorder %v2448, 0.0
  %vm2617 = vcmp.ge.f32.partialorder %v2449, 0.0
  %vm2618 = vcmp.ge.f32.partialorder %v2450, 0.0
  %vm2619 = vcmp.ge.f32.partialorder %v2451, 0.0
  %v2620 = vsub.f32 0.0, %v2604
  %v2621 = vsub.f32 0.0, %v2605
  %v2622 = vsub.f32 0.0, %v2606
  %v2623 = vsub.f32 0.0, %v2607
  %v2624 = vsub.f32 0.0, %v2608
  %v2625 = vsub.f32 0.0, %v2609
  %v2626 = vsub.f32 0.0, %v2610
  %v2627 = vsub.f32 0.0, %v2611
  %v2628 = vsel %vm2612, %v2604, %v2620
  %v2629 = vsel %vm2613, %v2605, %v2621
  %v2630 = vsel %vm2614, %v2606, %v2622
  %v2631 = vsel %vm2615, %v2607, %v2623
  %v2632 = vsel %vm2616, %v2608, %v2624
  %v2633 = vsel %vm2617, %v2609, %v2625
  %v2634 = vsel %vm2618, %v2610, %v2626
  %v2635 = vsel %vm2619, %v2611, %v2627
  %v2636 = vadd.f32 %v2628, 1.0
  %v2637 = vadd.f32 %v2629, 1.0
  %v2638 = vadd.f32 %v2630, 1.0
  %v2639 = vadd.f32 %v2631, 1.0
  %v2640 = vadd.f32 %v2632, 1.0
  %v2641 = vadd.f32 %v2633, 1.0
  %v2642 = vadd.f32 %v2634, 1.0
  %v2643 = vadd.f32 %v2635, 1.0
  %v2644 = vmul.f32 %v2436, %v2636
  %v2645 = vmul.f32 %v2437, %v2637
  %v2646 = vmul.f32 %v2438, %v2638
  %v2647 = vmul.f32 %v2439, %v2639
  %v2648 = vmul.f32 %v2440, %v2640
  %v2649 = vmul.f32 %v2441, %v2641
  %v2650 = vmul.f32 %v2442, %v2642
  %v2651 = vmul.f32 %v2443, %v2643
  %2652 = vmatprep.subr.mxu0 %v2645
  %2653 = vmatpush1.msra.mxu0 %v2644
  %2654 = vmatprep.subr.mxu0 %v2647
  %2655 = vmatpush1.msra.mxu0 %v2646
  %2656 = vmatprep.subr.mxu0 %v2649
  %2657 = vmatpush1.msra.mxu0 %v2648
  %2658 = vmatprep.subr.mxu0 %v2651
  %2659 = vmatpush1.msra.mxu0 %v2650
  %2660 = vmatprep.subr.mxu0 0.0
  %2661 = vmatpush1.msra.mxu0 0.0
  %2662 = vmatprep.subr.mxu0 0.0
  %2663 = vmatpush1.msra.mxu0 0.0
  %2664 = vmatprep.subr.mxu0 0.0
  %2665 = vmatpush1.msra.mxu0 0.0
  %2666 = vmatprep.subr.mxu0 0.0
  %2667 = vmatpush1.msra.mxu0 0.0
  %2668 = vmatprep.subr.mxu0 0.0
  %2669 = vmatpush1.msra.mxu0 0.0
  %2670 = vmatprep.subr.mxu0 0.0
  %2671 = vmatpush1.msra.mxu0 0.0
  %2672 = vmatprep.subr.mxu0 0.0
  %2673 = vmatpush1.msra.mxu0 0.0
  %2674 = vmatprep.subr.mxu0 0.0
  %2675 = vmatpush1.msra.mxu0 0.0
  %2676 = vmatprep.subr.mxu0 0.0
  %2677 = vmatpush1.msra.mxu0 0.0
  %2678 = vmatprep.subr.mxu0 0.0
  %2679 = vmatpush1.msra.mxu0 0.0
  %2680 = vmatprep.subr.mxu0 0.0
  %2681 = vmatpush1.msra.mxu0 0.0
  %2682 = vmatprep.subr.mxu0 0.0
  %2683 = vmatpush1.msra.mxu0 0.0
  %2684 = vmatprep.subr.mxu0 0.0
  %2685 = vmatpush1.msra.mxu0 0.0
  %2686 = vmatprep.subr.mxu0 0.0
  %2687 = vmatpush1.msra.mxu0 0.0
  %2688 = vmatprep.subr.mxu0 0.0
  %2689 = vmatpush1.msra.mxu0 0.0
  %2690 = vmatprep.subr.mxu0 0.0
  %2691 = vmatpush1.msra.mxu0 0.0
  %2692 = vmatprep.subr.mxu0 0.0
  %2693 = vmatpush1.msra.mxu0 0.0
  %2694 = vmatprep.subr.mxu0 0.0
  %2695 = vmatpush1.msra.mxu0 0.0
  %2696 = vmatprep.subr.mxu0 0.0
  %2697 = vmatpush1.msra.mxu0 0.0
  %2698 = vmatprep.subr.mxu0 0.0
  %2699 = vmatpush1.msra.mxu0 0.0
  %2700 = vmatprep.subr.mxu0 0.0
  %2701 = vmatpush1.msra.mxu0 0.0
  %2702 = vmatprep.subr.mxu0 0.0
  %2703 = vmatpush1.msra.mxu0 0.0
  %2704 = vmatprep.subr.mxu0 0.0
  %2705 = vmatpush1.msra.mxu0 0.0
  %2706 = vmatprep.subr.mxu0 0.0
  %2707 = vmatpush1.msra.mxu0 0.0
  %2708 = vmatprep.subr.mxu0 0.0
  %2709 = vmatpush1.msra.mxu0 0.0
  %2710 = vmatprep.subr.mxu0 0.0
  %2711 = vmatpush1.msra.mxu0 0.0
  %2712 = vmatprep.subr.mxu0 0.0
  %2713 = vmatpush1.msra.mxu0 0.0
  %2714 = vmatprep.subr.mxu0 0.0
  %2715 = vmatpush1.msra.mxu0 0.0
  %2716 = vmatprep.mubr.f32.mxu0 0.0
  %2717 = vmatmul.mubr.f32.gmra.mrb[0].mxu0 %v1834
  %v2718 = vpop.f32.mrb[0].mxu0
  %v2719 = vadd.f32 %v1797, %v2718
  %v2720 = vpop.f32.mrb[0].mxu0
  %v2721 = vadd.f32 %v1797, %v2720
  %2722 = vmatprep.mubr.f32.mxu0 0.0
  %2723 = vmatmul.mubr.f32.gmra.mrb[0].mxu0 %v1836
  %v2724 = vpop.f32.mrb[0].mxu0
  %v2725 = vadd.f32 %v1802, %v2724
  %v2726 = vpop.f32.mrb[0].mxu0
  %v2727 = vadd.f32 %v1802, %v2726
  %2728 = vmatprep.mubr.f32.mxu0 0.0
  %2729 = vmatmul.mubr.f32.gmra.mrb[0].mxu0 %v1838
  %v2730 = vpop.f32.mrb[0].mxu0
  %v2731 = vadd.f32 %v1807, %v2730
  %v2732 = vpop.f32.mrb[0].mxu0
  %v2733 = vadd.f32 %v1807, %v2732
  %2734 = vmatprep.mubr.f32.mxu0 0.0
  %2735 = vmatmul.mubr.f32.gmra.mrb[0].mxu0 %v1840
  %v2736 = vpop.f32.mrb[0].mxu0
  %v2737 = vadd.f32 %v1812, %v2736
  %v2738 = vpop.f32.mrb[0].mxu0
  %v2739 = vadd.f32 %v1812, %v2738
  %2740 = vmatprep.mubr.f32.mxu0 0.0
  %2741 = vmatmul.mubr.f32.gmra.mrb[0].mxu0 %v1842
  %v2742 = vpop.f32.mrb[0].mxu0
  %v2743 = vadd.f32 %v1817, %v2742
  %v2744 = vpop.f32.mrb[0].mxu0
  %v2745 = vadd.f32 %v1817, %v2744
  %2746 = vmatprep.mubr.f32.mxu0 0.0
  %2747 = vmatmul.mubr.f32.gmra.mrb[0].mxu0 %v1844
  %v2748 = vpop.f32.mrb[0].mxu0
  %v2749 = vadd.f32 %v1822, %v2748
  %v2750 = vpop.f32.mrb[0].mxu0
  %v2751 = vadd.f32 %v1822, %v2750
  %2752 = vmatprep.mubr.f32.mxu0 0.0
  %2753 = vmatmul.mubr.f32.gmra.mrb[0].mxu0 %v1846
  %v2754 = vpop.f32.mrb[0].mxu0
  %v2755 = vadd.f32 %v1827, %v2754
  %v2756 = vpop.f32.mrb[0].mxu0
  %v2757 = vadd.f32 %v1827, %v2756
  %2758 = vmatprep.mubr.f32.mxu0 0.0
  %2759 = vmatmul.mubr.f32.gmra.mrb[0].mxu0 %v1848
  %v2760 = vpop.f32.mrb[0].mxu0
  %v2761 = vadd.f32 %v1832, %v2760
  %v2762 = vpop.f32.mrb[0].mxu0
  %v2763 = vadd.f32 %v1832, %v2762
  %2764 = vdwg.mxu0
  %s2765 = scalar_lea.vmem %s6, 128
  %2766 = vst [vmem:[%s2765] sm:$0xff] %v2719
  %2767 = vst [vmem:[%s2765 + $0x8] sm:$0xff] %v2721
  %2768 = vst [vmem:[%s2765 + $0x10] sm:$0xff] %v2725
  %2769 = vst [vmem:[%s2765 + $0x18] sm:$0xff] %v2727
  %2770 = vst [vmem:[%s2765 + $0x20] sm:$0xff] %v2731
  %2771 = vst [vmem:[%s2765 + $0x28] sm:$0xff] %v2733
  %2772 = vst [vmem:[%s2765 + $0x30] sm:$0xff] %v2737
  %2773 = vst [vmem:[%s2765 + $0x38] sm:$0xff] %v2739
  %2774 = vst [vmem:[%s2765 + $0x40] sm:$0xff] %v2743
  %2775 = vst [vmem:[%s2765 + $0x48] sm:$0xff] %v2745
  %2776 = vst [vmem:[%s2765 + $0x50] sm:$0xff] %v2749
  %2777 = vst [vmem:[%s2765 + $0x58] sm:$0xff] %v2751
  %2778 = vst [vmem:[%s2765 + $0x60] sm:$0xff] %v2755
  %2779 = vst [vmem:[%s2765 + $0x68] sm:$0xff] %v2757
  %2780 = vst [vmem:[%s2765 + $0x70] sm:$0xff] %v2761
  %2781 = vst [vmem:[%s2765 + $0x78] sm:$0xff] %v2763
  // Predicated region
  $region26: #{group_shuffle_block_forward.1} parent=0 // pred_check
    _
  $region27: #{group_shuffle_block_forward.1} parent=0 // pred_check_branch
    %2783 = sbr.rel (0) target = $region29
  $region28: #{group_shuffle_block_forward.1} parent=0 // pred_region
    _
  $region29: #{group_shuffle_block_forward.1} parent=0 // pred_fallthru
    _
  // Predicated region
  $region30: #{group_shuffle_block_forward.1} parent=0 // pred_check
    _
  $region31: #{group_shuffle_block_forward.1} parent=0 // pred_check_branch
    %2785 = sbr.rel (0) target = $region33
  $region32: #{group_shuffle_block_forward.1} parent=0 // pred_region
    _
  $region33: #{group_shuffle_block_forward.1} parent=0 // pred_fallthru
    _

</llo_original>
